<compile_context>
chip_gen: v7x
topology: tpu7x:2x2x1
jax: 0.10.0
libtpu: 0.0.40
codegen_flags: <defaults>
</compile_context>

<pallas_src>
import math

import jax
import jax.numpy as jnp
from jax import lax
from jax.experimental import pallas as pl
from jax.experimental.pallas import tpu as pltpu

# ---- small, forward-consistent hyper-parameters -----------------------------
ENC_IN = 4
C_OUT = 4
D_MODEL = 32
N_HEADS = 4
D_FF = 32            # must equal D_MODEL: part_t [B,1,d_ff] is added to [B,L,d_model]
T_DIM_IN = 16        # diffusion_step_embed_dim_in
T_DIM_MID = 32       # diffusion_step_embed_dim_mid
T_DIM_OUT = 32       # diffusion_step_embed_dim_out
SEQ_LEN = 16
BATCH = 2
LN_EPS = 1e-5
NEG_INF = -1e30
BL = BATCH * SEQ_LEN

assert D_FF == D_MODEL                      # part_t broadcast requirement
assert T_DIM_MID == T_DIM_OUT == D_FF       # required by time-MLP packing
assert D_MODEL % N_HEADS == 0
assert T_DIM_IN <= D_MODEL                  # sin/cos rows fit in a 32-lane slab row
assert BL == D_MODEL                        # packing convenience: masks share slab width


# ---- packed parameter-slab layout (static, 8-aligned row offsets) -----------
def _make_layout():
    blocks = [
        ("wt1", 32), ("wt2", 32), ("wt3", 32), ("wemb", 32),
        ("wq", 32), ("wk", 32), ("wv", 32), ("wo", 32),
        ("wc1", 32), ("wc2", 32),
        ("wp", 16),     # 3 conv taps x [C_OUT, D]  (rows 0:4 / 4:8 / 8:12)
        ("pos", 16),    # positional embedding [L, D]
        ("ln", 8),      # ln1_g, ln1_b, ln2_g, ln2_b, lnf_g, lnf_b
        ("bias", 16),   # bq, bk, bv, bo, bc1, bc2, bt1, bt2, bt3
        ("misc", 8),    # freq, phase, hm0..hm3, prev_mask, next_mask
        ("bp", 8),      # projection bias broadcast [C_OUT, 32]
        ("bmask", 32),  # block-diagonal additive batch mask [BL, BL]
    ]
    offs, r = {}, 0
    for name, n in blocks:
        offs[name] = r
        r += n
    return offs, r


_OFF, _W_ROWS = _make_layout()


def _layernorm(x, g, b):
    mu = jnp.mean(x, axis=-1, keepdims=True)
    var = jnp.mean((x - mu) ** 2, axis=-1, keepdims=True)
    return (x - mu) * lax.rsqrt(var + LN_EPS) * g + b


# ---- the single fused kernel -------------------------------------------------
def _ddtm_kernel(x_ref, w_ref, out_ref):
    f32 = jnp.float32
    B, L, D, H = BATCH, SEQ_LEN, D_MODEL, N_HEADS
    dh = D // H
    scale = 1.0 / math.sqrt(dh)
    O = _OFF

    misc = w_ref[O["misc"]:O["misc"] + 8]       # freq | phase | hm*4 | pmask | nmask
    bias = w_ref[O["bias"]:O["bias"] + 16]      # bq bk bv bo bc1 bc2 bt1 bt2 bt3

    # -- diffusion-step embedding (DiffWave sin/cos, cos = sin(.+pi/2)) + swish MLP
    steps = x_ref[BL:BL + 8][0:B]                                         # [B, 32]
    demb = jnp.sin(steps * misc[0:1] + misc[1:2])                         # [B, 32]
    h = jnp.dot(demb, w_ref[O["wt1"]:O["wt1"] + 32],
                preferred_element_type=f32) + bias[6:7]
    h = h * jax.nn.sigmoid(h)                                             # swish
    h = jnp.dot(h, w_ref[O["wt2"]:O["wt2"] + 32],
                preferred_element_type=f32) + bias[7:8]
    h = h * jax.nn.sigmoid(h)                                             # swish
    part_t = jnp.dot(h, w_ref[O["wt3"]:O["wt3"] + 32],
                     preferred_element_type=f32) + bias[8:9]              # [B, D]

    # -- DataEmbedding (value + positional) + part_t; batch folded to [B*L, D]
    x_lc = x_ref[0:BL]                                                    # [BL, 32]
    emb = jnp.dot(x_lc, w_ref[O["wemb"]:O["wemb"] + 32],
                  preferred_element_type=f32)                             # [BL, D]
    pos = w_ref[O["pos"]:O["pos"] + L]                                    # [L, D]
    enc = emb + jnp.concatenate([pos + part_t[b:b + 1] for b in range(B)], axis=0)

    # -- multi-head self-attention: baked head masks + block-diag batch mask
    q = jnp.dot(enc, w_ref[O["wq"]:O["wq"] + D], preferred_element_type=f32) + bias[0:1]
    k = jnp.dot(enc, w_ref[O["wk"]:O["wk"] + D], preferred_element_type=f32) + bias[1:2]
    v = jnp.dot(enc, w_ref[O["wv"]:O["wv"] + D], preferred_element_type=f32) + bias[2:3]
    kt = k.T                                                              # [D, BL]
    bmask = w_ref[O["bmask"]:O["bmask"] + BL]                             # [BL, BL]

    attn = jnp.zeros((BL, D), f32)
    for hh in range(H):                                                   # static unroll
        hm = misc[2 + hh:3 + hh]                                          # [1, D]
        s = jnp.dot(q * hm, kt, preferred_element_type=f32) * scale + bmask
        s = s - jnp.max(s, axis=-1, keepdims=True)
        p = jnp.exp(s)
        p = p * pl.reciprocal(jnp.sum(p, axis=-1, keepdims=True), approx=True)
        attn = attn + jnp.dot(p, v * hm, preferred_element_type=f32)
    attn = jnp.dot(attn, w_ref[O["wo"]:O["wo"] + D],
                   preferred_element_type=f32) + bias[3:4]

    # -- EncoderLayer: residual, norm1, pointwise-conv FFN, norm2; Encoder norm
    ln = w_ref[O["ln"]:O["ln"] + 8]
    x1 = _layernorm(enc + attn, ln[0:1], ln[1:2])
    y = jnp.dot(x1, w_ref[O["wc1"]:O["wc1"] + D],
                preferred_element_type=f32) + bias[4:5]
    y = jnp.maximum(y, 0.0)                                               # relu
    y = jnp.dot(y, w_ref[O["wc2"]:O["wc2"] + D],
                preferred_element_type=f32) + bias[5:6]
    y = _layernorm(x1 + y, ln[2:3], ln[3:4])
    y = _layernorm(y, ln[4:5], ln[5:6])

    # -- projection Conv1d(d_model, c_out, k=3, pad=1) in channel-major domain
    y_t = y.T                                                             # [D, BL]
    y_prev = pltpu.roll(y_t, shift=1, axis=1) * misc[6:7]                 # zero l==0
    y_next = pltpu.roll(y_t, shift=BL - 1, axis=1) * misc[7:8]            # zero l==L-1
    wp = w_ref[O["wp"]:O["wp"] + 16]
    bp = w_ref[O["bp"]:O["bp"] + 8][0:C_OUT]
    out = (jnp.dot(wp[0:C_OUT], y_prev, preferred_element_type=f32)
           + jnp.dot(wp[C_OUT:2 * C_OUT], y_t, preferred_element_type=f32)
           + jnp.dot(wp[2 * C_OUT:3 * C_OUT], y_next, preferred_element_type=f32)
           + bp)                                                          # [C_OUT, BL]

    out_ref[...] = out.astype(out_ref.dtype)      # single lane-dense [4, 32] store


# ---- parameter init (deterministic, PyTorch-like uniform fan-in bounds) -----
def _lin(key, fan_in, fan_out):
    kw, kb = jax.random.split(key)
    bound = 1.0 / math.sqrt(fan_in)
    w = jax.random.uniform(kw, (fan_in, fan_out), jnp.float32, -bound, bound)
    b = jax.random.uniform(kb, (1, fan_out), jnp.float32, -bound, bound)
    return w, b


def _positional_embedding(seq_len, d_model):
    pos = jnp.arange(seq_len, dtype=jnp.float32)[:, None]
    div = jnp.exp(jnp.arange(0, d_model, 2, dtype=jnp.float32)
                  * (-math.log(10000.0) / d_model))
    pe = jnp.zeros((seq_len, d_model), jnp.float32)
    pe = pe.at[:, 0::2].set(jnp.sin(pos * div))
    pe = pe.at[:, 1::2].set(jnp.cos(pos * div))
    return pe


def _pad_rows(a, n):
    a = jnp.asarray(a, jnp.float32)
    if a.shape[0] < n:
        a = jnp.concatenate(
            [a, jnp.zeros((n - a.shape[0], a.shape[1]), jnp.float32)], axis=0)
    return a


def init_params(key):
    ks = jax.random.split(key, 12)
    f32 = jnp.float32
    w_emb = jax.random.uniform(ks[0], (ENC_IN, D_MODEL), f32,
                               -1.0 / math.sqrt(ENC_IN), 1.0 / math.sqrt(ENC_IN))
    wq, bq = _lin(ks[1], D_MODEL, D_MODEL)
    wk, bk = _lin(ks[2], D_MODEL, D_MODEL)
    wv, bv = _lin(ks[3], D_MODEL, D_MODEL)
    wo, bo = _lin(ks[4], D_MODEL, D_MODEL)
    wc1, bc1 = _lin(ks[5], D_MODEL, D_FF)
    wc2, bc2 = _lin(ks[6], D_FF, D_MODEL)
    bnd = 1.0 / math.sqrt(D_MODEL * 3)
    wp = jax.random.uniform(ks[7], (3, C_OUT, D_MODEL), f32, -bnd, bnd)  # wp[k]=W[:,:,k]
    bp = jax.random.uniform(ks[8], (C_OUT,), f32, -bnd, bnd)
    wt1, bt1 = _lin(ks[9], T_DIM_IN, T_DIM_MID)
    wt2, bt2 = _lin(ks[10], T_DIM_MID, T_DIM_OUT)
    wt3, bt3 = _lin(ks[11], T_DIM_OUT, D_FF)

    # -- baked masks / sin-cos rows -------------------------------------------
    lane = jnp.arange(D_MODEL)
    half = T_DIM_IN // 2
    fac = math.log(10000.0) / (half - 1)
    freqs = jnp.exp(jnp.arange(half, dtype=f32) * -fac)
    freq_row = jnp.zeros((D_MODEL,), f32).at[0:half].set(freqs).at[half:2 * half].set(freqs)
    phase_row = jnp.where((lane >= half) & (lane < 2 * half),
                          math.pi / 2.0, 0.0).astype(f32)
    hm = (lane[None, :] // (D_MODEL // N_HEADS)
          == jnp.arange(N_HEADS)[:, None]).astype(f32)                  # [H, D]
    prev_mask = (lane % SEQ_LEN != 0).astype(f32)
    next_mask = (lane % SEQ_LEN != SEQ_LEN - 1).astype(f32)
    misc = jnp.concatenate([freq_row[None, :], phase_row[None, :], hm,
                            prev_mask[None, :], next_mask[None, :]], axis=0)  # [8, D]

    ri = jnp.arange(BL)[:, None] // SEQ_LEN
    ci = jnp.arange(BL)[None, :] // SEQ_LEN
    bmask = jnp.where(ri == ci, 0.0, NEG_INF).astype(f32)               # [BL, BL]

    ones = jnp.ones((1, D_MODEL), f32)
    zeros = jnp.zeros((1, D_MODEL), f32)
    ln_rows = jnp.concatenate([ones, zeros, ones, zeros, ones, zeros], axis=0)
    bias_rows = jnp.concatenate([bq, bk, bv, bo, bc1, bc2, bt1, bt2, bt3], axis=0)
    bp_rows = jnp.broadcast_to(bp[:, None], (C_OUT, D_MODEL))

    blocks = {
        "wt1": _pad_rows(wt1, 32),          # zero-padded rows kill demb lanes >= T_DIM_IN
        "wt2": wt2, "wt3": wt3,
        "wemb": _pad_rows(w_emb, 32),       # zero-padded rows kill noise lanes >= enc_in
        "wq": wq, "wk": wk, "wv": wv, "wo": wo, "wc1": wc1, "wc2": wc2,
        "wp": _pad_rows(wp.reshape(3 * C_OUT, D_MODEL), 16),
        "pos": _positional_embedding(SEQ_LEN, D_MODEL),
        "ln": _pad_rows(ln_rows, 8),
        "bias": _pad_rows(bias_rows, 16),
        "misc": misc,
        "bp": _pad_rows(bp_rows, 8),
        "bmask": bmask,
    }
    slab = jnp.concatenate([blocks[name] for name, _ in [
        ("wt1", 0), ("wt2", 0), ("wt3", 0), ("wemb", 0),
        ("wq", 0), ("wk", 0), ("wv", 0), ("wo", 0), ("wc1", 0), ("wc2", 0),
        ("wp", 0), ("pos", 0), ("ln", 0), ("bias", 0), ("misc", 0),
        ("bp", 0), ("bmask", 0)]], axis=0)
    assert slab.shape == (_W_ROWS, D_MODEL), slab.shape
    return {"w": slab}


# ---- wrapper ----------------------------------------------------------------
_COST = pl.CostEstimate(flops=2_500_000, transcendentals=10_000, bytes_accessed=64_000)


def ddtm_forward(params, noise, conditional, mask, diffusion_steps):
    del conditional, mask  # unused by DDTM.forward (cond_conv never called)
    B, C, L = noise.shape
    f32 = jnp.float32
    # data slab: rows 0:BL = noise as [B*L, enc_in] zero-padded to 32 lanes,
    #            rows BL:BL+B = diffusion step broadcast across lanes.
    x_lc = jnp.transpose(noise, (0, 2, 1)).reshape(B * L, C).astype(f32)
    data = jnp.zeros((BL + 8, D_MODEL), f32)
    data = data.at[0:BL, 0:C].set(x_lc)
    data = data.at[BL:BL + B, :].set(
        jnp.broadcast_to(diffusion_steps.astype(f32).reshape(B, 1), (B, D_MODEL)))

    out_t = pl.pallas_call(
        _ddtm_kernel,
        out_shape=jax.ShapeDtypeStruct((C_OUT, BL), jnp.float32),   # lane-dense
        cost_estimate=_COST,
    )(data, params["w"])
    # back to torch's NCL layout [B, c_out, L] (512 B of XLA layout plumbing)
    return jnp.transpose(out_t.reshape(C_OUT, B, L), (1, 0, 2))


if __name__ == "__main__":
    key = jax.random.PRNGKey(0)
    k_noise, k_cond, k_mask, k_steps, k_params = jax.random.split(key, 5)

    noise = jax.random.normal(k_noise, (BATCH, ENC_IN, SEQ_LEN), jnp.float32)
    conditional = jax.random.normal(k_cond, (BATCH, ENC_IN, SEQ_LEN), jnp.float32)
    mask = (jax.random.uniform(k_mask, (BATCH, ENC_IN, SEQ_LEN)) > 0.5).astype(jnp.float32)
    diffusion_steps = jax.random.randint(k_steps, (BATCH, 1), 0, 50)

    params = init_params(k_params)

    out = ddtm_forward(params, noise, conditional, mask, diffusion_steps)
    out = jax.block_until_ready(out)

    assert out.shape == (BATCH, C_OUT, SEQ_LEN), out.shape
    assert bool(jnp.all(jnp.isfinite(out)))
    print("KERNEL_OK")
</pallas_src>

<mosaic_0001>
module attributes {stable_mosaic.version = 11 : i64} {
  func.func @_ddtm_kernel(%arg0: memref<40x32xf32, #tpu.memory_space<vmem>>, %arg1: memref<424x32xf32, #tpu.memory_space<vmem>>, %arg2: memref<4x32xf32, #tpu.memory_space<vmem>>) attributes {dimension_semantics = [], scalar_prefetch = 0 : i64, scratch_operands = 0 : i64, tpu.core_type = #tpu.core_type<tc>} {
    %c376 = arith.constant 376 : index
    %c0 = arith.constant 0 : index
    %0 = vector.load %arg1[%c376, %c0] : memref<424x32xf32, #tpu.memory_space<vmem>>, vector<8x32xf32>
    %c360 = arith.constant 360 : index
    %c0_0 = arith.constant 0 : index
    %1 = vector.load %arg1[%c360, %c0_0] : memref<424x32xf32, #tpu.memory_space<vmem>>, vector<16x32xf32>
    %c32 = arith.constant 32 : index
    %c0_1 = arith.constant 0 : index
    %2 = vector.load %arg0[%c32, %c0_1] : memref<40x32xf32, #tpu.memory_space<vmem>>, vector<8x32xf32>
    %3 = vector.extract_strided_slice %2 {offsets = [0, 0], sizes = [2, 32], strides = [1, 1]} : vector<8x32xf32> to vector<2x32xf32>
    %4 = vector.extract_strided_slice %0 {offsets = [0, 0], sizes = [1, 32], strides = [1, 1]} : vector<8x32xf32> to vector<1x32xf32>
    %5 = vector.broadcast %4 : vector<1x32xf32> to vector<2x32xf32>
    %6 = arith.mulf %3, %5 : vector<2x32xf32>
    %7 = vector.extract_strided_slice %0 {offsets = [1, 0], sizes = [1, 32], strides = [1, 1]} : vector<8x32xf32> to vector<1x32xf32>
    %8 = vector.broadcast %7 : vector<1x32xf32> to vector<2x32xf32>
    %9 = arith.addf %6, %8 : vector<2x32xf32>
    %10 = math.sin %9 : vector<2x32xf32>
    %c0_2 = arith.constant 0 : index
    %c0_3 = arith.constant 0 : index
    %11 = vector.load %arg1[%c0_2, %c0_3] : memref<424x32xf32, #tpu.memory_space<vmem>>, vector<32x32xf32>
    %cst = arith.constant dense<0.000000e+00> : vector<2x32xf32>
    %12 = tpu.matmul %10, %11, %cst {dimension_numbers = #tpu.dot_dimension_numbers<[1], [0], [0], [1], [0, 0, 1, 1], [], []>} : vector<2x32xf32>, vector<32x32xf32>, vector<2x32xf32> -> vector<2x32xf32>
    %13 = vector.extract_strided_slice %1 {offsets = [6, 0], sizes = [1, 32], strides = [1, 1]} : vector<16x32xf32> to vector<1x32xf32>
    %14 = vector.broadcast %13 : vector<1x32xf32> to vector<2x32xf32>
    %15 = arith.addf %12, %14 : vector<2x32xf32>
    %16 = arith.negf %15 : vector<2x32xf32>
    %17 = math.exp %16 : vector<2x32xf32>
    %cst_4 = arith.constant 1.000000e+00 : f32
    %18 = vector.broadcast %cst_4 : f32 to vector<2x32xf32>
    %19 = arith.addf %18, %17 : vector<2x32xf32>
    %20 = arith.divf %18, %19 : vector<2x32xf32>
    %21 = arith.mulf %15, %20 : vector<2x32xf32>
    %c32_5 = arith.constant 32 : index
    %c0_6 = arith.constant 0 : index
    %22 = vector.load %arg1[%c32_5, %c0_6] : memref<424x32xf32, #tpu.memory_space<vmem>>, vector<32x32xf32>
    %cst_7 = arith.constant dense<0.000000e+00> : vector<2x32xf32>
    %23 = tpu.matmul %21, %22, %cst_7 {dimension_numbers = #tpu.dot_dimension_numbers<[1], [0], [0], [1], [0, 0, 1, 1], [], []>} : vector<2x32xf32>, vector<32x32xf32>, vector<2x32xf32> -> vector<2x32xf32>
    %24 = vector.extract_strided_slice %1 {offsets = [7, 0], sizes = [1, 32], strides = [1, 1]} : vector<16x32xf32> to vector<1x32xf32>
    %25 = vector.broadcast %24 : vector<1x32xf32> to vector<2x32xf32>
    %26 = arith.addf %23, %25 : vector<2x32xf32>
    %27 = arith.negf %26 : vector<2x32xf32>
    %28 = math.exp %27 : vector<2x32xf32>
    %cst_8 = arith.constant 1.000000e+00 : f32
    %29 = vector.broadcast %cst_8 : f32 to vector<2x32xf32>
    %30 = arith.addf %29, %28 : vector<2x32xf32>
    %31 = arith.divf %29, %30 : vector<2x32xf32>
    %32 = arith.mulf %26, %31 : vector<2x32xf32>
    %c64 = arith.constant 64 : index
    %c0_9 = arith.constant 0 : index
    %33 = vector.load %arg1[%c64, %c0_9] : memref<424x32xf32, #tpu.memory_space<vmem>>, vector<32x32xf32>
    %cst_10 = arith.constant dense<0.000000e+00> : vector<2x32xf32>
    %34 = tpu.matmul %32, %33, %cst_10 {dimension_numbers = #tpu.dot_dimension_numbers<[1], [0], [0], [1], [0, 0, 1, 1], [], []>} : vector<2x32xf32>, vector<32x32xf32>, vector<2x32xf32> -> vector<2x32xf32>
    %35 = vector.extract_strided_slice %1 {offsets = [8, 0], sizes = [1, 32], strides = [1, 1]} : vector<16x32xf32> to vector<1x32xf32>
    %36 = vector.broadcast %35 : vector<1x32xf32> to vector<2x32xf32>
    %37 = arith.addf %34, %36 : vector<2x32xf32>
    %c0_11 = arith.constant 0 : index
    %c0_12 = arith.constant 0 : index
    %38 = vector.load %arg0[%c0_11, %c0_12] : memref<40x32xf32, #tpu.memory_space<vmem>>, vector<32x32xf32>
    %c96 = arith.constant 96 : index
    %c0_13 = arith.constant 0 : index
    %39 = vector.load %arg1[%c96, %c0_13] : memref<424x32xf32, #tpu.memory_space<vmem>>, vector<32x32xf32>
    %cst_14 = arith.constant dense<0.000000e+00> : vector<32x32xf32>
    %40 = tpu.matmul %38, %39, %cst_14 {dimension_numbers = #tpu.dot_dimension_numbers<[1], [0], [0], [1], [0, 0, 1, 1], [], []>} : vector<32x32xf32>, vector<32x32xf32>, vector<32x32xf32> -> vector<32x32xf32>
    %c336 = arith.constant 336 : index
    %c0_15 = arith.constant 0 : index
    %41 = vector.load %arg1[%c336, %c0_15] : memref<424x32xf32, #tpu.memory_space<vmem>>, vector<16x32xf32>
    %42 = vector.extract_strided_slice %37 {offsets = [0, 0], sizes = [1, 32], strides = [1, 1]} : vector<2x32xf32> to vector<1x32xf32>
    %43 = vector.broadcast %42 : vector<1x32xf32> to vector<16x32xf32>
    %44 = arith.addf %41, %43 : vector<16x32xf32>
    %45 = vector.extract_strided_slice %37 {offsets = [1, 0], sizes = [1, 32], strides = [1, 1]} : vector<2x32xf32> to vector<1x32xf32>
    %46 = vector.broadcast %45 : vector<1x32xf32> to vector<16x32xf32>
    %47 = arith.addf %41, %46 : vector<16x32xf32>
    %48 = tpu.concatenate %44, %47 in 0 : vector<16x32xf32>, vector<16x32xf32> -> vector<32x32xf32>
    %49 = arith.addf %40, %48 : vector<32x32xf32>
    %c128 = arith.constant 128 : index
    %c0_16 = arith.constant 0 : index
    %50 = vector.load %arg1[%c128, %c0_16] : memref<424x32xf32, #tpu.memory_space<vmem>>, vector<32x32xf32>
    %cst_17 = arith.constant dense<0.000000e+00> : vector<32x32xf32>
    %51 = tpu.matmul %49, %50, %cst_17 {dimension_numbers = #tpu.dot_dimension_numbers<[1], [0], [0], [1], [0, 0, 1, 1], [], []>} : vector<32x32xf32>, vector<32x32xf32>, vector<32x32xf32> -> vector<32x32xf32>
    %52 = vector.extract_strided_slice %1 {offsets = [0, 0], sizes = [1, 32], strides = [1, 1]} : vector<16x32xf32> to vector<1x32xf32>
    %53 = vector.broadcast %52 : vector<1x32xf32> to vector<32x32xf32>
    %54 = arith.addf %51, %53 : vector<32x32xf32>
    %c160 = arith.constant 160 : index
    %c0_18 = arith.constant 0 : index
    %55 = vector.load %arg1[%c160, %c0_18] : memref<424x32xf32, #tpu.memory_space<vmem>>, vector<32x32xf32>
    %cst_19 = arith.constant dense<0.000000e+00> : vector<32x32xf32>
    %56 = tpu.matmul %49, %55, %cst_19 {dimension_numbers = #tpu.dot_dimension_numbers<[1], [0], [0], [1], [0, 0, 1, 1], [], []>} : vector<32x32xf32>, vector<32x32xf32>, vector<32x32xf32> -> vector<32x32xf32>
    %57 = vector.extract_strided_slice %1 {offsets = [1, 0], sizes = [1, 32], strides = [1, 1]} : vector<16x32xf32> to vector<1x32xf32>
    %58 = vector.broadcast %57 : vector<1x32xf32> to vector<32x32xf32>
    %59 = arith.addf %56, %58 : vector<32x32xf32>
    %c192 = arith.constant 192 : index
    %c0_20 = arith.constant 0 : index
    %60 = vector.load %arg1[%c192, %c0_20] : memref<424x32xf32, #tpu.memory_space<vmem>>, vector<32x32xf32>
    %cst_21 = arith.constant dense<0.000000e+00> : vector<32x32xf32>
    %61 = tpu.matmul %49, %60, %cst_21 {dimension_numbers = #tpu.dot_dimension_numbers<[1], [0], [0], [1], [0, 0, 1, 1], [], []>} : vector<32x32xf32>, vector<32x32xf32>, vector<32x32xf32> -> vector<32x32xf32>
    %62 = vector.extract_strided_slice %1 {offsets = [2, 0], sizes = [1, 32], strides = [1, 1]} : vector<16x32xf32> to vector<1x32xf32>
    %63 = vector.broadcast %62 : vector<1x32xf32> to vector<32x32xf32>
    %64 = arith.addf %61, %63 : vector<32x32xf32>
    %65 = tpu.transpose %59, [1, 0] : vector<32x32xf32> -> vector<32x32xf32>
    %c392 = arith.constant 392 : index
    %c0_22 = arith.constant 0 : index
    %66 = vector.load %arg1[%c392, %c0_22] : memref<424x32xf32, #tpu.memory_space<vmem>>, vector<32x32xf32>
    %cst_23 = arith.constant 0.000000e+00 : f32
    %67 = vector.broadcast %cst_23 : f32 to vector<32x32xf32>
    %68 = vector.extract_strided_slice %0 {offsets = [2, 0], sizes = [1, 32], strides = [1, 1]} : vector<8x32xf32> to vector<1x32xf32>
    %69 = vector.broadcast %68 : vector<1x32xf32> to vector<32x32xf32>
    %70 = arith.mulf %54, %69 : vector<32x32xf32>
    %cst_24 = arith.constant dense<0.000000e+00> : vector<32x32xf32>
    %71 = tpu.matmul %70, %65, %cst_24 {dimension_numbers = #tpu.dot_dimension_numbers<[1], [0], [0], [1], [0, 0, 1, 1], [], []>} : vector<32x32xf32>, vector<32x32xf32>, vector<32x32xf32> -> vector<32x32xf32>
    %cst_25 = arith.constant 0.353553385 : f32
    %72 = vector.broadcast %cst_25 : f32 to vector<32x32xf32>
    %73 = arith.mulf %71, %72 : vector<32x32xf32>
    %74 = arith.addf %73, %66 : vector<32x32xf32>
    %cst_26 = arith.constant dense<0xFF800000> : vector<32xf32>
    %75 = vector.multi_reduction <maximumf>, %74, %cst_26 [1] : vector<32x32xf32> to vector<32xf32>
    %76 = vector.shape_cast %75 : vector<32xf32> to vector<32x1xf32>
    %77 = vector.broadcast %76 : vector<32x1xf32> to vector<32x32xf32>
    %78 = arith.subf %74, %77 : vector<32x32xf32>
    %79 = math.exp %78 : vector<32x32xf32>
    %cst_27 = arith.constant dense<0.000000e+00> : vector<32xf32>
    %80 = vector.multi_reduction <add>, %79, %cst_27 [1] : vector<32x32xf32> to vector<32xf32>
    %81 = vector.shape_cast %80 : vector<32xf32> to vector<32x1xf32>
    %82 = tpu.reciprocal %81 {approx = true} : vector<32x1xf32> -> vector<32x1xf32>
    %83 = vector.broadcast %82 : vector<32x1xf32> to vector<32x32xf32>
    %84 = arith.mulf %79, %83 : vector<32x32xf32>
    %85 = vector.broadcast %68 : vector<1x32xf32> to vector<32x32xf32>
    %86 = arith.mulf %64, %85 : vector<32x32xf32>
    %cst_28 = arith.constant dense<0.000000e+00> : vector<32x32xf32>
    %87 = tpu.matmul %84, %86, %cst_28 {dimension_numbers = #tpu.dot_dimension_numbers<[1], [0], [0], [1], [0, 0, 1, 1], [], []>} : vector<32x32xf32>, vector<32x32xf32>, vector<32x32xf32> -> vector<32x32xf32>
    %88 = arith.addf %67, %87 : vector<32x32xf32>
    %89 = vector.extract_strided_slice %0 {offsets = [3, 0], sizes = [1, 32], strides = [1, 1]} : vector<8x32xf32> to vector<1x32xf32>
    %90 = vector.broadcast %89 : vector<1x32xf32> to vector<32x32xf32>
    %91 = arith.mulf %54, %90 : vector<32x32xf32>
    %cst_29 = arith.constant dense<0.000000e+00> : vector<32x32xf32>
    %92 = tpu.matmul %91, %65, %cst_29 {dimension_numbers = #tpu.dot_dimension_numbers<[1], [0], [0], [1], [0, 0, 1, 1], [], []>} : vector<32x32xf32>, vector<32x32xf32>, vector<32x32xf32> -> vector<32x32xf32>
    %cst_30 = arith.constant 0.353553385 : f32
    %93 = vector.broadcast %cst_30 : f32 to vector<32x32xf32>
    %94 = arith.mulf %92, %93 : vector<32x32xf32>
    %95 = arith.addf %94, %66 : vector<32x32xf32>
    %cst_31 = arith.constant dense<0xFF800000> : vector<32xf32>
    %96 = vector.multi_reduction <maximumf>, %95, %cst_31 [1] : vector<32x32xf32> to vector<32xf32>
    %97 = vector.shape_cast %96 : vector<32xf32> to vector<32x1xf32>
    %98 = vector.broadcast %97 : vector<32x1xf32> to vector<32x32xf32>
    %99 = arith.subf %95, %98 : vector<32x32xf32>
    %100 = math.exp %99 : vector<32x32xf32>
    %cst_32 = arith.constant dense<0.000000e+00> : vector<32xf32>
    %101 = vector.multi_reduction <add>, %100, %cst_32 [1] : vector<32x32xf32> to vector<32xf32>
    %102 = vector.shape_cast %101 : vector<32xf32> to vector<32x1xf32>
    %103 = tpu.reciprocal %102 {approx = true} : vector<32x1xf32> -> vector<32x1xf32>
    %104 = vector.broadcast %103 : vector<32x1xf32> to vector<32x32xf32>
    %105 = arith.mulf %100, %104 : vector<32x32xf32>
    %106 = vector.broadcast %89 : vector<1x32xf32> to vector<32x32xf32>
    %107 = arith.mulf %64, %106 : vector<32x32xf32>
    %cst_33 = arith.constant dense<0.000000e+00> : vector<32x32xf32>
    %108 = tpu.matmul %105, %107, %cst_33 {dimension_numbers = #tpu.dot_dimension_numbers<[1], [0], [0], [1], [0, 0, 1, 1], [], []>} : vector<32x32xf32>, vector<32x32xf32>, vector<32x32xf32> -> vector<32x32xf32>
    %109 = arith.addf %88, %108 : vector<32x32xf32>
    %110 = vector.extract_strided_slice %0 {offsets = [4, 0], sizes = [1, 32], strides = [1, 1]} : vector<8x32xf32> to vector<1x32xf32>
    %111 = vector.broadcast %110 : vector<1x32xf32> to vector<32x32xf32>
    %112 = arith.mulf %54, %111 : vector<32x32xf32>
    %cst_34 = arith.constant dense<0.000000e+00> : vector<32x32xf32>
    %113 = tpu.matmul %112, %65, %cst_34 {dimension_numbers = #tpu.dot_dimension_numbers<[1], [0], [0], [1], [0, 0, 1, 1], [], []>} : vector<32x32xf32>, vector<32x32xf32>, vector<32x32xf32> -> vector<32x32xf32>
    %cst_35 = arith.constant 0.353553385 : f32
    %114 = vector.broadcast %cst_35 : f32 to vector<32x32xf32>
    %115 = arith.mulf %113, %114 : vector<32x32xf32>
    %116 = arith.addf %115, %66 : vector<32x32xf32>
    %cst_36 = arith.constant dense<0xFF800000> : vector<32xf32>
    %117 = vector.multi_reduction <maximumf>, %116, %cst_36 [1] : vector<32x32xf32> to vector<32xf32>
    %118 = vector.shape_cast %117 : vector<32xf32> to vector<32x1xf32>
    %119 = vector.broadcast %118 : vector<32x1xf32> to vector<32x32xf32>
    %120 = arith.subf %116, %119 : vector<32x32xf32>
    %121 = math.exp %120 : vector<32x32xf32>
    %cst_37 = arith.constant dense<0.000000e+00> : vector<32xf32>
    %122 = vector.multi_reduction <add>, %121, %cst_37 [1] : vector<32x32xf32> to vector<32xf32>
    %123 = vector.shape_cast %122 : vector<32xf32> to vector<32x1xf32>
    %124 = tpu.reciprocal %123 {approx = true} : vector<32x1xf32> -> vector<32x1xf32>
    %125 = vector.broadcast %124 : vector<32x1xf32> to vector<32x32xf32>
    %126 = arith.mulf %121, %125 : vector<32x32xf32>
    %127 = vector.broadcast %110 : vector<1x32xf32> to vector<32x32xf32>
    %128 = arith.mulf %64, %127 : vector<32x32xf32>
    %cst_38 = arith.constant dense<0.000000e+00> : vector<32x32xf32>
    %129 = tpu.matmul %126, %128, %cst_38 {dimension_numbers = #tpu.dot_dimension_numbers<[1], [0], [0], [1], [0, 0, 1, 1], [], []>} : vector<32x32xf32>, vector<32x32xf32>, vector<32x32xf32> -> vector<32x32xf32>
    %130 = arith.addf %109, %129 : vector<32x32xf32>
    %131 = vector.extract_strided_slice %0 {offsets = [5, 0], sizes = [1, 32], strides = [1, 1]} : vector<8x32xf32> to vector<1x32xf32>
    %132 = vector.broadcast %131 : vector<1x32xf32> to vector<32x32xf32>
    %133 = arith.mulf %54, %132 : vector<32x32xf32>
    %cst_39 = arith.constant dense<0.000000e+00> : vector<32x32xf32>
    %134 = tpu.matmul %133, %65, %cst_39 {dimension_numbers = #tpu.dot_dimension_numbers<[1], [0], [0], [1], [0, 0, 1, 1], [], []>} : vector<32x32xf32>, vector<32x32xf32>, vector<32x32xf32> -> vector<32x32xf32>
    %cst_40 = arith.constant 0.353553385 : f32
    %135 = vector.broadcast %cst_40 : f32 to vector<32x32xf32>
    %136 = arith.mulf %134, %135 : vector<32x32xf32>
    %137 = arith.addf %136, %66 : vector<32x32xf32>
    %cst_41 = arith.constant dense<0xFF800000> : vector<32xf32>
    %138 = vector.multi_reduction <maximumf>, %137, %cst_41 [1] : vector<32x32xf32> to vector<32xf32>
    %139 = vector.shape_cast %138 : vector<32xf32> to vector<32x1xf32>
    %140 = vector.broadcast %139 : vector<32x1xf32> to vector<32x32xf32>
    %141 = arith.subf %137, %140 : vector<32x32xf32>
    %142 = math.exp %141 : vector<32x32xf32>
    %cst_42 = arith.constant dense<0.000000e+00> : vector<32xf32>
    %143 = vector.multi_reduction <add>, %142, %cst_42 [1] : vector<32x32xf32> to vector<32xf32>
    %144 = vector.shape_cast %143 : vector<32xf32> to vector<32x1xf32>
    %145 = tpu.reciprocal %144 {approx = true} : vector<32x1xf32> -> vector<32x1xf32>
    %146 = vector.broadcast %145 : vector<32x1xf32> to vector<32x32xf32>
    %147 = arith.mulf %142, %146 : vector<32x32xf32>
    %148 = vector.broadcast %131 : vector<1x32xf32> to vector<32x32xf32>
    %149 = arith.mulf %64, %148 : vector<32x32xf32>
    %cst_43 = arith.constant dense<0.000000e+00> : vector<32x32xf32>
    %150 = tpu.matmul %147, %149, %cst_43 {dimension_numbers = #tpu.dot_dimension_numbers<[1], [0], [0], [1], [0, 0, 1, 1], [], []>} : vector<32x32xf32>, vector<32x32xf32>, vector<32x32xf32> -> vector<32x32xf32>
    %151 = arith.addf %130, %150 : vector<32x32xf32>
    %c224 = arith.constant 224 : index
    %c0_44 = arith.constant 0 : index
    %152 = vector.load %arg1[%c224, %c0_44] : memref<424x32xf32, #tpu.memory_space<vmem>>, vector<32x32xf32>
    %cst_45 = arith.constant dense<0.000000e+00> : vector<32x32xf32>
    %153 = tpu.matmul %151, %152, %cst_45 {dimension_numbers = #tpu.dot_dimension_numbers<[1], [0], [0], [1], [0, 0, 1, 1], [], []>} : vector<32x32xf32>, vector<32x32xf32>, vector<32x32xf32> -> vector<32x32xf32>
    %154 = vector.extract_strided_slice %1 {offsets = [3, 0], sizes = [1, 32], strides = [1, 1]} : vector<16x32xf32> to vector<1x32xf32>
    %155 = vector.broadcast %154 : vector<1x32xf32> to vector<32x32xf32>
    %156 = arith.addf %153, %155 : vector<32x32xf32>
    %c352 = arith.constant 352 : index
    %c0_46 = arith.constant 0 : index
    %157 = vector.load %arg1[%c352, %c0_46] : memref<424x32xf32, #tpu.memory_space<vmem>>, vector<8x32xf32>
    %158 = arith.addf %49, %156 : vector<32x32xf32>
    %159 = vector.extract_strided_slice %157 {offsets = [0, 0], sizes = [1, 32], strides = [1, 1]} : vector<8x32xf32> to vector<1x32xf32>
    %160 = vector.extract_strided_slice %157 {offsets = [1, 0], sizes = [1, 32], strides = [1, 1]} : vector<8x32xf32> to vector<1x32xf32>
    %cst_47 = arith.constant dense<0.000000e+00> : vector<32xf32>
    %161 = vector.multi_reduction <add>, %158, %cst_47 [1] : vector<32x32xf32> to vector<32xf32>
    %162 = vector.shape_cast %161 : vector<32xf32> to vector<32x1xf32>
    %cst_48 = arith.constant 3.200000e+01 : f32
    %163 = vector.broadcast %cst_48 : f32 to vector<32x1xf32>
    %164 = arith.divf %162, %163 : vector<32x1xf32>
    %165 = vector.broadcast %164 : vector<32x1xf32> to vector<32x32xf32>
    %166 = arith.subf %158, %165 : vector<32x32xf32>
    %167 = arith.mulf %166, %166 : vector<32x32xf32>
    %cst_49 = arith.constant dense<0.000000e+00> : vector<32xf32>
    %168 = vector.multi_reduction <add>, %167, %cst_49 [1] : vector<32x32xf32> to vector<32xf32>
    %169 = vector.shape_cast %168 : vector<32xf32> to vector<32x1xf32>
    %cst_50 = arith.constant 3.200000e+01 : f32
    %170 = vector.broadcast %cst_50 : f32 to vector<32x1xf32>
    %171 = arith.divf %169, %170 : vector<32x1xf32>
    %172 = vector.broadcast %164 : vector<32x1xf32> to vector<32x32xf32>
    %173 = arith.subf %158, %172 : vector<32x32xf32>
    %cst_51 = arith.constant 9.99999974E-6 : f32
    %174 = vector.broadcast %cst_51 : f32 to vector<32x1xf32>
    %175 = arith.addf %171, %174 : vector<32x1xf32>
    %176 = math.rsqrt %175 : vector<32x1xf32>
    %177 = vector.broadcast %176 : vector<32x1xf32> to vector<32x32xf32>
    %178 = arith.mulf %173, %177 : vector<32x32xf32>
    %179 = vector.broadcast %159 : vector<1x32xf32> to vector<32x32xf32>
    %180 = arith.mulf %178, %179 : vector<32x32xf32>
    %181 = vector.broadcast %160 : vector<1x32xf32> to vector<32x32xf32>
    %182 = arith.addf %180, %181 : vector<32x32xf32>
    %c256 = arith.constant 256 : index
    %c0_52 = arith.constant 0 : index
    %183 = vector.load %arg1[%c256, %c0_52] : memref<424x32xf32, #tpu.memory_space<vmem>>, vector<32x32xf32>
    %cst_53 = arith.constant dense<0.000000e+00> : vector<32x32xf32>
    %184 = tpu.matmul %182, %183, %cst_53 {dimension_numbers = #tpu.dot_dimension_numbers<[1], [0], [0], [1], [0, 0, 1, 1], [], []>} : vector<32x32xf32>, vector<32x32xf32>, vector<32x32xf32> -> vector<32x32xf32>
    %185 = vector.extract_strided_slice %1 {offsets = [4, 0], sizes = [1, 32], strides = [1, 1]} : vector<16x32xf32> to vector<1x32xf32>
    %186 = vector.broadcast %185 : vector<1x32xf32> to vector<32x32xf32>
    %187 = arith.addf %184, %186 : vector<32x32xf32>
    %cst_54 = arith.constant 0.000000e+00 : f32
    %188 = vector.broadcast %cst_54 : f32 to vector<32x32xf32>
    %189 = arith.maximumf %187, %188 : vector<32x32xf32>
    %c288 = arith.constant 288 : index
    %c0_55 = arith.constant 0 : index
    %190 = vector.load %arg1[%c288, %c0_55] : memref<424x32xf32, #tpu.memory_space<vmem>>, vector<32x32xf32>
    %cst_56 = arith.constant dense<0.000000e+00> : vector<32x32xf32>
    %191 = tpu.matmul %189, %190, %cst_56 {dimension_numbers = #tpu.dot_dimension_numbers<[1], [0], [0], [1], [0, 0, 1, 1], [], []>} : vector<32x32xf32>, vector<32x32xf32>, vector<32x32xf32> -> vector<32x32xf32>
    %192 = vector.extract_strided_slice %1 {offsets = [5, 0], sizes = [1, 32], strides = [1, 1]} : vector<16x32xf32> to vector<1x32xf32>
    %193 = vector.broadcast %192 : vector<1x32xf32> to vector<32x32xf32>
    %194 = arith.addf %191, %193 : vector<32x32xf32>
    %195 = arith.addf %182, %194 : vector<32x32xf32>
    %196 = vector.extract_strided_slice %157 {offsets = [2, 0], sizes = [1, 32], strides = [1, 1]} : vector<8x32xf32> to vector<1x32xf32>
    %197 = vector.extract_strided_slice %157 {offsets = [3, 0], sizes = [1, 32], strides = [1, 1]} : vector<8x32xf32> to vector<1x32xf32>
    %cst_57 = arith.constant dense<0.000000e+00> : vector<32xf32>
    %198 = vector.multi_reduction <add>, %195, %cst_57 [1] : vector<32x32xf32> to vector<32xf32>
    %199 = vector.shape_cast %198 : vector<32xf32> to vector<32x1xf32>
    %cst_58 = arith.constant 3.200000e+01 : f32
    %200 = vector.broadcast %cst_58 : f32 to vector<32x1xf32>
    %201 = arith.divf %199, %200 : vector<32x1xf32>
    %202 = vector.broadcast %201 : vector<32x1xf32> to vector<32x32xf32>
    %203 = arith.subf %195, %202 : vector<32x32xf32>
    %204 = arith.mulf %203, %203 : vector<32x32xf32>
    %cst_59 = arith.constant dense<0.000000e+00> : vector<32xf32>
    %205 = vector.multi_reduction <add>, %204, %cst_59 [1] : vector<32x32xf32> to vector<32xf32>
    %206 = vector.shape_cast %205 : vector<32xf32> to vector<32x1xf32>
    %cst_60 = arith.constant 3.200000e+01 : f32
    %207 = vector.broadcast %cst_60 : f32 to vector<32x1xf32>
    %208 = arith.divf %206, %207 : vector<32x1xf32>
    %209 = vector.broadcast %201 : vector<32x1xf32> to vector<32x32xf32>
    %210 = arith.subf %195, %209 : vector<32x32xf32>
    %cst_61 = arith.constant 9.99999974E-6 : f32
    %211 = vector.broadcast %cst_61 : f32 to vector<32x1xf32>
    %212 = arith.addf %208, %211 : vector<32x1xf32>
    %213 = math.rsqrt %212 : vector<32x1xf32>
    %214 = vector.broadcast %213 : vector<32x1xf32> to vector<32x32xf32>
    %215 = arith.mulf %210, %214 : vector<32x32xf32>
    %216 = vector.broadcast %196 : vector<1x32xf32> to vector<32x32xf32>
    %217 = arith.mulf %215, %216 : vector<32x32xf32>
    %218 = vector.broadcast %197 : vector<1x32xf32> to vector<32x32xf32>
    %219 = arith.addf %217, %218 : vector<32x32xf32>
    %220 = vector.extract_strided_slice %157 {offsets = [4, 0], sizes = [1, 32], strides = [1, 1]} : vector<8x32xf32> to vector<1x32xf32>
    %221 = vector.extract_strided_slice %157 {offsets = [5, 0], sizes = [1, 32], strides = [1, 1]} : vector<8x32xf32> to vector<1x32xf32>
    %cst_62 = arith.constant dense<0.000000e+00> : vector<32xf32>
    %222 = vector.multi_reduction <add>, %219, %cst_62 [1] : vector<32x32xf32> to vector<32xf32>
    %223 = vector.shape_cast %222 : vector<32xf32> to vector<32x1xf32>
    %cst_63 = arith.constant 3.200000e+01 : f32
    %224 = vector.broadcast %cst_63 : f32 to vector<32x1xf32>
    %225 = arith.divf %223, %224 : vector<32x1xf32>
    %226 = vector.broadcast %225 : vector<32x1xf32> to vector<32x32xf32>
    %227 = arith.subf %219, %226 : vector<32x32xf32>
    %228 = arith.mulf %227, %227 : vector<32x32xf32>
    %cst_64 = arith.constant dense<0.000000e+00> : vector<32xf32>
    %229 = vector.multi_reduction <add>, %228, %cst_64 [1] : vector<32x32xf32> to vector<32xf32>
    %230 = vector.shape_cast %229 : vector<32xf32> to vector<32x1xf32>
    %cst_65 = arith.constant 3.200000e+01 : f32
    %231 = vector.broadcast %cst_65 : f32 to vector<32x1xf32>
    %232 = arith.divf %230, %231 : vector<32x1xf32>
    %233 = vector.broadcast %225 : vector<32x1xf32> to vector<32x32xf32>
    %234 = arith.subf %219, %233 : vector<32x32xf32>
    %cst_66 = arith.constant 9.99999974E-6 : f32
    %235 = vector.broadcast %cst_66 : f32 to vector<32x1xf32>
    %236 = arith.addf %232, %235 : vector<32x1xf32>
    %237 = math.rsqrt %236 : vector<32x1xf32>
    %238 = vector.broadcast %237 : vector<32x1xf32> to vector<32x32xf32>
    %239 = arith.mulf %234, %238 : vector<32x32xf32>
    %240 = vector.broadcast %220 : vector<1x32xf32> to vector<32x32xf32>
    %241 = arith.mulf %239, %240 : vector<32x32xf32>
    %242 = vector.broadcast %221 : vector<1x32xf32> to vector<32x32xf32>
    %243 = arith.addf %241, %242 : vector<32x32xf32>
    %244 = tpu.transpose %243, [1, 0] : vector<32x32xf32> -> vector<32x32xf32>
    %c1_i32 = arith.constant 1 : i32
    %245 = tpu.dynamic_rotate %244 by %c1_i32 dim 1 : vector<32x32xf32>, i32 -> vector<32x32xf32>
    %246 = vector.extract_strided_slice %0 {offsets = [6, 0], sizes = [1, 32], strides = [1, 1]} : vector<8x32xf32> to vector<1x32xf32>
    %247 = vector.broadcast %246 : vector<1x32xf32> to vector<32x32xf32>
    %248 = arith.mulf %245, %247 : vector<32x32xf32>
    %c31_i32 = arith.constant 31 : i32
    %249 = tpu.dynamic_rotate %244 by %c31_i32 dim 1 : vector<32x32xf32>, i32 -> vector<32x32xf32>
    %250 = vector.extract_strided_slice %0 {offsets = [7, 0], sizes = [1, 32], strides = [1, 1]} : vector<8x32xf32> to vector<1x32xf32>
    %251 = vector.broadcast %250 : vector<1x32xf32> to vector<32x32xf32>
    %252 = arith.mulf %249, %251 : vector<32x32xf32>
    %c320 = arith.constant 320 : index
    %c0_67 = arith.constant 0 : index
    %253 = vector.load %arg1[%c320, %c0_67] : memref<424x32xf32, #tpu.memory_space<vmem>>, vector<16x32xf32>
    %c384 = arith.constant 384 : index
    %c0_68 = arith.constant 0 : index
    %254 = vector.load %arg1[%c384, %c0_68] : memref<424x32xf32, #tpu.memory_space<vmem>>, vector<8x32xf32>
    %255 = vector.extract_strided_slice %254 {offsets = [0, 0], sizes = [4, 32], strides = [1, 1]} : vector<8x32xf32> to vector<4x32xf32>
    %256 = vector.extract_strided_slice %253 {offsets = [0, 0], sizes = [4, 32], strides = [1, 1]} : vector<16x32xf32> to vector<4x32xf32>
    %cst_69 = arith.constant dense<0.000000e+00> : vector<4x32xf32>
    %257 = tpu.matmul %256, %248, %cst_69 {dimension_numbers = #tpu.dot_dimension_numbers<[1], [0], [0], [1], [0, 0, 1, 1], [], []>} : vector<4x32xf32>, vector<32x32xf32>, vector<4x32xf32> -> vector<4x32xf32>
    %258 = vector.extract_strided_slice %253 {offsets = [4, 0], sizes = [4, 32], strides = [1, 1]} : vector<16x32xf32> to vector<4x32xf32>
    %cst_70 = arith.constant dense<0.000000e+00> : vector<4x32xf32>
    %259 = tpu.matmul %258, %244, %cst_70 {dimension_numbers = #tpu.dot_dimension_numbers<[1], [0], [0], [1], [0, 0, 1, 1], [], []>} : vector<4x32xf32>, vector<32x32xf32>, vector<4x32xf32> -> vector<4x32xf32>
    %260 = arith.addf %257, %259 : vector<4x32xf32>
    %261 = vector.extract_strided_slice %253 {offsets = [8, 0], sizes = [4, 32], strides = [1, 1]} : vector<16x32xf32> to vector<4x32xf32>
    %cst_71 = arith.constant dense<0.000000e+00> : vector<4x32xf32>
    %262 = tpu.matmul %261, %252, %cst_71 {dimension_numbers = #tpu.dot_dimension_numbers<[1], [0], [0], [1], [0, 0, 1, 1], [], []>} : vector<4x32xf32>, vector<32x32xf32>, vector<4x32xf32> -> vector<4x32xf32>
    %263 = arith.addf %260, %262 : vector<4x32xf32>
    %264 = arith.addf %263, %255 : vector<4x32xf32>
    %c0_72 = arith.constant 0 : index
    %c0_73 = arith.constant 0 : index
    %265 = vector.load %arg2[%c0_72, %c0_73] : memref<4x32xf32, #tpu.memory_space<vmem>>, vector<4x32xf32>
    tpu.vector_store %arg2[%c0_72, %c0_73], %264 {strides = array<i32>} : memref<4x32xf32, #tpu.memory_space<vmem>>, vector<4x32xf32>,
    return
  }
}

</mosaic_0001>

<llo_original>
// kernel: tpu_custom_call.1
$region0: #{tpu_custom_call.1}
  #allocation0 [shape = 'u32[]', space=smem, size = 0x4, offset = 0x4, fixed_abs, tag = 'smem constant byte address 0x4 - core index']
  #allocation1 [shape = 'u32[144,128]{1,0:T(1,128)}', space=vmem, size = 0x12000, scoped, tag = 'internal scratch']
  %s0 = inlined_call_operand.vmem [shape: f32[40,32], index: 0, kind: input, shape index: {}]
  %s1 = inlined_call_operand.vmem [shape: f32[424,32], index: 1, kind: input, shape index: {}]
  %s2 = inlined_call_operand.hbm [shape: f32[4,32], index: 2, kind: output, shape index: {}]
  %s3 = sld [smem:[#allocation0]]
  $region18: #{tpu_custom_call.1} parent=0
    _
  %s5 = ssub.s32 1, %s3
  %s6 = scalar_select 0, %s5, %s3
  $region1: #{tpu_custom_call.1} parent=0
    #allocation2 [shape = 'u8[2048]{0}', space=vmem, size = 0x800, scoped, tag = 'output window, operand 0, single buffered']
    #allocation3 [shape = 's32[1]{0}', space=sflag, size = 0x4, scoped, tag = 'scoped memory for tpu_custom_call.1']
    %7 = vsyncpa [#allocation3], 0
    // Predicated region
    $region2: #{tpu_custom_call.1} parent=1 // pred_check
      _
    $region3: #{tpu_custom_call.1} parent=1 // pred_check_branch
      %9 = sbr.rel (0) target = $region5
    $region4: #{tpu_custom_call.1} parent=1 // pred_region
      _
    $region5: #{tpu_custom_call.1} parent=1 // pred_fallthru
      _
    // Predicated region
    $region6: #{tpu_custom_call.1} parent=1 // pred_check
      _
    $region7: #{tpu_custom_call.1} parent=1 // pred_check_branch
      %11 = sbr.rel (0) target = $region9
    $region8: #{tpu_custom_call.1} parent=1 // pred_region
      _
    $region9: #{tpu_custom_call.1} parent=1 // pred_fallthru
      _
    %v12 = vld [vmem:[%s1 + $0x178] sm:$0xff]
    %v13 = vld [vmem:[%s1 + $0x168] sm:$0xff]
    %v14 = vld [vmem:[%s1 + $0x170] sm:$0xff]
    %v15 = vld [vmem:[%s0 + $0x20] sm:$0xff]
    %v16 = vlaneseq
    %v17 = vshrl.u32 %v16, 7
    %v18 = vsub.s32 0, %v17
    %v19 = vrot.slane %v12, %v18
    %v20 = vmul.f32 %v15, %v19
    %v21 = vlaneseq
    %v22 = vshrl.u32 %v21, 7
    %v23 = vsub.s32 1, %v22
    %v24 = vrot.slane %v12, %v23
    %v25 = vadd.f32 %v20, %v24
    %v26 = vand.u32 2147483647, %v25
    %vm27 = vcmp.le.f32.partialorder %v26, 0.7853982
    %vm28 = vcmp.lt.s32.totalorder %v25, 0
    %v29 = vand.u32 %v25, 2139095040
    %v30 = vshrl.u32 %v29, 23
    %v31 = vsub.s32 %v30, 127
    %v32 = vand.u32 2147483647, %v25
    %v33 = vand.u32 %v32, 8388607
    %v34 = vor.u32 %v33, 8388608
    %v35 = vsub.s32 0, %v34
    %v36 = vadd.s32 %v31, 1
    %vm37 = vcmp.gt.s32.totalorder %v36, 0
    %v38 = vsel %vm37, %v36, 0
    %v39 = vshrl.u32 %v38, 5
    %v40 = vand.u32 %v38, 31
    %v41 = vsub.s32 32, %v40
    %v42 = vshrl.u32 683565275, %v41
    %v43 = vshll.u32 683565275, %v40
    %v44 = vshrl.u32 2475754826, %v41
    %v45 = vor.u32 %v43, %v44
    %v46 = vshll.u32 2475754826, %v40
    %v47 = vshrl.u32 2131351028, %v41
    %v48 = vor.u32 %v46, %v47
    %v49 = vshll.u32 2131351028, %v40
    %v50 = vshrl.u32 2102212464, %v41
    %v51 = vor.u32 %v49, %v50
    %v52 = vshll.u32 2102212464, %v40
    %v53 = vshrl.u32 920167782, %v41
    %v54 = vor.u32 %v52, %v53
    %v55 = vshll.u32 920167782, %v40
    %v56 = vshrl.u32 1326507024, %v41
    %v57 = vor.u32 %v55, %v56
    %vm58 = vcmp.lt.s32.totalorder %v39, 1
    %vm59 = vcmp.lt.s32.totalorder %v39, 2
    %vm60 = vcmp.lt.s32.totalorder %v39, 3
    %vm61 = vcmp.lt.s32.totalorder %v39, 4
    %v62 = vsel %vm58, %v42, %v45
    %v63 = vsel %vm61, %v51, 2102212464
    %v64 = vsel %vm60, %v48, %v63
    %v65 = vsel %vm59, %v62, %v64
    %v66 = vsel %vm58, %v45, %v48
    %v67 = vsel %vm61, %v54, 920167782
    %v68 = vsel %vm60, %v51, %v67
    %v69 = vsel %vm59, %v66, %v68
    %v70 = vsel %vm58, %v48, %v51
    %v71 = vsel %vm61, %v57, 1326507024
    %v72 = vsel %vm60, %v54, %v71
    %v73 = vsel %vm59, %v70, %v72
    %v74 = vshll.u32 %v34, 8
    %v75 = vmul.u32.u64.compose %v74, %v73
    %v76 = vextract.low.u32 %v75
    %v77 = vextract.high.u32 %v75
    %v78 = vmul.u32.u64.compose %v74, %v69
    %v79 = vextract.low.u32 %v78
    %v80 = vextract.high.u32 %v78
    %v81 = vmul.u32 %v74, %v65
    %v82 = vadd.s32 %v77, %v79
    %vm83 = vc.u32 %v77, %v79
    %v84 = vadd.s32 %v80, 1
    %v85 = vsel %vm83, %v84, %v80
    %v86 = vadd.s32 %v81, %v85
    %v87 = vadd.s32 %v86, 536870912
    %v88 = vshrl.u32 %v87, 30
    %v89 = vshll.u32 %v88, 30
    %v90 = vsub.s32 %v86, %v89
    %vm91 = vcmp.lt.s32.totalorder %v90, 0
    %v92 = vsub.s32 0, %v90
    %v93 = vsel %vm91, %v92, %v90
    %v94 = vclz %v93
    %v95 = vsub.s32 %v94, 2
    %vm96 = vcmp.gt.s32.totalorder 0, %v95
    %v97 = vsel %vm96, 0, %v95
    %v98 = vsub.s32 32, %v97
    %v99 = vshll.u32 %v90, %v97
    %v100 = vshrl.u32 %v82, %v98
    %v101 = vor.u32 %v99, %v100
    %v102 = vsub.s32 4294967266, %v97
    %v103 = vadd.s32 %v102, 127
    %v104 = vshll.u32 %v103, 23
    %v105 = vor.u32 4788187, %v104
    %v106 = vand.u32 2147483647, %v105
    %v108 = vcvt.s32.f32 %v101
    %v109 = vmul.f32 %v108, %v106
    %v110 = vxor.u32 %v109, 2147483648
    %v111 = vsel %vm28, %v110, %v109
    %v112 = vsub.s32 4, %v88
    %v113 = vsel %vm28, %v112, %v88
    %v114 = vsel %vm27, %v25, %v111
    %v115 = vsel %vm27, 0, %v113
    %v116 = vcosq.f32.pop %v114
    %v117 = vsinq.f32.pop %v114
    %vm118 = vweird.f32 %v25
    %v119 = vadd.s32 %v115, 3
    %v120 = vand.u32 %v119, 3
    %vm121 = vcmp.lt.s32.totalorder %v120, 2
    %vm122 = vcmp.eq.s32.totalorder %v120, 0
    %v123 = vxor.u32 %v117, 2147483648
    %v124 = vsel %vm122, %v116, %v123
    %vm125 = vcmp.eq.s32.totalorder %v120, 2
    %v126 = vxor.u32 %v116, 2147483648
    %v127 = vsel %vm125, %v126, %v117
    %v128 = vsel %vm121, %v124, %v127
    %v129 = vsel %vm118, nan, %v128
    %v130 = vld [vmem:[%s1] sm:$0xff]
    %v131 = vld [vmem:[%s1 + $0x8] sm:$0xff]
    %v132 = vld [vmem:[%s1 + $0x10] sm:$0xff]
    %v133 = vld [vmem:[%s1 + $0x18] sm:$0xff]
    %v134 = vlaneseq
    %v135 = vshrl.u32 %v134, 7
    %v136 = vsub.s32 6, %v135
    %v137 = vrot.slane %v13, %v136
    %vm138 = vcmask 261120
    %v140 = vsel %vm138, %v129, 0
    %142 = vmatprep.subr.mxu0 0.0
    %143 = vmatpush1.msra.mxu0 %v130
    %144 = vmatprep.subr.mxu0 0.0
    %145 = vmatpush1.msra.mxu0 %v131
    %146 = vmatprep.subr.mxu0 0.0
    %147 = vmatpush1.msra.mxu0 %v132
    %148 = vmatprep.subr.mxu0 0.0
    %149 = vmatpush1.msra.mxu0 %v133
    %150 = vmatprep.subr.mxu0 0.0
    %151 = vmatpush1.msra.mxu0 0.0
    %152 = vmatprep.subr.mxu0 0.0
    %153 = vmatpush1.msra.mxu0 0.0
    %154 = vmatprep.subr.mxu0 0.0
    %155 = vmatpush1.msra.mxu0 0.0
    %156 = vmatprep.subr.mxu0 0.0
    %157 = vmatpush1.msra.mxu0 0.0
    %158 = vmatprep.subr.mxu0 0.0
    %159 = vmatpush1.msra.mxu0 0.0
    %160 = vmatprep.subr.mxu0 0.0
    %161 = vmatpush1.msra.mxu0 0.0
    %162 = vmatprep.subr.mxu0 0.0
    %163 = vmatpush1.msra.mxu0 0.0
    %164 = vmatprep.subr.mxu0 0.0
    %165 = vmatpush1.msra.mxu0 0.0
    %166 = vmatprep.subr.mxu0 0.0
    %167 = vmatpush1.msra.mxu0 0.0
    %168 = vmatprep.subr.mxu0 0.0
    %169 = vmatpush1.msra.mxu0 0.0
    %170 = vmatprep.subr.mxu0 0.0
    %171 = vmatpush1.msra.mxu0 0.0
    %172 = vmatprep.subr.mxu0 0.0
    %173 = vmatpush1.msra.mxu0 0.0
    %174 = vmatprep.subr.mxu0 0.0
    %175 = vmatpush1.msra.mxu0 0.0
    %176 = vmatprep.subr.mxu0 0.0
    %177 = vmatpush1.msra.mxu0 0.0
    %178 = vmatprep.subr.mxu0 0.0
    %179 = vmatpush1.msra.mxu0 0.0
    %180 = vmatprep.subr.mxu0 0.0
    %181 = vmatpush1.msra.mxu0 0.0
    %182 = vmatprep.subr.mxu0 0.0
    %183 = vmatpush1.msra.mxu0 0.0
    %184 = vmatprep.subr.mxu0 0.0
    %185 = vmatpush1.msra.mxu0 0.0
    %186 = vmatprep.subr.mxu0 0.0
    %187 = vmatpush1.msra.mxu0 0.0
    %188 = vmatprep.subr.mxu0 0.0
    %189 = vmatpush1.msra.mxu0 0.0
    %190 = vmatprep.subr.mxu0 0.0
    %191 = vmatpush1.msra.mxu0 0.0
    %192 = vmatprep.subr.mxu0 0.0
    %193 = vmatpush1.msra.mxu0 0.0
    %194 = vmatprep.subr.mxu0 0.0
    %195 = vmatpush1.msra.mxu0 0.0
    %196 = vmatprep.subr.mxu0 0.0
    %197 = vmatpush1.msra.mxu0 0.0
    %198 = vmatprep.subr.mxu0 0.0
    %199 = vmatpush1.msra.mxu0 0.0
    %200 = vmatprep.subr.mxu0 0.0
    %201 = vmatpush1.msra.mxu0 0.0
    %202 = vmatprep.subr.mxu0 0.0
    %203 = vmatpush1.msra.mxu0 0.0
    %204 = vmatprep.subr.mxu0 0.0
    %205 = vmatpush1.msra.mxu0 0.0
    %206 = vmatprep.mubr.f32.mxu0 0.0
    %207 = vmatmul.mubr.f32.gmra.mrb[0].mxu0 %v140
    %v208 = vpop.f32.mrb[0].mxu0
    %v209 = vadd.f32 %v137, %v208
    %v210 = vpop.f32.mrb[0].mxu0
    %211 = vdwg.mxu0
    %v212 = vxor.u32 %v209, 2147483648
    %v213 = vmul.f32 %v212, 1.442695
    %v214 = vpow.pop %v213
    %v215 = vadd.f32 %v214, 1.0
    %v216 = vrcp.pop %v215
    %v217 = vmul.f32 1.0, %v216
    %v218 = vmul.f32 %v209, %v217
    %v219 = vld [vmem:[%s1 + $0x20] sm:$0xff]
    %v220 = vld [vmem:[%s1 + $0x28] sm:$0xff]
    %v221 = vld [vmem:[%s1 + $0x30] sm:$0xff]
    %v222 = vld [vmem:[%s1 + $0x38] sm:$0xff]
    %v223 = vlaneseq
    %v224 = vshrl.u32 %v223, 7
    %v225 = vsub.s32 7, %v224
    %v226 = vrot.slane %v13, %v225
    %v228 = vsel %vm138, %v218, 0
    %230 = vmatprep.subr.mxu0 0.0
    %231 = vmatpush1.msra.mxu0 %v219
    %232 = vmatprep.subr.mxu0 0.0
    %233 = vmatpush1.msra.mxu0 %v220
    %234 = vmatprep.subr.mxu0 0.0
    %235 = vmatpush1.msra.mxu0 %v221
    %236 = vmatprep.subr.mxu0 0.0
    %237 = vmatpush1.msra.mxu0 %v222
    %238 = vmatprep.subr.mxu0 0.0
    %239 = vmatpush1.msra.mxu0 0.0
    %240 = vmatprep.subr.mxu0 0.0
    %241 = vmatpush1.msra.mxu0 0.0
    %242 = vmatprep.subr.mxu0 0.0
    %243 = vmatpush1.msra.mxu0 0.0
    %244 = vmatprep.subr.mxu0 0.0
    %245 = vmatpush1.msra.mxu0 0.0
    %246 = vmatprep.subr.mxu0 0.0
    %247 = vmatpush1.msra.mxu0 0.0
    %248 = vmatprep.subr.mxu0 0.0
    %249 = vmatpush1.msra.mxu0 0.0
    %250 = vmatprep.subr.mxu0 0.0
    %251 = vmatpush1.msra.mxu0 0.0
    %252 = vmatprep.subr.mxu0 0.0
    %253 = vmatpush1.msra.mxu0 0.0
    %254 = vmatprep.subr.mxu0 0.0
    %255 = vmatpush1.msra.mxu0 0.0
    %256 = vmatprep.subr.mxu0 0.0
    %257 = vmatpush1.msra.mxu0 0.0
    %258 = vmatprep.subr.mxu0 0.0
    %259 = vmatpush1.msra.mxu0 0.0
    %260 = vmatprep.subr.mxu0 0.0
    %261 = vmatpush1.msra.mxu0 0.0
    %262 = vmatprep.subr.mxu0 0.0
    %263 = vmatpush1.msra.mxu0 0.0
    %264 = vmatprep.subr.mxu0 0.0
    %265 = vmatpush1.msra.mxu0 0.0
    %266 = vmatprep.subr.mxu0 0.0
    %267 = vmatpush1.msra.mxu0 0.0
    %268 = vmatprep.subr.mxu0 0.0
    %269 = vmatpush1.msra.mxu0 0.0
    %270 = vmatprep.subr.mxu0 0.0
    %271 = vmatpush1.msra.mxu0 0.0
    %272 = vmatprep.subr.mxu0 0.0
    %273 = vmatpush1.msra.mxu0 0.0
    %274 = vmatprep.subr.mxu0 0.0
    %275 = vmatpush1.msra.mxu0 0.0
    %276 = vmatprep.subr.mxu0 0.0
    %277 = vmatpush1.msra.mxu0 0.0
    %278 = vmatprep.subr.mxu0 0.0
    %279 = vmatpush1.msra.mxu0 0.0
    %280 = vmatprep.subr.mxu0 0.0
    %281 = vmatpush1.msra.mxu0 0.0
    %282 = vmatprep.subr.mxu0 0.0
    %283 = vmatpush1.msra.mxu0 0.0
    %284 = vmatprep.subr.mxu0 0.0
    %285 = vmatpush1.msra.mxu0 0.0
    %286 = vmatprep.subr.mxu0 0.0
    %287 = vmatpush1.msra.mxu0 0.0
    %288 = vmatprep.subr.mxu0 0.0
    %289 = vmatpush1.msra.mxu0 0.0
    %290 = vmatprep.subr.mxu0 0.0
    %291 = vmatpush1.msra.mxu0 0.0
    %292 = vmatprep.subr.mxu0 0.0
    %293 = vmatpush1.msra.mxu0 0.0
    %294 = vmatprep.mubr.f32.mxu0 0.0
    %295 = vmatmul.mubr.f32.gmra.mrb[0].mxu0 %v228
    %v296 = vpop.f32.mrb[0].mxu0
    %v297 = vadd.f32 %v226, %v296
    %v298 = vpop.f32.mrb[0].mxu0
    %299 = vdwg.mxu0
    %v300 = vxor.u32 %v297, 2147483648
    %v301 = vmul.f32 %v300, 1.442695
    %v302 = vpow.pop %v301
    %v303 = vadd.f32 %v302, 1.0
    %v304 = vrcp.pop %v303
    %v305 = vmul.f32 1.0, %v304
    %v306 = vmul.f32 %v297, %v305
    %v307 = vld [vmem:[%s1 + $0x40] sm:$0xff]
    %v308 = vld [vmem:[%s1 + $0x48] sm:$0xff]
    %v309 = vld [vmem:[%s1 + $0x50] sm:$0xff]
    %v310 = vld [vmem:[%s1 + $0x58] sm:$0xff]
    %v311 = vlaneseq
    %v312 = vshrl.u32 %v311, 7
    %v313 = vsub.s32 0, %v312
    %v314 = vrot.slane %v14, %v313
    %v316 = vsel %vm138, %v306, 0
    %318 = vmatprep.subr.mxu0 0.0
    %319 = vmatpush1.msra.mxu0 %v307
    %320 = vmatprep.subr.mxu0 0.0
    %321 = vmatpush1.msra.mxu0 %v308
    %322 = vmatprep.subr.mxu0 0.0
    %323 = vmatpush1.msra.mxu0 %v309
    %324 = vmatprep.subr.mxu0 0.0
    %325 = vmatpush1.msra.mxu0 %v310
    %326 = vmatprep.subr.mxu0 0.0
    %327 = vmatpush1.msra.mxu0 0.0
    %328 = vmatprep.subr.mxu0 0.0
    %329 = vmatpush1.msra.mxu0 0.0
    %330 = vmatprep.subr.mxu0 0.0
    %331 = vmatpush1.msra.mxu0 0.0
    %332 = vmatprep.subr.mxu0 0.0
    %333 = vmatpush1.msra.mxu0 0.0
    %334 = vmatprep.subr.mxu0 0.0
    %335 = vmatpush1.msra.mxu0 0.0
    %336 = vmatprep.subr.mxu0 0.0
    %337 = vmatpush1.msra.mxu0 0.0
    %338 = vmatprep.subr.mxu0 0.0
    %339 = vmatpush1.msra.mxu0 0.0
    %340 = vmatprep.subr.mxu0 0.0
    %341 = vmatpush1.msra.mxu0 0.0
    %342 = vmatprep.subr.mxu0 0.0
    %343 = vmatpush1.msra.mxu0 0.0
    %344 = vmatprep.subr.mxu0 0.0
    %345 = vmatpush1.msra.mxu0 0.0
    %346 = vmatprep.subr.mxu0 0.0
    %347 = vmatpush1.msra.mxu0 0.0
    %348 = vmatprep.subr.mxu0 0.0
    %349 = vmatpush1.msra.mxu0 0.0
    %350 = vmatprep.subr.mxu0 0.0
    %351 = vmatpush1.msra.mxu0 0.0
    %352 = vmatprep.subr.mxu0 0.0
    %353 = vmatpush1.msra.mxu0 0.0
    %354 = vmatprep.subr.mxu0 0.0
    %355 = vmatpush1.msra.mxu0 0.0
    %356 = vmatprep.subr.mxu0 0.0
    %357 = vmatpush1.msra.mxu0 0.0
    %358 = vmatprep.subr.mxu0 0.0
    %359 = vmatpush1.msra.mxu0 0.0
    %360 = vmatprep.subr.mxu0 0.0
    %361 = vmatpush1.msra.mxu0 0.0
    %362 = vmatprep.subr.mxu0 0.0
    %363 = vmatpush1.msra.mxu0 0.0
    %364 = vmatprep.subr.mxu0 0.0
    %365 = vmatpush1.msra.mxu0 0.0
    %366 = vmatprep.subr.mxu0 0.0
    %367 = vmatpush1.msra.mxu0 0.0
    %368 = vmatprep.subr.mxu0 0.0
    %369 = vmatpush1.msra.mxu0 0.0
    %370 = vmatprep.subr.mxu0 0.0
    %371 = vmatpush1.msra.mxu0 0.0
    %372 = vmatprep.subr.mxu0 0.0
    %373 = vmatpush1.msra.mxu0 0.0
    %374 = vmatprep.subr.mxu0 0.0
    %375 = vmatpush1.msra.mxu0 0.0
    %376 = vmatprep.subr.mxu0 0.0
    %377 = vmatpush1.msra.mxu0 0.0
    %378 = vmatprep.subr.mxu0 0.0
    %379 = vmatpush1.msra.mxu0 0.0
    %380 = vmatprep.subr.mxu0 0.0
    %381 = vmatpush1.msra.mxu0 0.0
    %382 = vmatprep.mubr.f32.mxu0 0.0
    %383 = vmatmul.mubr.f32.gmra.mrb[0].mxu0 %v316
    %v384 = vpop.f32.mrb[0].mxu0
    %v385 = vadd.f32 %v314, %v384
    %v386 = vpop.f32.mrb[0].mxu0
    %387 = vdwg.mxu0
    %v388 = vld [vmem:[%s0] sm:$0xff]
    %v389 = vld [vmem:[%s0 + $0x8] sm:$0xff]
    %v390 = vld [vmem:[%s0 + $0x10] sm:$0xff]
    %v391 = vld [vmem:[%s0 + $0x18] sm:$0xff]
    %v392 = vld [vmem:[%s1 + $0x60] sm:$0xff]
    %v393 = vld [vmem:[%s1 + $0x68] sm:$0xff]
    %v394 = vld [vmem:[%s1 + $0x70] sm:$0xff]
    %v395 = vld [vmem:[%s1 + $0x78] sm:$0xff]
    %v396 = vld [vmem:[%s1 + $0x150] sm:$0xff]
    %v397 = vld [vmem:[%s1 + $0x158] sm:$0xff]
    %v398 = vlaneseq
    %v399 = vshrl.u32 %v398, 7
    %v400 = vsub.s32 0, %v399
    %v401 = vrot.slane %v385, %v400
    %v402 = vadd.f32 %v396, %v401
    %v403 = vadd.f32 %v397, %v401
    %v404 = vlaneseq
    %v405 = vshrl.u32 %v404, 7
    %v406 = vsub.s32 1, %v405
    %v407 = vrot.slane %v385, %v406
    %v408 = vadd.f32 %v396, %v407
    %v409 = vadd.f32 %v397, %v407
    %v411 = vsel %vm138, %v388, 0
    %v414 = vsel %vm138, %v389, 0
    %v417 = vsel %vm138, %v390, 0
    %v420 = vsel %vm138, %v391, 0
    %422 = vmatprep.subr.mxu0 0.0
    %423 = vmatpush1.msra.mxu0 %v392
    %424 = vmatprep.subr.mxu0 0.0
    %425 = vmatpush1.msra.mxu0 %v393
    %426 = vmatprep.subr.mxu0 0.0
    %427 = vmatpush1.msra.mxu0 %v394
    %428 = vmatprep.subr.mxu0 0.0
    %429 = vmatpush1.msra.mxu0 %v395
    %430 = vmatprep.subr.mxu0 0.0
    %431 = vmatpush1.msra.mxu0 0.0
    %432 = vmatprep.subr.mxu0 0.0
    %433 = vmatpush1.msra.mxu0 0.0
    %434 = vmatprep.subr.mxu0 0.0
    %435 = vmatpush1.msra.mxu0 0.0
    %436 = vmatprep.subr.mxu0 0.0
    %437 = vmatpush1.msra.mxu0 0.0
    %438 = vmatprep.subr.mxu0 0.0
    %439 = vmatpush1.msra.mxu0 0.0
    %440 = vmatprep.subr.mxu0 0.0
    %441 = vmatpush1.msra.mxu0 0.0
    %442 = vmatprep.subr.mxu0 0.0
    %443 = vmatpush1.msra.mxu0 0.0
    %444 = vmatprep.subr.mxu0 0.0
    %445 = vmatpush1.msra.mxu0 0.0
    %446 = vmatprep.subr.mxu0 0.0
    %447 = vmatpush1.msra.mxu0 0.0
    %448 = vmatprep.subr.mxu0 0.0
    %449 = vmatpush1.msra.mxu0 0.0
    %450 = vmatprep.subr.mxu0 0.0
    %451 = vmatpush1.msra.mxu0 0.0
    %452 = vmatprep.subr.mxu0 0.0
    %453 = vmatpush1.msra.mxu0 0.0
    %454 = vmatprep.subr.mxu0 0.0
    %455 = vmatpush1.msra.mxu0 0.0
    %456 = vmatprep.subr.mxu0 0.0
    %457 = vmatpush1.msra.mxu0 0.0
    %458 = vmatprep.subr.mxu0 0.0
    %459 = vmatpush1.msra.mxu0 0.0
    %460 = vmatprep.subr.mxu0 0.0
    %461 = vmatpush1.msra.mxu0 0.0
    %462 = vmatprep.subr.mxu0 0.0
    %463 = vmatpush1.msra.mxu0 0.0
    %464 = vmatprep.subr.mxu0 0.0
    %465 = vmatpush1.msra.mxu0 0.0
    %466 = vmatprep.subr.mxu0 0.0
    %467 = vmatpush1.msra.mxu0 0.0
    %468 = vmatprep.subr.mxu0 0.0
    %469 = vmatpush1.msra.mxu0 0.0
    %470 = vmatprep.subr.mxu0 0.0
    %471 = vmatpush1.msra.mxu0 0.0
    %472 = vmatprep.subr.mxu0 0.0
    %473 = vmatpush1.msra.mxu0 0.0
    %474 = vmatprep.subr.mxu0 0.0
    %475 = vmatpush1.msra.mxu0 0.0
    %476 = vmatprep.subr.mxu0 0.0
    %477 = vmatpush1.msra.mxu0 0.0
    %478 = vmatprep.subr.mxu0 0.0
    %479 = vmatpush1.msra.mxu0 0.0
    %480 = vmatprep.subr.mxu0 0.0
    %481 = vmatpush1.msra.mxu0 0.0
    %482 = vmatprep.subr.mxu0 0.0
    %483 = vmatpush1.msra.mxu0 0.0
    %484 = vmatprep.subr.mxu0 0.0
    %485 = vmatpush1.msra.mxu0 0.0
    %486 = vmatprep.mubr.f32.mxu0 0.0
    %487 = vmatmul.mubr.f32.gmra.mrb[0].mxu0 %v411
    %v488 = vpop.f32.mrb[0].mxu0
    %v489 = vadd.f32 %v402, %v488
    %v490 = vpop.f32.mrb[0].mxu0
    %491 = vmatprep.mubr.f32.mxu0 0.0
    %492 = vmatmul.mubr.f32.gmra.mrb[0].mxu0 %v414
    %v493 = vpop.f32.mrb[0].mxu0
    %v494 = vadd.f32 %v403, %v493
    %v495 = vpop.f32.mrb[0].mxu0
    %496 = vmatprep.mubr.f32.mxu0 0.0
    %497 = vmatmul.mubr.f32.gmra.mrb[0].mxu0 %v417
    %v498 = vpop.f32.mrb[0].mxu0
    %v499 = vadd.f32 %v408, %v498
    %v500 = vpop.f32.mrb[0].mxu0
    %501 = vmatprep.mubr.f32.mxu0 0.0
    %502 = vmatmul.mubr.f32.gmra.mrb[0].mxu0 %v420
    %v503 = vpop.f32.mrb[0].mxu0
    %v504 = vadd.f32 %v409, %v503
    %v505 = vpop.f32.mrb[0].mxu0
    %506 = vdwg.mxu0
    %v507 = vld [vmem:[%s1 + $0x80] sm:$0xff]
    %v508 = vld [vmem:[%s1 + $0x88] sm:$0xff]
    %v509 = vld [vmem:[%s1 + $0x90] sm:$0xff]
    %v510 = vld [vmem:[%s1 + $0x98] sm:$0xff]
    %v511 = vlaneseq
    %v512 = vshrl.u32 %v511, 7
    %v513 = vsub.s32 0, %v512
    %v514 = vrot.slane %v13, %v513
    %v516 = vsel %vm138, %v489, 0
    %v519 = vsel %vm138, %v494, 0
    %v522 = vsel %vm138, %v499, 0
    %v525 = vsel %vm138, %v504, 0
    %527 = vmatprep.subr.mxu0 0.0
    %528 = vmatpush1.msra.mxu0 %v507
    %529 = vmatprep.subr.mxu0 0.0
    %530 = vmatpush1.msra.mxu0 %v508
    %531 = vmatprep.subr.mxu0 0.0
    %532 = vmatpush1.msra.mxu0 %v509
    %533 = vmatprep.subr.mxu0 0.0
    %534 = vmatpush1.msra.mxu0 %v510
    %535 = vmatprep.subr.mxu0 0.0
    %536 = vmatpush1.msra.mxu0 0.0
    %537 = vmatprep.subr.mxu0 0.0
    %538 = vmatpush1.msra.mxu0 0.0
    %539 = vmatprep.subr.mxu0 0.0
    %540 = vmatpush1.msra.mxu0 0.0
    %541 = vmatprep.subr.mxu0 0.0
    %542 = vmatpush1.msra.mxu0 0.0
    %543 = vmatprep.subr.mxu0 0.0
    %544 = vmatpush1.msra.mxu0 0.0
    %545 = vmatprep.subr.mxu0 0.0
    %546 = vmatpush1.msra.mxu0 0.0
    %547 = vmatprep.subr.mxu0 0.0
    %548 = vmatpush1.msra.mxu0 0.0
    %549 = vmatprep.subr.mxu0 0.0
    %550 = vmatpush1.msra.mxu0 0.0
    %551 = vmatprep.subr.mxu0 0.0
    %552 = vmatpush1.msra.mxu0 0.0
    %553 = vmatprep.subr.mxu0 0.0
    %554 = vmatpush1.msra.mxu0 0.0
    %555 = vmatprep.subr.mxu0 0.0
    %556 = vmatpush1.msra.mxu0 0.0
    %557 = vmatprep.subr.mxu0 0.0
    %558 = vmatpush1.msra.mxu0 0.0
    %559 = vmatprep.subr.mxu0 0.0
    %560 = vmatpush1.msra.mxu0 0.0
    %561 = vmatprep.subr.mxu0 0.0
    %562 = vmatpush1.msra.mxu0 0.0
    %563 = vmatprep.subr.mxu0 0.0
    %564 = vmatpush1.msra.mxu0 0.0
    %565 = vmatprep.subr.mxu0 0.0
    %566 = vmatpush1.msra.mxu0 0.0
    %567 = vmatprep.subr.mxu0 0.0
    %568 = vmatpush1.msra.mxu0 0.0
    %569 = vmatprep.subr.mxu0 0.0
    %570 = vmatpush1.msra.mxu0 0.0
    %571 = vmatprep.subr.mxu0 0.0
    %572 = vmatpush1.msra.mxu0 0.0
    %573 = vmatprep.subr.mxu0 0.0
    %574 = vmatpush1.msra.mxu0 0.0
    %575 = vmatprep.subr.mxu0 0.0
    %576 = vmatpush1.msra.mxu0 0.0
    %577 = vmatprep.subr.mxu0 0.0
    %578 = vmatpush1.msra.mxu0 0.0
    %579 = vmatprep.subr.mxu0 0.0
    %580 = vmatpush1.msra.mxu0 0.0
    %581 = vmatprep.subr.mxu0 0.0
    %582 = vmatpush1.msra.mxu0 0.0
    %583 = vmatprep.subr.mxu0 0.0
    %584 = vmatpush1.msra.mxu0 0.0
    %585 = vmatprep.subr.mxu0 0.0
    %586 = vmatpush1.msra.mxu0 0.0
    %587 = vmatprep.subr.mxu0 0.0
    %588 = vmatpush1.msra.mxu0 0.0
    %589 = vmatprep.subr.mxu0 0.0
    %590 = vmatpush1.msra.mxu0 0.0
    %591 = vmatprep.mubr.f32.mxu0 0.0
    %592 = vmatmul.mubr.f32.gmra.mrb[0].mxu0 %v516
    %v593 = vpop.f32.mrb[0].mxu0
    %v594 = vadd.f32 %v514, %v593
    %v595 = vpop.f32.mrb[0].mxu0
    %596 = vmatprep.mubr.f32.mxu0 0.0
    %597 = vmatmul.mubr.f32.gmra.mrb[0].mxu0 %v519
    %v598 = vpop.f32.mrb[0].mxu0
    %v599 = vadd.f32 %v514, %v598
    %v600 = vpop.f32.mrb[0].mxu0
    %601 = vmatprep.mubr.f32.mxu0 0.0
    %602 = vmatmul.mubr.f32.gmra.mrb[0].mxu0 %v522
    %v603 = vpop.f32.mrb[0].mxu0
    %v604 = vadd.f32 %v514, %v603
    %v605 = vpop.f32.mrb[0].mxu0
    %606 = vmatprep.mubr.f32.mxu0 0.0
    %607 = vmatmul.mubr.f32.gmra.mrb[0].mxu0 %v525
    %v608 = vpop.f32.mrb[0].mxu0
    %v609 = vadd.f32 %v514, %v608
    %v610 = vpop.f32.mrb[0].mxu0
    %611 = vdwg.mxu0
    %v612 = vld [vmem:[%s1 + $0xa0] sm:$0xff]
    %v613 = vld [vmem:[%s1 + $0xa8] sm:$0xff]
    %v614 = vld [vmem:[%s1 + $0xb0] sm:$0xff]
    %v615 = vld [vmem:[%s1 + $0xb8] sm:$0xff]
    %v616 = vlaneseq
    %v617 = vshrl.u32 %v616, 7
    %v618 = vsub.s32 1, %v617
    %v619 = vrot.slane %v13, %v618
    %620 = vmatprep.subr.mxu0 0.0
    %621 = vmatpush1.msra.mxu0 %v612
    %622 = vmatprep.subr.mxu0 0.0
    %623 = vmatpush1.msra.mxu0 %v613
    %624 = vmatprep.subr.mxu0 0.0
    %625 = vmatpush1.msra.mxu0 %v614
    %626 = vmatprep.subr.mxu0 0.0
    %627 = vmatpush1.msra.mxu0 %v615
    %628 = vmatprep.subr.mxu0 0.0
    %629 = vmatpush1.msra.mxu0 0.0
    %630 = vmatprep.subr.mxu0 0.0
    %631 = vmatpush1.msra.mxu0 0.0
    %632 = vmatprep.subr.mxu0 0.0
    %633 = vmatpush1.msra.mxu0 0.0
    %634 = vmatprep.subr.mxu0 0.0
    %635 = vmatpush1.msra.mxu0 0.0
    %636 = vmatprep.subr.mxu0 0.0
    %637 = vmatpush1.msra.mxu0 0.0
    %638 = vmatprep.subr.mxu0 0.0
    %639 = vmatpush1.msra.mxu0 0.0
    %640 = vmatprep.subr.mxu0 0.0
    %641 = vmatpush1.msra.mxu0 0.0
    %642 = vmatprep.subr.mxu0 0.0
    %643 = vmatpush1.msra.mxu0 0.0
    %644 = vmatprep.subr.mxu0 0.0
    %645 = vmatpush1.msra.mxu0 0.0
    %646 = vmatprep.subr.mxu0 0.0
    %647 = vmatpush1.msra.mxu0 0.0
    %648 = vmatprep.subr.mxu0 0.0
    %649 = vmatpush1.msra.mxu0 0.0
    %650 = vmatprep.subr.mxu0 0.0
    %651 = vmatpush1.msra.mxu0 0.0
    %652 = vmatprep.subr.mxu0 0.0
    %653 = vmatpush1.msra.mxu0 0.0
    %654 = vmatprep.subr.mxu0 0.0
    %655 = vmatpush1.msra.mxu0 0.0
    %656 = vmatprep.subr.mxu0 0.0
    %657 = vmatpush1.msra.mxu0 0.0
    %658 = vmatprep.subr.mxu0 0.0
    %659 = vmatpush1.msra.mxu0 0.0
    %660 = vmatprep.subr.mxu0 0.0
    %661 = vmatpush1.msra.mxu0 0.0
    %662 = vmatprep.subr.mxu0 0.0
    %663 = vmatpush1.msra.mxu0 0.0
    %664 = vmatprep.subr.mxu0 0.0
    %665 = vmatpush1.msra.mxu0 0.0
    %666 = vmatprep.subr.mxu0 0.0
    %667 = vmatpush1.msra.mxu0 0.0
    %668 = vmatprep.subr.mxu0 0.0
    %669 = vmatpush1.msra.mxu0 0.0
    %670 = vmatprep.subr.mxu0 0.0
    %671 = vmatpush1.msra.mxu0 0.0
    %672 = vmatprep.subr.mxu0 0.0
    %673 = vmatpush1.msra.mxu0 0.0
    %674 = vmatprep.subr.mxu0 0.0
    %675 = vmatpush1.msra.mxu0 0.0
    %676 = vmatprep.subr.mxu0 0.0
    %677 = vmatpush1.msra.mxu0 0.0
    %678 = vmatprep.subr.mxu0 0.0
    %679 = vmatpush1.msra.mxu0 0.0
    %680 = vmatprep.subr.mxu0 0.0
    %681 = vmatpush1.msra.mxu0 0.0
    %682 = vmatprep.subr.mxu0 0.0
    %683 = vmatpush1.msra.mxu0 0.0
    %684 = vmatprep.mubr.f32.mxu0 0.0
    %685 = vmatmul.mubr.f32.gmra.mrb[0].mxu0 %v516
    %v686 = vpop.f32.mrb[0].mxu0
    %v687 = vadd.f32 %v619, %v686
    %v688 = vpop.f32.mrb[0].mxu0
    %689 = vmatprep.mubr.f32.mxu0 0.0
    %690 = vmatmul.mubr.f32.gmra.mrb[0].mxu0 %v519
    %v691 = vpop.f32.mrb[0].mxu0
    %v692 = vadd.f32 %v619, %v691
    %v693 = vpop.f32.mrb[0].mxu0
    %694 = vmatprep.mubr.f32.mxu0 0.0
    %695 = vmatmul.mubr.f32.gmra.mrb[0].mxu0 %v522
    %v696 = vpop.f32.mrb[0].mxu0
    %v697 = vadd.f32 %v619, %v696
    %v698 = vpop.f32.mrb[0].mxu0
    %699 = vmatprep.mubr.f32.mxu0 0.0
    %700 = vmatmul.mubr.f32.gmra.mrb[0].mxu0 %v525
    %v701 = vpop.f32.mrb[0].mxu0
    %v702 = vadd.f32 %v619, %v701
    %v703 = vpop.f32.mrb[0].mxu0
    %704 = vdwg.mxu0
    %v705 = vld [vmem:[%s1 + $0xc0] sm:$0xff]
    %v706 = vld [vmem:[%s1 + $0xc8] sm:$0xff]
    %v707 = vld [vmem:[%s1 + $0xd0] sm:$0xff]
    %v708 = vld [vmem:[%s1 + $0xd8] sm:$0xff]
    %v709 = vlaneseq
    %v710 = vshrl.u32 %v709, 7
    %v711 = vsub.s32 2, %v710
    %v712 = vrot.slane %v13, %v711
    %713 = vmatprep.subr.mxu0 0.0
    %714 = vmatpush1.msra.mxu0 %v705
    %715 = vmatprep.subr.mxu0 0.0
    %716 = vmatpush1.msra.mxu0 %v706
    %717 = vmatprep.subr.mxu0 0.0
    %718 = vmatpush1.msra.mxu0 %v707
    %719 = vmatprep.subr.mxu0 0.0
    %720 = vmatpush1.msra.mxu0 %v708
    %721 = vmatprep.subr.mxu0 0.0
    %722 = vmatpush1.msra.mxu0 0.0
    %723 = vmatprep.subr.mxu0 0.0
    %724 = vmatpush1.msra.mxu0 0.0
    %725 = vmatprep.subr.mxu0 0.0
    %726 = vmatpush1.msra.mxu0 0.0
    %727 = vmatprep.subr.mxu0 0.0
    %728 = vmatpush1.msra.mxu0 0.0
    %729 = vmatprep.subr.mxu0 0.0
    %730 = vmatpush1.msra.mxu0 0.0
    %731 = vmatprep.subr.mxu0 0.0
    %732 = vmatpush1.msra.mxu0 0.0
    %733 = vmatprep.subr.mxu0 0.0
    %734 = vmatpush1.msra.mxu0 0.0
    %735 = vmatprep.subr.mxu0 0.0
    %736 = vmatpush1.msra.mxu0 0.0
    %737 = vmatprep.subr.mxu0 0.0
    %738 = vmatpush1.msra.mxu0 0.0
    %739 = vmatprep.subr.mxu0 0.0
    %740 = vmatpush1.msra.mxu0 0.0
    %741 = vmatprep.subr.mxu0 0.0
    %742 = vmatpush1.msra.mxu0 0.0
    %743 = vmatprep.subr.mxu0 0.0
    %744 = vmatpush1.msra.mxu0 0.0
    %745 = vmatprep.subr.mxu0 0.0
    %746 = vmatpush1.msra.mxu0 0.0
    %747 = vmatprep.subr.mxu0 0.0
    %748 = vmatpush1.msra.mxu0 0.0
    %749 = vmatprep.subr.mxu0 0.0
    %750 = vmatpush1.msra.mxu0 0.0
    %751 = vmatprep.subr.mxu0 0.0
    %752 = vmatpush1.msra.mxu0 0.0
    %753 = vmatprep.subr.mxu0 0.0
    %754 = vmatpush1.msra.mxu0 0.0
    %755 = vmatprep.subr.mxu0 0.0
    %756 = vmatpush1.msra.mxu0 0.0
    %757 = vmatprep.subr.mxu0 0.0
    %758 = vmatpush1.msra.mxu0 0.0
    %759 = vmatprep.subr.mxu0 0.0
    %760 = vmatpush1.msra.mxu0 0.0
    %761 = vmatprep.subr.mxu0 0.0
    %762 = vmatpush1.msra.mxu0 0.0
    %763 = vmatprep.subr.mxu0 0.0
    %764 = vmatpush1.msra.mxu0 0.0
    %765 = vmatprep.subr.mxu0 0.0
    %766 = vmatpush1.msra.mxu0 0.0
    %767 = vmatprep.subr.mxu0 0.0
    %768 = vmatpush1.msra.mxu0 0.0
    %769 = vmatprep.subr.mxu0 0.0
    %770 = vmatpush1.msra.mxu0 0.0
    %771 = vmatprep.subr.mxu0 0.0
    %772 = vmatpush1.msra.mxu0 0.0
    %773 = vmatprep.subr.mxu0 0.0
    %774 = vmatpush1.msra.mxu0 0.0
    %775 = vmatprep.subr.mxu0 0.0
    %776 = vmatpush1.msra.mxu0 0.0
    %777 = vmatprep.mubr.f32.mxu0 0.0
    %778 = vmatmul.mubr.f32.gmra.mrb[0].mxu0 %v516
    %v779 = vpop.f32.mrb[0].mxu0
    %v780 = vadd.f32 %v712, %v779
    %v781 = vpop.f32.mrb[0].mxu0
    %782 = vmatprep.mubr.f32.mxu0 0.0
    %783 = vmatmul.mubr.f32.gmra.mrb[0].mxu0 %v519
    %v784 = vpop.f32.mrb[0].mxu0
    %v785 = vadd.f32 %v712, %v784
    %v786 = vpop.f32.mrb[0].mxu0
    %787 = vmatprep.mubr.f32.mxu0 0.0
    %788 = vmatmul.mubr.f32.gmra.mrb[0].mxu0 %v522
    %v789 = vpop.f32.mrb[0].mxu0
    %v790 = vadd.f32 %v712, %v789
    %v791 = vpop.f32.mrb[0].mxu0
    %792 = vmatprep.mubr.f32.mxu0 0.0
    %793 = vmatmul.mubr.f32.gmra.mrb[0].mxu0 %v525
    %v794 = vpop.f32.mrb[0].mxu0
    %v795 = vadd.f32 %v712, %v794
    %v796 = vpop.f32.mrb[0].mxu0
    %797 = vdwg.mxu0
    %v798 = vld [vmem:[%s1 + $0x188] sm:$0xff]
    %v799 = vld [vmem:[%s1 + $0x190] sm:$0xff]
    %v800 = vld [vmem:[%s1 + $0x198] sm:$0xff]
    %v801 = vld [vmem:[%s1 + $0x1a0] sm:$0xff]
    %v802 = vlaneseq
    %v803 = vshrl.u32 %v802, 7
    %v804 = vsub.s32 2, %v803
    %v805 = vrot.slane %v12, %v804
    %v806 = vmul.f32 %v594, %v805
    %v807 = vmul.f32 %v599, %v805
    %v808 = vmul.f32 %v604, %v805
    %v809 = vmul.f32 %v609, %v805
    %v811 = vsel %vm138, %v806, 0
    %v814 = vsel %vm138, %v807, 0
    %v817 = vsel %vm138, %v808, 0
    %v820 = vsel %vm138, %v809, 0
    %v823 = vsel %vm138, %v687, 0
    %v826 = vsel %vm138, %v692, 0
    %v829 = vsel %vm138, %v697, 0
    %v832 = vsel %vm138, %v702, 0
    %834 = vmatprep.subr.mxu0 0.0
    %835 = vmatpush1.xpose.msra.mxu0 %v823
    %836 = vmatprep.subr.mxu0 0.0
    %837 = vmatpush1.xpose.msra.mxu0 %v826
    %838 = vmatprep.subr.mxu0 0.0
    %839 = vmatpush1.xpose.msra.mxu0 %v829
    %840 = vmatprep.subr.mxu0 0.0
    %841 = vmatpush1.xpose.msra.mxu0 %v832
    %842 = vmatprep.subr.mxu0 0.0
    %843 = vmatpush1.xpose.msra.mxu0 0.0
    %844 = vmatprep.subr.mxu0 0.0
    %845 = vmatpush1.xpose.msra.mxu0 0.0
    %846 = vmatprep.subr.mxu0 0.0
    %847 = vmatpush1.xpose.msra.mxu0 0.0
    %848 = vmatprep.subr.mxu0 0.0
    %849 = vmatpush1.xpose.msra.mxu0 0.0
    %850 = vmatprep.subr.mxu0 0.0
    %851 = vmatpush1.xpose.msra.mxu0 0.0
    %852 = vmatprep.subr.mxu0 0.0
    %853 = vmatpush1.xpose.msra.mxu0 0.0
    %854 = vmatprep.subr.mxu0 0.0
    %855 = vmatpush1.xpose.msra.mxu0 0.0
    %856 = vmatprep.subr.mxu0 0.0
    %857 = vmatpush1.xpose.msra.mxu0 0.0
    %858 = vmatprep.subr.mxu0 0.0
    %859 = vmatpush1.xpose.msra.mxu0 0.0
    %860 = vmatprep.subr.mxu0 0.0
    %861 = vmatpush1.xpose.msra.mxu0 0.0
    %862 = vmatprep.subr.mxu0 0.0
    %863 = vmatpush1.xpose.msra.mxu0 0.0
    %864 = vmatprep.subr.mxu0 0.0
    %865 = vmatpush1.xpose.msra.mxu0 0.0
    %866 = vmatprep.subr.mxu0 0.0
    %867 = vmatpush1.xpose.msra.mxu0 0.0
    %868 = vmatprep.subr.mxu0 0.0
    %869 = vmatpush1.xpose.msra.mxu0 0.0
    %870 = vmatprep.subr.mxu0 0.0
    %871 = vmatpush1.xpose.msra.mxu0 0.0
    %872 = vmatprep.subr.mxu0 0.0
    %873 = vmatpush1.xpose.msra.mxu0 0.0
    %874 = vmatprep.subr.mxu0 0.0
    %875 = vmatpush1.xpose.msra.mxu0 0.0
    %876 = vmatprep.subr.mxu0 0.0
    %877 = vmatpush1.xpose.msra.mxu0 0.0
    %878 = vmatprep.subr.mxu0 0.0
    %879 = vmatpush1.xpose.msra.mxu0 0.0
    %880 = vmatprep.subr.mxu0 0.0
    %881 = vmatpush1.xpose.msra.mxu0 0.0
    %882 = vmatprep.subr.mxu0 0.0
    %883 = vmatpush1.xpose.msra.mxu0 0.0
    %884 = vmatprep.subr.mxu0 0.0
    %885 = vmatpush1.xpose.msra.mxu0 0.0
    %886 = vmatprep.subr.mxu0 0.0
    %887 = vmatpush1.xpose.msra.mxu0 0.0
    %888 = vmatprep.subr.mxu0 0.0
    %889 = vmatpush1.xpose.msra.mxu0 0.0
    %890 = vmatprep.subr.mxu0 0.0
    %891 = vmatpush1.xpose.msra.mxu0 0.0
    %892 = vmatprep.subr.mxu0 0.0
    %893 = vmatpush1.xpose.msra.mxu0 0.0
    %894 = vmatprep.subr.mxu0 0.0
    %895 = vmatpush1.xpose.msra.mxu0 0.0
    %896 = vmatprep.subr.mxu0 0.0
    %897 = vmatpush1.xpose.msra.mxu0 0.0
    %898 = vmatprep.mubr.f32.mxu0 0.0
    %899 = vmatmul.mubr.f32.gmra.mrb[0].mxu0 %v811
    %v900 = vpop.f32.mrb[0].mxu0
    %v901 = vadd.f32 0.0, %v900
    %v902 = vpop.f32.mrb[0].mxu0
    %903 = vmatprep.mubr.f32.mxu0 0.0
    %904 = vmatmul.mubr.f32.gmra.mrb[0].mxu0 %v814
    %v905 = vpop.f32.mrb[0].mxu0
    %v906 = vadd.f32 0.0, %v905
    %v907 = vpop.f32.mrb[0].mxu0
    %908 = vmatprep.mubr.f32.mxu0 0.0
    %909 = vmatmul.mubr.f32.gmra.mrb[0].mxu0 %v817
    %v910 = vpop.f32.mrb[0].mxu0
    %v911 = vadd.f32 0.0, %v910
    %v912 = vpop.f32.mrb[0].mxu0
    %913 = vmatprep.mubr.f32.mxu0 0.0
    %914 = vmatmul.mubr.f32.gmra.mrb[0].mxu0 %v820
    %v915 = vpop.f32.mrb[0].mxu0
    %v916 = vadd.f32 0.0, %v915
    %v917 = vpop.f32.mrb[0].mxu0
    %918 = vdwg.mxu0
    %v919 = vmul.f32 %v901, 0.35355338
    %v920 = vmul.f32 %v906, 0.35355338
    %v921 = vmul.f32 %v911, 0.35355338
    %v922 = vmul.f32 %v916, 0.35355338
    %v923 = vadd.f32 %v919, %v798
    %v924 = vadd.f32 %v920, %v799
    %v925 = vadd.f32 %v921, %v800
    %v926 = vadd.f32 %v922, %v801
    %v927 = vsel %vm138, %v923, -inf
    %928 = vmax.xlane.f32.xlu0 %v927
    %v929 = vpop.xlane.xlu0 %928
    %v930 = vsel %vm138, %v924, -inf
    %931 = vmax.xlane.f32.xlu0 %v930
    %v932 = vpop.xlane.xlu0 %931
    %v933 = vsel %vm138, %v925, -inf
    %934 = vmax.xlane.f32.xlu0 %v933
    %v935 = vpop.xlane.xlu0 %934
    %v936 = vsel %vm138, %v926, -inf
    %937 = vmax.xlane.f32.xlu0 %v936
    %v938 = vpop.xlane.xlu0 %937
    %v939 = vsub.f32 %v923, %v929
    %v940 = vsub.f32 %v924, %v932
    %v941 = vsub.f32 %v925, %v935
    %v942 = vsub.f32 %v926, %v938
    %v943 = vmul.f32 %v939, 1.442695
    %v944 = vpow.pop %v943
    %v945 = vmul.f32 %v940, 1.442695
    %v946 = vpow.pop %v945
    %v947 = vmul.f32 %v941, 1.442695
    %v948 = vpow.pop %v947
    %v949 = vmul.f32 %v942, 1.442695
    %v950 = vpow.pop %v949
    %v951 = vsel %vm138, %v944, 0.0
    %952 = vadd.xlane.f32.xlu0 %v951
    %v953 = vpop.xlane.xlu0 %952
    %v954 = vsel %vm138, %v946, 0.0
    %955 = vadd.xlane.f32.xlu0 %v954
    %v956 = vpop.xlane.xlu0 %955
    %v957 = vsel %vm138, %v948, 0.0
    %958 = vadd.xlane.f32.xlu0 %v957
    %v959 = vpop.xlane.xlu0 %958
    %v960 = vsel %vm138, %v950, 0.0
    %961 = vadd.xlane.f32.xlu0 %v960
    %v962 = vpop.xlane.xlu0 %961
    %v963 = vrcp.pop %v953
    %v964 = vrcp.pop %v956
    %v965 = vrcp.pop %v959
    %v966 = vrcp.pop %v962
    %v967 = vmul.f32 %v944, %v963
    %v968 = vmul.f32 %v946, %v964
    %v969 = vmul.f32 %v948, %v965
    %v970 = vmul.f32 %v950, %v966
    %v971 = vmul.f32 %v780, %v805
    %v972 = vmul.f32 %v785, %v805
    %v973 = vmul.f32 %v790, %v805
    %v974 = vmul.f32 %v795, %v805
    %v975 = vlaneseq
    %v976 = vshrl.u32 %v975, 7
    %v977 = vsub.s32 3, %v976
    %v978 = vrot.slane %v12, %v977
    %v979 = vmul.f32 %v594, %v978
    %v980 = vmul.f32 %v599, %v978
    %v981 = vmul.f32 %v604, %v978
    %v982 = vmul.f32 %v609, %v978
    %v984 = vsel %vm138, %v979, 0
    %v987 = vsel %vm138, %v980, 0
    %v990 = vsel %vm138, %v981, 0
    %v993 = vsel %vm138, %v982, 0
    %995 = vmatprep.subr.mxu0 0.0
    %996 = vmatpush1.xpose.msra.mxu0 %v823
    %997 = vmatprep.subr.mxu0 0.0
    %998 = vmatpush1.xpose.msra.mxu0 %v826
    %999 = vmatprep.subr.mxu0 0.0
    %1000 = vmatpush1.xpose.msra.mxu0 %v829
    %1001 = vmatprep.subr.mxu0 0.0
    %1002 = vmatpush1.xpose.msra.mxu0 %v832
    %1003 = vmatprep.subr.mxu0 0.0
    %1004 = vmatpush1.xpose.msra.mxu0 0.0
    %1005 = vmatprep.subr.mxu0 0.0
    %1006 = vmatpush1.xpose.msra.mxu0 0.0
    %1007 = vmatprep.subr.mxu0 0.0
    %1008 = vmatpush1.xpose.msra.mxu0 0.0
    %1009 = vmatprep.subr.mxu0 0.0
    %1010 = vmatpush1.xpose.msra.mxu0 0.0
    %1011 = vmatprep.subr.mxu0 0.0
    %1012 = vmatpush1.xpose.msra.mxu0 0.0
    %1013 = vmatprep.subr.mxu0 0.0
    %1014 = vmatpush1.xpose.msra.mxu0 0.0
    %1015 = vmatprep.subr.mxu0 0.0
    %1016 = vmatpush1.xpose.msra.mxu0 0.0
    %1017 = vmatprep.subr.mxu0 0.0
    %1018 = vmatpush1.xpose.msra.mxu0 0.0
    %1019 = vmatprep.subr.mxu0 0.0
    %1020 = vmatpush1.xpose.msra.mxu0 0.0
    %1021 = vmatprep.subr.mxu0 0.0
    %1022 = vmatpush1.xpose.msra.mxu0 0.0
    %1023 = vmatprep.subr.mxu0 0.0
    %1024 = vmatpush1.xpose.msra.mxu0 0.0
    %1025 = vmatprep.subr.mxu0 0.0
    %1026 = vmatpush1.xpose.msra.mxu0 0.0
    %1027 = vmatprep.subr.mxu0 0.0
    %1028 = vmatpush1.xpose.msra.mxu0 0.0
    %1029 = vmatprep.subr.mxu0 0.0
    %1030 = vmatpush1.xpose.msra.mxu0 0.0
    %1031 = vmatprep.subr.mxu0 0.0
    %1032 = vmatpush1.xpose.msra.mxu0 0.0
    %1033 = vmatprep.subr.mxu0 0.0
    %1034 = vmatpush1.xpose.msra.mxu0 0.0
    %1035 = vmatprep.subr.mxu0 0.0
    %1036 = vmatpush1.xpose.msra.mxu0 0.0
    %1037 = vmatprep.subr.mxu0 0.0
    %1038 = vmatpush1.xpose.msra.mxu0 0.0
    %1039 = vmatprep.subr.mxu0 0.0
    %1040 = vmatpush1.xpose.msra.mxu0 0.0
    %1041 = vmatprep.subr.mxu0 0.0
    %1042 = vmatpush1.xpose.msra.mxu0 0.0
    %1043 = vmatprep.subr.mxu0 0.0
    %1044 = vmatpush1.xpose.msra.mxu0 0.0
    %1045 = vmatprep.subr.mxu0 0.0
    %1046 = vmatpush1.xpose.msra.mxu0 0.0
    %1047 = vmatprep.subr.mxu0 0.0
    %1048 = vmatpush1.xpose.msra.mxu0 0.0
    %1049 = vmatprep.subr.mxu0 0.0
    %1050 = vmatpush1.xpose.msra.mxu0 0.0
    %1051 = vmatprep.subr.mxu0 0.0
    %1052 = vmatpush1.xpose.msra.mxu0 0.0
    %1053 = vmatprep.subr.mxu0 0.0
    %1054 = vmatpush1.xpose.msra.mxu0 0.0
    %1055 = vmatprep.subr.mxu0 0.0
    %1056 = vmatpush1.xpose.msra.mxu0 0.0
    %1057 = vmatprep.subr.mxu0 0.0
    %1058 = vmatpush1.xpose.msra.mxu0 0.0
    %1059 = vmatprep.mubr.f32.mxu0 0.0
    %1060 = vmatmul.mubr.f32.gmra.mrb[0].mxu0 %v984
    %v1061 = vpop.f32.mrb[0].mxu0
    %v1062 = vadd.f32 0.0, %v1061
    %v1063 = vpop.f32.mrb[0].mxu0
    %1064 = vmatprep.mubr.f32.mxu0 0.0
    %1065 = vmatmul.mubr.f32.gmra.mrb[0].mxu0 %v987
    %v1066 = vpop.f32.mrb[0].mxu0
    %v1067 = vadd.f32 0.0, %v1066
    %v1068 = vpop.f32.mrb[0].mxu0
    %1069 = vmatprep.mubr.f32.mxu0 0.0
    %1070 = vmatmul.mubr.f32.gmra.mrb[0].mxu0 %v990
    %v1071 = vpop.f32.mrb[0].mxu0
    %v1072 = vadd.f32 0.0, %v1071
    %v1073 = vpop.f32.mrb[0].mxu0
    %1074 = vmatprep.mubr.f32.mxu0 0.0
    %1075 = vmatmul.mubr.f32.gmra.mrb[0].mxu0 %v993
    %v1076 = vpop.f32.mrb[0].mxu0
    %v1077 = vadd.f32 0.0, %v1076
    %v1078 = vpop.f32.mrb[0].mxu0
    %1079 = vdwg.mxu0
    %v1080 = vmul.f32 %v1062, 0.35355338
    %v1081 = vmul.f32 %v1067, 0.35355338
    %v1082 = vmul.f32 %v1072, 0.35355338
    %v1083 = vmul.f32 %v1077, 0.35355338
    %v1084 = vadd.f32 %v1080, %v798
    %v1085 = vadd.f32 %v1081, %v799
    %v1086 = vadd.f32 %v1082, %v800
    %v1087 = vadd.f32 %v1083, %v801
    %v1088 = vsel %vm138, %v1084, -inf
    %1089 = vmax.xlane.f32.xlu0 %v1088
    %v1090 = vpop.xlane.xlu0 %1089
    %v1091 = vsel %vm138, %v1085, -inf
    %1092 = vmax.xlane.f32.xlu0 %v1091
    %v1093 = vpop.xlane.xlu0 %1092
    %v1094 = vsel %vm138, %v1086, -inf
    %1095 = vmax.xlane.f32.xlu0 %v1094
    %v1096 = vpop.xlane.xlu0 %1095
    %v1097 = vsel %vm138, %v1087, -inf
    %1098 = vmax.xlane.f32.xlu0 %v1097
    %v1099 = vpop.xlane.xlu0 %1098
    %v1100 = vsub.f32 %v1084, %v1090
    %v1101 = vsub.f32 %v1085, %v1093
    %v1102 = vsub.f32 %v1086, %v1096
    %v1103 = vsub.f32 %v1087, %v1099
    %v1104 = vmul.f32 %v1100, 1.442695
    %v1105 = vpow.pop %v1104
    %v1106 = vmul.f32 %v1101, 1.442695
    %v1107 = vpow.pop %v1106
    %v1108 = vmul.f32 %v1102, 1.442695
    %v1109 = vpow.pop %v1108
    %v1110 = vmul.f32 %v1103, 1.442695
    %v1111 = vpow.pop %v1110
    %v1112 = vsel %vm138, %v1105, 0.0
    %1113 = vadd.xlane.f32.xlu0 %v1112
    %v1114 = vpop.xlane.xlu0 %1113
    %v1115 = vsel %vm138, %v1107, 0.0
    %1116 = vadd.xlane.f32.xlu0 %v1115
    %v1117 = vpop.xlane.xlu0 %1116
    %v1118 = vsel %vm138, %v1109, 0.0
    %1119 = vadd.xlane.f32.xlu0 %v1118
    %v1120 = vpop.xlane.xlu0 %1119
    %v1121 = vsel %vm138, %v1111, 0.0
    %1122 = vadd.xlane.f32.xlu0 %v1121
    %v1123 = vpop.xlane.xlu0 %1122
    %v1124 = vrcp.pop %v1114
    %v1125 = vrcp.pop %v1117
    %v1126 = vrcp.pop %v1120
    %v1127 = vrcp.pop %v1123
    %v1128 = vmul.f32 %v1105, %v1124
    %v1129 = vmul.f32 %v1107, %v1125
    %v1130 = vmul.f32 %v1109, %v1126
    %v1131 = vmul.f32 %v1111, %v1127
    %v1132 = vmul.f32 %v780, %v978
    %v1133 = vmul.f32 %v785, %v978
    %v1134 = vmul.f32 %v790, %v978
    %v1135 = vmul.f32 %v795, %v978
    %v1137 = vsel %vm138, %v1128, 0
    %v1140 = vsel %vm138, %v1129, 0
    %v1143 = vsel %vm138, %v1130, 0
    %v1146 = vsel %vm138, %v1131, 0
    %1148 = vmatprep.subr.mxu0 0.0
    %1149 = vmatpush1.msra.mxu0 %v1132
    %1150 = vmatprep.subr.mxu0 0.0
    %1151 = vmatpush1.msra.mxu0 %v1133
    %1152 = vmatprep.subr.mxu0 0.0
    %1153 = vmatpush1.msra.mxu0 %v1134
    %1154 = vmatprep.subr.mxu0 0.0
    %1155 = vmatpush1.msra.mxu0 %v1135
    %1156 = vmatprep.subr.mxu0 0.0
    %1157 = vmatpush1.msra.mxu0 0.0
    %1158 = vmatprep.subr.mxu0 0.0
    %1159 = vmatpush1.msra.mxu0 0.0
    %1160 = vmatprep.subr.mxu0 0.0
    %1161 = vmatpush1.msra.mxu0 0.0
    %1162 = vmatprep.subr.mxu0 0.0
    %1163 = vmatpush1.msra.mxu0 0.0
    %1164 = vmatprep.subr.mxu0 0.0
    %1165 = vmatpush1.msra.mxu0 0.0
    %1166 = vmatprep.subr.mxu0 0.0
    %1167 = vmatpush1.msra.mxu0 0.0
    %1168 = vmatprep.subr.mxu0 0.0
    %1169 = vmatpush1.msra.mxu0 0.0
    %1170 = vmatprep.subr.mxu0 0.0
    %1171 = vmatpush1.msra.mxu0 0.0
    %1172 = vmatprep.subr.mxu0 0.0
    %1173 = vmatpush1.msra.mxu0 0.0
    %1174 = vmatprep.subr.mxu0 0.0
    %1175 = vmatpush1.msra.mxu0 0.0
    %1176 = vmatprep.subr.mxu0 0.0
    %1177 = vmatpush1.msra.mxu0 0.0
    %1178 = vmatprep.subr.mxu0 0.0
    %1179 = vmatpush1.msra.mxu0 0.0
    %1180 = vmatprep.subr.mxu0 0.0
    %1181 = vmatpush1.msra.mxu0 0.0
    %1182 = vmatprep.subr.mxu0 0.0
    %1183 = vmatpush1.msra.mxu0 0.0
    %1184 = vmatprep.subr.mxu0 0.0
    %1185 = vmatpush1.msra.mxu0 0.0
    %1186 = vmatprep.subr.mxu0 0.0
    %1187 = vmatpush1.msra.mxu0 0.0
    %1188 = vmatprep.subr.mxu0 0.0
    %1189 = vmatpush1.msra.mxu0 0.0
    %1190 = vmatprep.subr.mxu0 0.0
    %1191 = vmatpush1.msra.mxu0 0.0
    %1192 = vmatprep.subr.mxu0 0.0
    %1193 = vmatpush1.msra.mxu0 0.0
    %1194 = vmatprep.subr.mxu0 0.0
    %1195 = vmatpush1.msra.mxu0 0.0
    %1196 = vmatprep.subr.mxu0 0.0
    %1197 = vmatpush1.msra.mxu0 0.0
    %1198 = vmatprep.subr.mxu0 0.0
    %1199 = vmatpush1.msra.mxu0 0.0
    %1200 = vmatprep.subr.mxu0 0.0
    %1201 = vmatpush1.msra.mxu0 0.0
    %1202 = vmatprep.subr.mxu0 0.0
    %1203 = vmatpush1.msra.mxu0 0.0
    %1204 = vmatprep.subr.mxu0 0.0
    %1205 = vmatpush1.msra.mxu0 0.0
    %1206 = vmatprep.subr.mxu0 0.0
    %1207 = vmatpush1.msra.mxu0 0.0
    %1208 = vmatprep.subr.mxu0 0.0
    %1209 = vmatpush1.msra.mxu0 0.0
    %1210 = vmatprep.subr.mxu0 0.0
    %1211 = vmatpush1.msra.mxu0 0.0
    %1212 = vmatprep.mubr.f32.mxu0 0.0
    %1213 = vmatmul.mubr.f32.gmra.mrb[0].mxu0 %v1137
    %v1214 = vpop.f32.mrb[0].mxu0
    %v1215 = vadd.f32 0.0, %v1214
    %v1216 = vpop.f32.mrb[0].mxu0
    %1217 = vmatprep.mubr.f32.mxu0 0.0
    %1218 = vmatmul.mubr.f32.gmra.mrb[0].mxu0 %v1140
    %v1219 = vpop.f32.mrb[0].mxu0
    %v1220 = vadd.f32 0.0, %v1219
    %v1221 = vpop.f32.mrb[0].mxu0
    %1222 = vmatprep.mubr.f32.mxu0 0.0
    %1223 = vmatmul.mubr.f32.gmra.mrb[0].mxu0 %v1143
    %v1224 = vpop.f32.mrb[0].mxu0
    %v1225 = vadd.f32 0.0, %v1224
    %v1226 = vpop.f32.mrb[0].mxu0
    %1227 = vmatprep.mubr.f32.mxu0 0.0
    %1228 = vmatmul.mubr.f32.gmra.mrb[0].mxu0 %v1146
    %v1229 = vpop.f32.mrb[0].mxu0
    %v1230 = vadd.f32 0.0, %v1229
    %v1231 = vpop.f32.mrb[0].mxu0
    %1232 = vdwg.mxu0
    %v1234 = vsel %vm138, %v967, 0
    %v1237 = vsel %vm138, %v968, 0
    %v1240 = vsel %vm138, %v969, 0
    %v1243 = vsel %vm138, %v970, 0
    %1245 = vmatprep.subr.mxu0 0.0
    %1246 = vmatpush1.msra.mxu0 %v971
    %1247 = vmatprep.subr.mxu0 0.0
    %1248 = vmatpush1.msra.mxu0 %v972
    %1249 = vmatprep.subr.mxu0 0.0
    %1250 = vmatpush1.msra.mxu0 %v973
    %1251 = vmatprep.subr.mxu0 0.0
    %1252 = vmatpush1.msra.mxu0 %v974
    %1253 = vmatprep.subr.mxu0 0.0
    %1254 = vmatpush1.msra.mxu0 0.0
    %1255 = vmatprep.subr.mxu0 0.0
    %1256 = vmatpush1.msra.mxu0 0.0
    %1257 = vmatprep.subr.mxu0 0.0
    %1258 = vmatpush1.msra.mxu0 0.0
    %1259 = vmatprep.subr.mxu0 0.0
    %1260 = vmatpush1.msra.mxu0 0.0
    %1261 = vmatprep.subr.mxu0 0.0
    %1262 = vmatpush1.msra.mxu0 0.0
    %1263 = vmatprep.subr.mxu0 0.0
    %1264 = vmatpush1.msra.mxu0 0.0
    %1265 = vmatprep.subr.mxu0 0.0
    %1266 = vmatpush1.msra.mxu0 0.0
    %1267 = vmatprep.subr.mxu0 0.0
    %1268 = vmatpush1.msra.mxu0 0.0
    %1269 = vmatprep.subr.mxu0 0.0
    %1270 = vmatpush1.msra.mxu0 0.0
    %1271 = vmatprep.subr.mxu0 0.0
    %1272 = vmatpush1.msra.mxu0 0.0
    %1273 = vmatprep.subr.mxu0 0.0
    %1274 = vmatpush1.msra.mxu0 0.0
    %1275 = vmatprep.subr.mxu0 0.0
    %1276 = vmatpush1.msra.mxu0 0.0
    %1277 = vmatprep.subr.mxu0 0.0
    %1278 = vmatpush1.msra.mxu0 0.0
    %1279 = vmatprep.subr.mxu0 0.0
    %1280 = vmatpush1.msra.mxu0 0.0
    %1281 = vmatprep.subr.mxu0 0.0
    %1282 = vmatpush1.msra.mxu0 0.0
    %1283 = vmatprep.subr.mxu0 0.0
    %1284 = vmatpush1.msra.mxu0 0.0
    %1285 = vmatprep.subr.mxu0 0.0
    %1286 = vmatpush1.msra.mxu0 0.0
    %1287 = vmatprep.subr.mxu0 0.0
    %1288 = vmatpush1.msra.mxu0 0.0
    %1289 = vmatprep.subr.mxu0 0.0
    %1290 = vmatpush1.msra.mxu0 0.0
    %1291 = vmatprep.subr.mxu0 0.0
    %1292 = vmatpush1.msra.mxu0 0.0
    %1293 = vmatprep.subr.mxu0 0.0
    %1294 = vmatpush1.msra.mxu0 0.0
    %1295 = vmatprep.subr.mxu0 0.0
    %1296 = vmatpush1.msra.mxu0 0.0
    %1297 = vmatprep.subr.mxu0 0.0
    %1298 = vmatpush1.msra.mxu0 0.0
    %1299 = vmatprep.subr.mxu0 0.0
    %1300 = vmatpush1.msra.mxu0 0.0
    %1301 = vmatprep.subr.mxu0 0.0
    %1302 = vmatpush1.msra.mxu0 0.0
    %1303 = vmatprep.subr.mxu0 0.0
    %1304 = vmatpush1.msra.mxu0 0.0
    %1305 = vmatprep.subr.mxu0 0.0
    %1306 = vmatpush1.msra.mxu0 0.0
    %1307 = vmatprep.subr.mxu0 0.0
    %1308 = vmatpush1.msra.mxu0 0.0
    %1309 = vmatprep.mubr.f32.mxu0 0.0
    %1310 = vmatmul.mubr.f32.gmra.mrb[0].mxu0 %v1234
    %v1311 = vpop.f32.mrb[0].mxu0
    %v1312 = vadd.f32 %v1215, %v1311
    %v1313 = vpop.f32.mrb[0].mxu0
    %1314 = vmatprep.mubr.f32.mxu0 0.0
    %1315 = vmatmul.mubr.f32.gmra.mrb[0].mxu0 %v1237
    %v1316 = vpop.f32.mrb[0].mxu0
    %v1317 = vadd.f32 %v1220, %v1316
    %v1318 = vpop.f32.mrb[0].mxu0
    %1319 = vmatprep.mubr.f32.mxu0 0.0
    %1320 = vmatmul.mubr.f32.gmra.mrb[0].mxu0 %v1240
    %v1321 = vpop.f32.mrb[0].mxu0
    %v1322 = vadd.f32 %v1225, %v1321
    %v1323 = vpop.f32.mrb[0].mxu0
    %1324 = vmatprep.mubr.f32.mxu0 0.0
    %1325 = vmatmul.mubr.f32.gmra.mrb[0].mxu0 %v1243
    %v1326 = vpop.f32.mrb[0].mxu0
    %v1327 = vadd.f32 %v1230, %v1326
    %v1328 = vpop.f32.mrb[0].mxu0
    %1329 = vdwg.mxu0
    %v1330 = vlaneseq
    %v1331 = vshrl.u32 %v1330, 7
    %v1332 = vsub.s32 4, %v1331
    %v1333 = vrot.slane %v12, %v1332
    %v1334 = vmul.f32 %v594, %v1333
    %v1335 = vmul.f32 %v599, %v1333
    %v1336 = vmul.f32 %v604, %v1333
    %v1337 = vmul.f32 %v609, %v1333
    %v1339 = vsel %vm138, %v1334, 0
    %v1342 = vsel %vm138, %v1335, 0
    %v1345 = vsel %vm138, %v1336, 0
    %v1348 = vsel %vm138, %v1337, 0
    %1350 = vmatprep.subr.mxu0 0.0
    %1351 = vmatpush1.xpose.msra.mxu0 %v823
    %1352 = vmatprep.subr.mxu0 0.0
    %1353 = vmatpush1.xpose.msra.mxu0 %v826
    %1354 = vmatprep.subr.mxu0 0.0
    %1355 = vmatpush1.xpose.msra.mxu0 %v829
    %1356 = vmatprep.subr.mxu0 0.0
    %1357 = vmatpush1.xpose.msra.mxu0 %v832
    %1358 = vmatprep.subr.mxu0 0.0
    %1359 = vmatpush1.xpose.msra.mxu0 0.0
    %1360 = vmatprep.subr.mxu0 0.0
    %1361 = vmatpush1.xpose.msra.mxu0 0.0
    %1362 = vmatprep.subr.mxu0 0.0
    %1363 = vmatpush1.xpose.msra.mxu0 0.0
    %1364 = vmatprep.subr.mxu0 0.0
    %1365 = vmatpush1.xpose.msra.mxu0 0.0
    %1366 = vmatprep.subr.mxu0 0.0
    %1367 = vmatpush1.xpose.msra.mxu0 0.0
    %1368 = vmatprep.subr.mxu0 0.0
    %1369 = vmatpush1.xpose.msra.mxu0 0.0
    %1370 = vmatprep.subr.mxu0 0.0
    %1371 = vmatpush1.xpose.msra.mxu0 0.0
    %1372 = vmatprep.subr.mxu0 0.0
    %1373 = vmatpush1.xpose.msra.mxu0 0.0
    %1374 = vmatprep.subr.mxu0 0.0
    %1375 = vmatpush1.xpose.msra.mxu0 0.0
    %1376 = vmatprep.subr.mxu0 0.0
    %1377 = vmatpush1.xpose.msra.mxu0 0.0
    %1378 = vmatprep.subr.mxu0 0.0
    %1379 = vmatpush1.xpose.msra.mxu0 0.0
    %1380 = vmatprep.subr.mxu0 0.0
    %1381 = vmatpush1.xpose.msra.mxu0 0.0
    %1382 = vmatprep.subr.mxu0 0.0
    %1383 = vmatpush1.xpose.msra.mxu0 0.0
    %1384 = vmatprep.subr.mxu0 0.0
    %1385 = vmatpush1.xpose.msra.mxu0 0.0
    %1386 = vmatprep.subr.mxu0 0.0
    %1387 = vmatpush1.xpose.msra.mxu0 0.0
    %1388 = vmatprep.subr.mxu0 0.0
    %1389 = vmatpush1.xpose.msra.mxu0 0.0
    %1390 = vmatprep.subr.mxu0 0.0
    %1391 = vmatpush1.xpose.msra.mxu0 0.0
    %1392 = vmatprep.subr.mxu0 0.0
    %1393 = vmatpush1.xpose.msra.mxu0 0.0
    %1394 = vmatprep.subr.mxu0 0.0
    %1395 = vmatpush1.xpose.msra.mxu0 0.0
    %1396 = vmatprep.subr.mxu0 0.0
    %1397 = vmatpush1.xpose.msra.mxu0 0.0
    %1398 = vmatprep.subr.mxu0 0.0
    %1399 = vmatpush1.xpose.msra.mxu0 0.0
    %1400 = vmatprep.subr.mxu0 0.0
    %1401 = vmatpush1.xpose.msra.mxu0 0.0
    %1402 = vmatprep.subr.mxu0 0.0
    %1403 = vmatpush1.xpose.msra.mxu0 0.0
    %1404 = vmatprep.subr.mxu0 0.0
    %1405 = vmatpush1.xpose.msra.mxu0 0.0
    %1406 = vmatprep.subr.mxu0 0.0
    %1407 = vmatpush1.xpose.msra.mxu0 0.0
    %1408 = vmatprep.subr.mxu0 0.0
    %1409 = vmatpush1.xpose.msra.mxu0 0.0
    %1410 = vmatprep.subr.mxu0 0.0
    %1411 = vmatpush1.xpose.msra.mxu0 0.0
    %1412 = vmatprep.subr.mxu0 0.0
    %1413 = vmatpush1.xpose.msra.mxu0 0.0
    %1414 = vmatprep.mubr.f32.mxu0 0.0
    %1415 = vmatmul.mubr.f32.gmra.mrb[0].mxu0 %v1339
    %v1416 = vpop.f32.mrb[0].mxu0
    %v1417 = vadd.f32 0.0, %v1416
    %v1418 = vpop.f32.mrb[0].mxu0
    %1419 = vmatprep.mubr.f32.mxu0 0.0
    %1420 = vmatmul.mubr.f32.gmra.mrb[0].mxu0 %v1342
    %v1421 = vpop.f32.mrb[0].mxu0
    %v1422 = vadd.f32 0.0, %v1421
    %v1423 = vpop.f32.mrb[0].mxu0
    %1424 = vmatprep.mubr.f32.mxu0 0.0
    %1425 = vmatmul.mubr.f32.gmra.mrb[0].mxu0 %v1345
    %v1426 = vpop.f32.mrb[0].mxu0
    %v1427 = vadd.f32 0.0, %v1426
    %v1428 = vpop.f32.mrb[0].mxu0
    %1429 = vmatprep.mubr.f32.mxu0 0.0
    %1430 = vmatmul.mubr.f32.gmra.mrb[0].mxu0 %v1348
    %v1431 = vpop.f32.mrb[0].mxu0
    %v1432 = vadd.f32 0.0, %v1431
    %v1433 = vpop.f32.mrb[0].mxu0
    %1434 = vdwg.mxu0
    %v1435 = vmul.f32 %v1417, 0.35355338
    %v1436 = vmul.f32 %v1422, 0.35355338
    %v1437 = vmul.f32 %v1427, 0.35355338
    %v1438 = vmul.f32 %v1432, 0.35355338
    %v1439 = vadd.f32 %v1435, %v798
    %v1440 = vadd.f32 %v1436, %v799
    %v1441 = vadd.f32 %v1437, %v800
    %v1442 = vadd.f32 %v1438, %v801
    %v1443 = vsel %vm138, %v1439, -inf
    %1444 = vmax.xlane.f32.xlu0 %v1443
    %v1445 = vpop.xlane.xlu0 %1444
    %v1446 = vsel %vm138, %v1440, -inf
    %1447 = vmax.xlane.f32.xlu0 %v1446
    %v1448 = vpop.xlane.xlu0 %1447
    %v1449 = vsel %vm138, %v1441, -inf
    %1450 = vmax.xlane.f32.xlu0 %v1449
    %v1451 = vpop.xlane.xlu0 %1450
    %v1452 = vsel %vm138, %v1442, -inf
    %1453 = vmax.xlane.f32.xlu0 %v1452
    %v1454 = vpop.xlane.xlu0 %1453
    %v1455 = vsub.f32 %v1439, %v1445
    %v1456 = vsub.f32 %v1440, %v1448
    %v1457 = vsub.f32 %v1441, %v1451
    %v1458 = vsub.f32 %v1442, %v1454
    %v1459 = vmul.f32 %v1455, 1.442695
    %v1460 = vpow.pop %v1459
    %v1461 = vmul.f32 %v1456, 1.442695
    %v1462 = vpow.pop %v1461
    %v1463 = vmul.f32 %v1457, 1.442695
    %v1464 = vpow.pop %v1463
    %v1465 = vmul.f32 %v1458, 1.442695
    %v1466 = vpow.pop %v1465
    %v1467 = vsel %vm138, %v1460, 0.0
    %1468 = vadd.xlane.f32.xlu0 %v1467
    %v1469 = vpop.xlane.xlu0 %1468
    %v1470 = vsel %vm138, %v1462, 0.0
    %1471 = vadd.xlane.f32.xlu0 %v1470
    %v1472 = vpop.xlane.xlu0 %1471
    %v1473 = vsel %vm138, %v1464, 0.0
    %1474 = vadd.xlane.f32.xlu0 %v1473
    %v1475 = vpop.xlane.xlu0 %1474
    %v1476 = vsel %vm138, %v1466, 0.0
    %1477 = vadd.xlane.f32.xlu0 %v1476
    %v1478 = vpop.xlane.xlu0 %1477
    %v1479 = vrcp.pop %v1469
    %v1480 = vrcp.pop %v1472
    %v1481 = vrcp.pop %v1475
    %v1482 = vrcp.pop %v1478
    %v1483 = vmul.f32 %v1460, %v1479
    %v1484 = vmul.f32 %v1462, %v1480
    %v1485 = vmul.f32 %v1464, %v1481
    %v1486 = vmul.f32 %v1466, %v1482
    %v1487 = vmul.f32 %v780, %v1333
    %v1488 = vmul.f32 %v785, %v1333
    %v1489 = vmul.f32 %v790, %v1333
    %v1490 = vmul.f32 %v795, %v1333
    %v1492 = vsel %vm138, %v1483, 0
    %v1495 = vsel %vm138, %v1484, 0
    %v1498 = vsel %vm138, %v1485, 0
    %v1501 = vsel %vm138, %v1486, 0
    %1503 = vmatprep.subr.mxu0 0.0
    %1504 = vmatpush1.msra.mxu0 %v1487
    %1505 = vmatprep.subr.mxu0 0.0
    %1506 = vmatpush1.msra.mxu0 %v1488
    %1507 = vmatprep.subr.mxu0 0.0
    %1508 = vmatpush1.msra.mxu0 %v1489
    %1509 = vmatprep.subr.mxu0 0.0
    %1510 = vmatpush1.msra.mxu0 %v1490
    %1511 = vmatprep.subr.mxu0 0.0
    %1512 = vmatpush1.msra.mxu0 0.0
    %1513 = vmatprep.subr.mxu0 0.0
    %1514 = vmatpush1.msra.mxu0 0.0
    %1515 = vmatprep.subr.mxu0 0.0
    %1516 = vmatpush1.msra.mxu0 0.0
    %1517 = vmatprep.subr.mxu0 0.0
    %1518 = vmatpush1.msra.mxu0 0.0
    %1519 = vmatprep.subr.mxu0 0.0
    %1520 = vmatpush1.msra.mxu0 0.0
    %1521 = vmatprep.subr.mxu0 0.0
    %1522 = vmatpush1.msra.mxu0 0.0
    %1523 = vmatprep.subr.mxu0 0.0
    %1524 = vmatpush1.msra.mxu0 0.0
    %1525 = vmatprep.subr.mxu0 0.0
    %1526 = vmatpush1.msra.mxu0 0.0
    %1527 = vmatprep.subr.mxu0 0.0
    %1528 = vmatpush1.msra.mxu0 0.0
    %1529 = vmatprep.subr.mxu0 0.0
    %1530 = vmatpush1.msra.mxu0 0.0
    %1531 = vmatprep.subr.mxu0 0.0
    %1532 = vmatpush1.msra.mxu0 0.0
    %1533 = vmatprep.subr.mxu0 0.0
    %1534 = vmatpush1.msra.mxu0 0.0
    %1535 = vmatprep.subr.mxu0 0.0
    %1536 = vmatpush1.msra.mxu0 0.0
    %1537 = vmatprep.subr.mxu0 0.0
    %1538 = vmatpush1.msra.mxu0 0.0
    %1539 = vmatprep.subr.mxu0 0.0
    %1540 = vmatpush1.msra.mxu0 0.0
    %1541 = vmatprep.subr.mxu0 0.0
    %1542 = vmatpush1.msra.mxu0 0.0
    %1543 = vmatprep.subr.mxu0 0.0
    %1544 = vmatpush1.msra.mxu0 0.0
    %1545 = vmatprep.subr.mxu0 0.0
    %1546 = vmatpush1.msra.mxu0 0.0
    %1547 = vmatprep.subr.mxu0 0.0
    %1548 = vmatpush1.msra.mxu0 0.0
    %1549 = vmatprep.subr.mxu0 0.0
    %1550 = vmatpush1.msra.mxu0 0.0
    %1551 = vmatprep.subr.mxu0 0.0
    %1552 = vmatpush1.msra.mxu0 0.0
    %1553 = vmatprep.subr.mxu0 0.0
    %1554 = vmatpush1.msra.mxu0 0.0
    %1555 = vmatprep.subr.mxu0 0.0
    %1556 = vmatpush1.msra.mxu0 0.0
    %1557 = vmatprep.subr.mxu0 0.0
    %1558 = vmatpush1.msra.mxu0 0.0
    %1559 = vmatprep.subr.mxu0 0.0
    %1560 = vmatpush1.msra.mxu0 0.0
    %1561 = vmatprep.subr.mxu0 0.0
    %1562 = vmatpush1.msra.mxu0 0.0
    %1563 = vmatprep.subr.mxu0 0.0
    %1564 = vmatpush1.msra.mxu0 0.0
    %1565 = vmatprep.subr.mxu0 0.0
    %1566 = vmatpush1.msra.mxu0 0.0
    %1567 = vmatprep.mubr.f32.mxu0 0.0
    %1568 = vmatmul.mubr.f32.gmra.mrb[0].mxu0 %v1492
    %v1569 = vpop.f32.mrb[0].mxu0
    %v1570 = vadd.f32 0.0, %v1569
    %v1571 = vpop.f32.mrb[0].mxu0
    %1572 = vmatprep.mubr.f32.mxu0 0.0
    %1573 = vmatmul.mubr.f32.gmra.mrb[0].mxu0 %v1495
    %v1574 = vpop.f32.mrb[0].mxu0
    %v1575 = vadd.f32 0.0, %v1574
    %v1576 = vpop.f32.mrb[0].mxu0
    %1577 = vmatprep.mubr.f32.mxu0 0.0
    %1578 = vmatmul.mubr.f32.gmra.mrb[0].mxu0 %v1498
    %v1579 = vpop.f32.mrb[0].mxu0
    %v1580 = vadd.f32 0.0, %v1579
    %v1581 = vpop.f32.mrb[0].mxu0
    %1582 = vmatprep.mubr.f32.mxu0 0.0
    %1583 = vmatmul.mubr.f32.gmra.mrb[0].mxu0 %v1501
    %v1584 = vpop.f32.mrb[0].mxu0
    %v1585 = vadd.f32 0.0, %v1584
    %v1586 = vpop.f32.mrb[0].mxu0
    %1587 = vdwg.mxu0
    %v1588 = vadd.f32 %v1312, %v1570
    %v1589 = vadd.f32 %v1317, %v1575
    %v1590 = vadd.f32 %v1322, %v1580
    %v1591 = vadd.f32 %v1327, %v1585
    %v1592 = vlaneseq
    %v1593 = vshrl.u32 %v1592, 7
    %v1594 = vsub.s32 5, %v1593
    %v1595 = vrot.slane %v12, %v1594
    %v1596 = vmul.f32 %v594, %v1595
    %v1597 = vmul.f32 %v599, %v1595
    %v1598 = vmul.f32 %v604, %v1595
    %v1599 = vmul.f32 %v609, %v1595
    %v1601 = vsel %vm138, %v1596, 0
    %v1604 = vsel %vm138, %v1597, 0
    %v1607 = vsel %vm138, %v1598, 0
    %v1610 = vsel %vm138, %v1599, 0
    %1612 = vmatprep.subr.mxu0 0.0
    %1613 = vmatpush1.xpose.msra.mxu0 %v823
    %1614 = vmatprep.subr.mxu0 0.0
    %1615 = vmatpush1.xpose.msra.mxu0 %v826
    %1616 = vmatprep.subr.mxu0 0.0
    %1617 = vmatpush1.xpose.msra.mxu0 %v829
    %1618 = vmatprep.subr.mxu0 0.0
    %1619 = vmatpush1.xpose.msra.mxu0 %v832
    %1620 = vmatprep.subr.mxu0 0.0
    %1621 = vmatpush1.xpose.msra.mxu0 0.0
    %1622 = vmatprep.subr.mxu0 0.0
    %1623 = vmatpush1.xpose.msra.mxu0 0.0
    %1624 = vmatprep.subr.mxu0 0.0
    %1625 = vmatpush1.xpose.msra.mxu0 0.0
    %1626 = vmatprep.subr.mxu0 0.0
    %1627 = vmatpush1.xpose.msra.mxu0 0.0
    %1628 = vmatprep.subr.mxu0 0.0
    %1629 = vmatpush1.xpose.msra.mxu0 0.0
    %1630 = vmatprep.subr.mxu0 0.0
    %1631 = vmatpush1.xpose.msra.mxu0 0.0
    %1632 = vmatprep.subr.mxu0 0.0
    %1633 = vmatpush1.xpose.msra.mxu0 0.0
    %1634 = vmatprep.subr.mxu0 0.0
    %1635 = vmatpush1.xpose.msra.mxu0 0.0
    %1636 = vmatprep.subr.mxu0 0.0
    %1637 = vmatpush1.xpose.msra.mxu0 0.0
    %1638 = vmatprep.subr.mxu0 0.0
    %1639 = vmatpush1.xpose.msra.mxu0 0.0
    %1640 = vmatprep.subr.mxu0 0.0
    %1641 = vmatpush1.xpose.msra.mxu0 0.0
    %1642 = vmatprep.subr.mxu0 0.0
    %1643 = vmatpush1.xpose.msra.mxu0 0.0
    %1644 = vmatprep.subr.mxu0 0.0
    %1645 = vmatpush1.xpose.msra.mxu0 0.0
    %1646 = vmatprep.subr.mxu0 0.0
    %1647 = vmatpush1.xpose.msra.mxu0 0.0
    %1648 = vmatprep.subr.mxu0 0.0
    %1649 = vmatpush1.xpose.msra.mxu0 0.0
    %1650 = vmatprep.subr.mxu0 0.0
    %1651 = vmatpush1.xpose.msra.mxu0 0.0
    %1652 = vmatprep.subr.mxu0 0.0
    %1653 = vmatpush1.xpose.msra.mxu0 0.0
    %1654 = vmatprep.subr.mxu0 0.0
    %1655 = vmatpush1.xpose.msra.mxu0 0.0
    %1656 = vmatprep.subr.mxu0 0.0
    %1657 = vmatpush1.xpose.msra.mxu0 0.0
    %1658 = vmatprep.subr.mxu0 0.0
    %1659 = vmatpush1.xpose.msra.mxu0 0.0
    %1660 = vmatprep.subr.mxu0 0.0
    %1661 = vmatpush1.xpose.msra.mxu0 0.0
    %1662 = vmatprep.subr.mxu0 0.0
    %1663 = vmatpush1.xpose.msra.mxu0 0.0
    %1664 = vmatprep.subr.mxu0 0.0
    %1665 = vmatpush1.xpose.msra.mxu0 0.0
    %1666 = vmatprep.subr.mxu0 0.0
    %1667 = vmatpush1.xpose.msra.mxu0 0.0
    %1668 = vmatprep.subr.mxu0 0.0
    %1669 = vmatpush1.xpose.msra.mxu0 0.0
    %1670 = vmatprep.subr.mxu0 0.0
    %1671 = vmatpush1.xpose.msra.mxu0 0.0
    %1672 = vmatprep.subr.mxu0 0.0
    %1673 = vmatpush1.xpose.msra.mxu0 0.0
    %1674 = vmatprep.subr.mxu0 0.0
    %1675 = vmatpush1.xpose.msra.mxu0 0.0
    %1676 = vmatprep.mubr.f32.mxu0 0.0
    %1677 = vmatmul.mubr.f32.gmra.mrb[0].mxu0 %v1601
    %v1678 = vpop.f32.mrb[0].mxu0
    %v1679 = vadd.f32 0.0, %v1678
    %v1680 = vpop.f32.mrb[0].mxu0
    %1681 = vmatprep.mubr.f32.mxu0 0.0
    %1682 = vmatmul.mubr.f32.gmra.mrb[0].mxu0 %v1604
    %v1683 = vpop.f32.mrb[0].mxu0
    %v1684 = vadd.f32 0.0, %v1683
    %v1685 = vpop.f32.mrb[0].mxu0
    %1686 = vmatprep.mubr.f32.mxu0 0.0
    %1687 = vmatmul.mubr.f32.gmra.mrb[0].mxu0 %v1607
    %v1688 = vpop.f32.mrb[0].mxu0
    %v1689 = vadd.f32 0.0, %v1688
    %v1690 = vpop.f32.mrb[0].mxu0
    %1691 = vmatprep.mubr.f32.mxu0 0.0
    %1692 = vmatmul.mubr.f32.gmra.mrb[0].mxu0 %v1610
    %v1693 = vpop.f32.mrb[0].mxu0
    %v1694 = vadd.f32 0.0, %v1693
    %v1695 = vpop.f32.mrb[0].mxu0
    %1696 = vdwg.mxu0
    %v1697 = vmul.f32 %v1679, 0.35355338
    %v1698 = vmul.f32 %v1684, 0.35355338
    %v1699 = vmul.f32 %v1689, 0.35355338
    %v1700 = vmul.f32 %v1694, 0.35355338
    %v1701 = vadd.f32 %v1697, %v798
    %v1702 = vadd.f32 %v1698, %v799
    %v1703 = vadd.f32 %v1699, %v800
    %v1704 = vadd.f32 %v1700, %v801
    %v1705 = vsel %vm138, %v1701, -inf
    %1706 = vmax.xlane.f32.xlu0 %v1705
    %v1707 = vpop.xlane.xlu0 %1706
    %v1708 = vsel %vm138, %v1702, -inf
    %1709 = vmax.xlane.f32.xlu0 %v1708
    %v1710 = vpop.xlane.xlu0 %1709
    %v1711 = vsel %vm138, %v1703, -inf
    %1712 = vmax.xlane.f32.xlu0 %v1711
    %v1713 = vpop.xlane.xlu0 %1712
    %v1714 = vsel %vm138, %v1704, -inf
    %1715 = vmax.xlane.f32.xlu0 %v1714
    %v1716 = vpop.xlane.xlu0 %1715
    %v1717 = vsub.f32 %v1701, %v1707
    %v1718 = vsub.f32 %v1702, %v1710
    %v1719 = vsub.f32 %v1703, %v1713
    %v1720 = vsub.f32 %v1704, %v1716
    %v1721 = vmul.f32 %v1717, 1.442695
    %v1722 = vpow.pop %v1721
    %v1723 = vmul.f32 %v1718, 1.442695
    %v1724 = vpow.pop %v1723
    %v1725 = vmul.f32 %v1719, 1.442695
    %v1726 = vpow.pop %v1725
    %v1727 = vmul.f32 %v1720, 1.442695
    %v1728 = vpow.pop %v1727
    %v1729 = vsel %vm138, %v1722, 0.0
    %1730 = vadd.xlane.f32.xlu0 %v1729
    %v1731 = vpop.xlane.xlu0 %1730
    %v1732 = vsel %vm138, %v1724, 0.0
    %1733 = vadd.xlane.f32.xlu0 %v1732
    %v1734 = vpop.xlane.xlu0 %1733
    %v1735 = vsel %vm138, %v1726, 0.0
    %1736 = vadd.xlane.f32.xlu0 %v1735
    %v1737 = vpop.xlane.xlu0 %1736
    %v1738 = vsel %vm138, %v1728, 0.0
    %1739 = vadd.xlane.f32.xlu0 %v1738
    %v1740 = vpop.xlane.xlu0 %1739
    %v1741 = vrcp.pop %v1731
    %v1742 = vrcp.pop %v1734
    %v1743 = vrcp.pop %v1737
    %v1744 = vrcp.pop %v1740
    %v1745 = vmul.f32 %v1722, %v1741
    %v1746 = vmul.f32 %v1724, %v1742
    %v1747 = vmul.f32 %v1726, %v1743
    %v1748 = vmul.f32 %v1728, %v1744
    %v1749 = vmul.f32 %v780, %v1595
    %v1750 = vmul.f32 %v785, %v1595
    %v1751 = vmul.f32 %v790, %v1595
    %v1752 = vmul.f32 %v795, %v1595
    %v1754 = vsel %vm138, %v1745, 0
    %v1757 = vsel %vm138, %v1746, 0
    %v1760 = vsel %vm138, %v1747, 0
    %v1763 = vsel %vm138, %v1748, 0
    %1765 = vmatprep.subr.mxu0 0.0
    %1766 = vmatpush1.msra.mxu0 %v1749
    %1767 = vmatprep.subr.mxu0 0.0
    %1768 = vmatpush1.msra.mxu0 %v1750
    %1769 = vmatprep.subr.mxu0 0.0
    %1770 = vmatpush1.msra.mxu0 %v1751
    %1771 = vmatprep.subr.mxu0 0.0
    %1772 = vmatpush1.msra.mxu0 %v1752
    %1773 = vmatprep.subr.mxu0 0.0
    %1774 = vmatpush1.msra.mxu0 0.0
    %1775 = vmatprep.subr.mxu0 0.0
    %1776 = vmatpush1.msra.mxu0 0.0
    %1777 = vmatprep.subr.mxu0 0.0
    %1778 = vmatpush1.msra.mxu0 0.0
    %1779 = vmatprep.subr.mxu0 0.0
    %1780 = vmatpush1.msra.mxu0 0.0
    %1781 = vmatprep.subr.mxu0 0.0
    %1782 = vmatpush1.msra.mxu0 0.0
    %1783 = vmatprep.subr.mxu0 0.0
    %1784 = vmatpush1.msra.mxu0 0.0
    %1785 = vmatprep.subr.mxu0 0.0
    %1786 = vmatpush1.msra.mxu0 0.0
    %1787 = vmatprep.subr.mxu0 0.0
    %1788 = vmatpush1.msra.mxu0 0.0
    %1789 = vmatprep.subr.mxu0 0.0
    %1790 = vmatpush1.msra.mxu0 0.0
    %1791 = vmatprep.subr.mxu0 0.0
    %1792 = vmatpush1.msra.mxu0 0.0
    %1793 = vmatprep.subr.mxu0 0.0
    %1794 = vmatpush1.msra.mxu0 0.0
    %1795 = vmatprep.subr.mxu0 0.0
    %1796 = vmatpush1.msra.mxu0 0.0
    %1797 = vmatprep.subr.mxu0 0.0
    %1798 = vmatpush1.msra.mxu0 0.0
    %1799 = vmatprep.subr.mxu0 0.0
    %1800 = vmatpush1.msra.mxu0 0.0
    %1801 = vmatprep.subr.mxu0 0.0
    %1802 = vmatpush1.msra.mxu0 0.0
    %1803 = vmatprep.subr.mxu0 0.0
    %1804 = vmatpush1.msra.mxu0 0.0
    %1805 = vmatprep.subr.mxu0 0.0
    %1806 = vmatpush1.msra.mxu0 0.0
    %1807 = vmatprep.subr.mxu0 0.0
    %1808 = vmatpush1.msra.mxu0 0.0
    %1809 = vmatprep.subr.mxu0 0.0
    %1810 = vmatpush1.msra.mxu0 0.0
    %1811 = vmatprep.subr.mxu0 0.0
    %1812 = vmatpush1.msra.mxu0 0.0
    %1813 = vmatprep.subr.mxu0 0.0
    %1814 = vmatpush1.msra.mxu0 0.0
    %1815 = vmatprep.subr.mxu0 0.0
    %1816 = vmatpush1.msra.mxu0 0.0
    %1817 = vmatprep.subr.mxu0 0.0
    %1818 = vmatpush1.msra.mxu0 0.0
    %1819 = vmatprep.subr.mxu0 0.0
    %1820 = vmatpush1.msra.mxu0 0.0
    %1821 = vmatprep.subr.mxu0 0.0
    %1822 = vmatpush1.msra.mxu0 0.0
    %1823 = vmatprep.subr.mxu0 0.0
    %1824 = vmatpush1.msra.mxu0 0.0
    %1825 = vmatprep.subr.mxu0 0.0
    %1826 = vmatpush1.msra.mxu0 0.0
    %1827 = vmatprep.subr.mxu0 0.0
    %1828 = vmatpush1.msra.mxu0 0.0
    %1829 = vmatprep.mubr.f32.mxu0 0.0
    %1830 = vmatmul.mubr.f32.gmra.mrb[0].mxu0 %v1754
    %v1831 = vpop.f32.mrb[0].mxu0
    %v1832 = vadd.f32 0.0, %v1831
    %v1833 = vpop.f32.mrb[0].mxu0
    %1834 = vmatprep.mubr.f32.mxu0 0.0
    %1835 = vmatmul.mubr.f32.gmra.mrb[0].mxu0 %v1757
    %v1836 = vpop.f32.mrb[0].mxu0
    %v1837 = vadd.f32 0.0, %v1836
    %v1838 = vpop.f32.mrb[0].mxu0
    %1839 = vmatprep.mubr.f32.mxu0 0.0
    %1840 = vmatmul.mubr.f32.gmra.mrb[0].mxu0 %v1760
    %v1841 = vpop.f32.mrb[0].mxu0
    %v1842 = vadd.f32 0.0, %v1841
    %v1843 = vpop.f32.mrb[0].mxu0
    %1844 = vmatprep.mubr.f32.mxu0 0.0
    %1845 = vmatmul.mubr.f32.gmra.mrb[0].mxu0 %v1763
    %v1846 = vpop.f32.mrb[0].mxu0
    %v1847 = vadd.f32 0.0, %v1846
    %v1848 = vpop.f32.mrb[0].mxu0
    %1849 = vdwg.mxu0
    %v1850 = vadd.f32 %v1588, %v1832
    %v1851 = vadd.f32 %v1589, %v1837
    %v1852 = vadd.f32 %v1590, %v1842
    %v1853 = vadd.f32 %v1591, %v1847
    %v1854 = vld [vmem:[%s1 + $0xe0] sm:$0xff]
    %v1855 = vld [vmem:[%s1 + $0xe8] sm:$0xff]
    %v1856 = vld [vmem:[%s1 + $0xf0] sm:$0xff]
    %v1857 = vld [vmem:[%s1 + $0xf8] sm:$0xff]
    %v1858 = vlaneseq
    %v1859 = vshrl.u32 %v1858, 7
    %v1860 = vsub.s32 3, %v1859
    %v1861 = vrot.slane %v13, %v1860
    %v1863 = vsel %vm138, %v1850, 0
    %v1866 = vsel %vm138, %v1851, 0
    %v1869 = vsel %vm138, %v1852, 0
    %v1872 = vsel %vm138, %v1853, 0
    %1874 = vmatprep.subr.mxu0 0.0
    %1875 = vmatpush1.msra.mxu0 %v1854
    %1876 = vmatprep.subr.mxu0 0.0
    %1877 = vmatpush1.msra.mxu0 %v1855
    %1878 = vmatprep.subr.mxu0 0.0
    %1879 = vmatpush1.msra.mxu0 %v1856
    %1880 = vmatprep.subr.mxu0 0.0
    %1881 = vmatpush1.msra.mxu0 %v1857
    %1882 = vmatprep.subr.mxu0 0.0
    %1883 = vmatpush1.msra.mxu0 0.0
    %1884 = vmatprep.subr.mxu0 0.0
    %1885 = vmatpush1.msra.mxu0 0.0
    %1886 = vmatprep.subr.mxu0 0.0
    %1887 = vmatpush1.msra.mxu0 0.0
    %1888 = vmatprep.subr.mxu0 0.0
    %1889 = vmatpush1.msra.mxu0 0.0
    %1890 = vmatprep.subr.mxu0 0.0
    %1891 = vmatpush1.msra.mxu0 0.0
    %1892 = vmatprep.subr.mxu0 0.0
    %1893 = vmatpush1.msra.mxu0 0.0
    %1894 = vmatprep.subr.mxu0 0.0
    %1895 = vmatpush1.msra.mxu0 0.0
    %1896 = vmatprep.subr.mxu0 0.0
    %1897 = vmatpush1.msra.mxu0 0.0
    %1898 = vmatprep.subr.mxu0 0.0
    %1899 = vmatpush1.msra.mxu0 0.0
    %1900 = vmatprep.subr.mxu0 0.0
    %1901 = vmatpush1.msra.mxu0 0.0
    %1902 = vmatprep.subr.mxu0 0.0
    %1903 = vmatpush1.msra.mxu0 0.0
    %1904 = vmatprep.subr.mxu0 0.0
    %1905 = vmatpush1.msra.mxu0 0.0
    %1906 = vmatprep.subr.mxu0 0.0
    %1907 = vmatpush1.msra.mxu0 0.0
    %1908 = vmatprep.subr.mxu0 0.0
    %1909 = vmatpush1.msra.mxu0 0.0
    %1910 = vmatprep.subr.mxu0 0.0
    %1911 = vmatpush1.msra.mxu0 0.0
    %1912 = vmatprep.subr.mxu0 0.0
    %1913 = vmatpush1.msra.mxu0 0.0
    %1914 = vmatprep.subr.mxu0 0.0
    %1915 = vmatpush1.msra.mxu0 0.0
    %1916 = vmatprep.subr.mxu0 0.0
    %1917 = vmatpush1.msra.mxu0 0.0
    %1918 = vmatprep.subr.mxu0 0.0
    %1919 = vmatpush1.msra.mxu0 0.0
    %1920 = vmatprep.subr.mxu0 0.0
    %1921 = vmatpush1.msra.mxu0 0.0
    %1922 = vmatprep.subr.mxu0 0.0
    %1923 = vmatpush1.msra.mxu0 0.0
    %1924 = vmatprep.subr.mxu0 0.0
    %1925 = vmatpush1.msra.mxu0 0.0
    %1926 = vmatprep.subr.mxu0 0.0
    %1927 = vmatpush1.msra.mxu0 0.0
    %1928 = vmatprep.subr.mxu0 0.0
    %1929 = vmatpush1.msra.mxu0 0.0
    %1930 = vmatprep.subr.mxu0 0.0
    %1931 = vmatpush1.msra.mxu0 0.0
    %1932 = vmatprep.subr.mxu0 0.0
    %1933 = vmatpush1.msra.mxu0 0.0
    %1934 = vmatprep.subr.mxu0 0.0
    %1935 = vmatpush1.msra.mxu0 0.0
    %1936 = vmatprep.subr.mxu0 0.0
    %1937 = vmatpush1.msra.mxu0 0.0
    %1938 = vmatprep.mubr.f32.mxu0 0.0
    %1939 = vmatmul.mubr.f32.gmra.mrb[0].mxu0 %v1863
    %v1940 = vpop.f32.mrb[0].mxu0
    %v1941 = vadd.f32 %v1861, %v1940
    %v1942 = vpop.f32.mrb[0].mxu0
    %1943 = vmatprep.mubr.f32.mxu0 0.0
    %1944 = vmatmul.mubr.f32.gmra.mrb[0].mxu0 %v1866
    %v1945 = vpop.f32.mrb[0].mxu0
    %v1946 = vadd.f32 %v1861, %v1945
    %v1947 = vpop.f32.mrb[0].mxu0
    %1948 = vmatprep.mubr.f32.mxu0 0.0
    %1949 = vmatmul.mubr.f32.gmra.mrb[0].mxu0 %v1869
    %v1950 = vpop.f32.mrb[0].mxu0
    %v1951 = vadd.f32 %v1861, %v1950
    %v1952 = vpop.f32.mrb[0].mxu0
    %1953 = vmatprep.mubr.f32.mxu0 0.0
    %1954 = vmatmul.mubr.f32.gmra.mrb[0].mxu0 %v1872
    %v1955 = vpop.f32.mrb[0].mxu0
    %v1956 = vadd.f32 %v1861, %v1955
    %v1957 = vpop.f32.mrb[0].mxu0
    %1958 = vdwg.mxu0
    %v1959 = vld [vmem:[%s1 + $0x160] sm:$0xff]
    %v1960 = vadd.f32 %v489, %v1941
    %v1961 = vadd.f32 %v494, %v1946
    %v1962 = vadd.f32 %v499, %v1951
    %v1963 = vadd.f32 %v504, %v1956
    %v1964 = vsel %vm138, %v1960, 0.0
    %1965 = vadd.xlane.f32.xlu0 %v1964
    %v1966 = vpop.xlane.xlu0 %1965
    %v1967 = vsel %vm138, %v1961, 0.0
    %1968 = vadd.xlane.f32.xlu0 %v1967
    %v1969 = vpop.xlane.xlu0 %1968
    %v1970 = vsel %vm138, %v1962, 0.0
    %1971 = vadd.xlane.f32.xlu0 %v1970
    %v1972 = vpop.xlane.xlu0 %1971
    %v1973 = vsel %vm138, %v1963, 0.0
    %1974 = vadd.xlane.f32.xlu0 %v1973
    %v1975 = vpop.xlane.xlu0 %1974
    %v1976 = vrcp.pop 32.0
    %v1977 = vmul.f32 %v1966, %v1976
    %v1978 = vmul.f32 %v1969, %v1976
    %v1979 = vmul.f32 %v1972, %v1976
    %v1980 = vmul.f32 %v1975, %v1976
    %v1981 = vsub.f32 %v1960, %v1977
    %v1982 = vsub.f32 %v1961, %v1978
    %v1983 = vsub.f32 %v1962, %v1979
    %v1984 = vsub.f32 %v1963, %v1980
    %v1985 = vmul.f32 %v1981, %v1981
    %v1986 = vmul.f32 %v1982, %v1982
    %v1987 = vmul.f32 %v1983, %v1983
    %v1988 = vmul.f32 %v1984, %v1984
    %v1989 = vsel %vm138, %v1985, 0.0
    %1990 = vadd.xlane.f32.xlu0 %v1989
    %v1991 = vpop.xlane.xlu0 %1990
    %v1992 = vsel %vm138, %v1986, 0.0
    %1993 = vadd.xlane.f32.xlu0 %v1992
    %v1994 = vpop.xlane.xlu0 %1993
    %v1995 = vsel %vm138, %v1987, 0.0
    %1996 = vadd.xlane.f32.xlu0 %v1995
    %v1997 = vpop.xlane.xlu0 %1996
    %v1998 = vsel %vm138, %v1988, 0.0
    %1999 = vadd.xlane.f32.xlu0 %v1998
    %v2000 = vpop.xlane.xlu0 %1999
    %v2001 = vmul.f32 %v1991, %v1976
    %v2002 = vmul.f32 %v1994, %v1976
    %v2003 = vmul.f32 %v1997, %v1976
    %v2004 = vmul.f32 %v2000, %v1976
    %v2005 = vadd.f32 %v2001, 1e-05
    %v2006 = vadd.f32 %v2002, 1e-05
    %v2007 = vadd.f32 %v2003, 1e-05
    %v2008 = vadd.f32 %v2004, 1e-05
    %v2009 = vrsqrt.pop %v2005
    %v2010 = vrsqrt.pop %v2006
    %v2011 = vrsqrt.pop %v2007
    %v2012 = vrsqrt.pop %v2008
    %v2013 = vmul.f32 %v1981, %v2009
    %v2014 = vmul.f32 %v1982, %v2010
    %v2015 = vmul.f32 %v1983, %v2011
    %v2016 = vmul.f32 %v1984, %v2012
    %v2017 = vlaneseq
    %v2018 = vshrl.u32 %v2017, 7
    %v2019 = vsub.s32 0, %v2018
    %v2020 = vrot.slane %v1959, %v2019
    %v2021 = vmul.f32 %v2013, %v2020
    %v2022 = vmul.f32 %v2014, %v2020
    %v2023 = vmul.f32 %v2015, %v2020
    %v2024 = vmul.f32 %v2016, %v2020
    %v2025 = vlaneseq
    %v2026 = vshrl.u32 %v2025, 7
    %v2027 = vsub.s32 1, %v2026
    %v2028 = vrot.slane %v1959, %v2027
    %v2029 = vadd.f32 %v2021, %v2028
    %v2030 = vadd.f32 %v2022, %v2028
    %v2031 = vadd.f32 %v2023, %v2028
    %v2032 = vadd.f32 %v2024, %v2028
    %v2033 = vld [vmem:[%s1 + $0x100] sm:$0xff]
    %v2034 = vld [vmem:[%s1 + $0x108] sm:$0xff]
    %v2035 = vld [vmem:[%s1 + $0x110] sm:$0xff]
    %v2036 = vld [vmem:[%s1 + $0x118] sm:$0xff]
    %v2037 = vlaneseq
    %v2038 = vshrl.u32 %v2037, 7
    %v2039 = vsub.s32 4, %v2038
    %v2040 = vrot.slane %v13, %v2039
    %v2042 = vsel %vm138, %v2029, 0
    %v2045 = vsel %vm138, %v2030, 0
    %v2048 = vsel %vm138, %v2031, 0
    %v2051 = vsel %vm138, %v2032, 0
    %2053 = vmatprep.subr.mxu0 0.0
    %2054 = vmatpush1.msra.mxu0 %v2033
    %2055 = vmatprep.subr.mxu0 0.0
    %2056 = vmatpush1.msra.mxu0 %v2034
    %2057 = vmatprep.subr.mxu0 0.0
    %2058 = vmatpush1.msra.mxu0 %v2035
    %2059 = vmatprep.subr.mxu0 0.0
    %2060 = vmatpush1.msra.mxu0 %v2036
    %2061 = vmatprep.subr.mxu0 0.0
    %2062 = vmatpush1.msra.mxu0 0.0
    %2063 = vmatprep.subr.mxu0 0.0
    %2064 = vmatpush1.msra.mxu0 0.0
    %2065 = vmatprep.subr.mxu0 0.0
    %2066 = vmatpush1.msra.mxu0 0.0
    %2067 = vmatprep.subr.mxu0 0.0
    %2068 = vmatpush1.msra.mxu0 0.0
    %2069 = vmatprep.subr.mxu0 0.0
    %2070 = vmatpush1.msra.mxu0 0.0
    %2071 = vmatprep.subr.mxu0 0.0
    %2072 = vmatpush1.msra.mxu0 0.0
    %2073 = vmatprep.subr.mxu0 0.0
    %2074 = vmatpush1.msra.mxu0 0.0
    %2075 = vmatprep.subr.mxu0 0.0
    %2076 = vmatpush1.msra.mxu0 0.0
    %2077 = vmatprep.subr.mxu0 0.0
    %2078 = vmatpush1.msra.mxu0 0.0
    %2079 = vmatprep.subr.mxu0 0.0
    %2080 = vmatpush1.msra.mxu0 0.0
    %2081 = vmatprep.subr.mxu0 0.0
    %2082 = vmatpush1.msra.mxu0 0.0
    %2083 = vmatprep.subr.mxu0 0.0
    %2084 = vmatpush1.msra.mxu0 0.0
    %2085 = vmatprep.subr.mxu0 0.0
    %2086 = vmatpush1.msra.mxu0 0.0
    %2087 = vmatprep.subr.mxu0 0.0
    %2088 = vmatpush1.msra.mxu0 0.0
    %2089 = vmatprep.subr.mxu0 0.0
    %2090 = vmatpush1.msra.mxu0 0.0
    %2091 = vmatprep.subr.mxu0 0.0
    %2092 = vmatpush1.msra.mxu0 0.0
    %2093 = vmatprep.subr.mxu0 0.0
    %2094 = vmatpush1.msra.mxu0 0.0
    %2095 = vmatprep.subr.mxu0 0.0
    %2096 = vmatpush1.msra.mxu0 0.0
    %2097 = vmatprep.subr.mxu0 0.0
    %2098 = vmatpush1.msra.mxu0 0.0
    %2099 = vmatprep.subr.mxu0 0.0
    %2100 = vmatpush1.msra.mxu0 0.0
    %2101 = vmatprep.subr.mxu0 0.0
    %2102 = vmatpush1.msra.mxu0 0.0
    %2103 = vmatprep.subr.mxu0 0.0
    %2104 = vmatpush1.msra.mxu0 0.0
    %2105 = vmatprep.subr.mxu0 0.0
    %2106 = vmatpush1.msra.mxu0 0.0
    %2107 = vmatprep.subr.mxu0 0.0
    %2108 = vmatpush1.msra.mxu0 0.0
    %2109 = vmatprep.subr.mxu0 0.0
    %2110 = vmatpush1.msra.mxu0 0.0
    %2111 = vmatprep.subr.mxu0 0.0
    %2112 = vmatpush1.msra.mxu0 0.0
    %2113 = vmatprep.subr.mxu0 0.0
    %2114 = vmatpush1.msra.mxu0 0.0
    %2115 = vmatprep.subr.mxu0 0.0
    %2116 = vmatpush1.msra.mxu0 0.0
    %2117 = vmatprep.mubr.f32.mxu0 0.0
    %2118 = vmatmul.mubr.f32.gmra.mrb[0].mxu0 %v2042
    %v2119 = vpop.f32.mrb[0].mxu0
    %v2120 = vadd.f32 %v2040, %v2119
    %v2121 = vpop.f32.mrb[0].mxu0
    %2122 = vmatprep.mubr.f32.mxu0 0.0
    %2123 = vmatmul.mubr.f32.gmra.mrb[0].mxu0 %v2045
    %v2124 = vpop.f32.mrb[0].mxu0
    %v2125 = vadd.f32 %v2040, %v2124
    %v2126 = vpop.f32.mrb[0].mxu0
    %2127 = vmatprep.mubr.f32.mxu0 0.0
    %2128 = vmatmul.mubr.f32.gmra.mrb[0].mxu0 %v2048
    %v2129 = vpop.f32.mrb[0].mxu0
    %v2130 = vadd.f32 %v2040, %v2129
    %v2131 = vpop.f32.mrb[0].mxu0
    %2132 = vmatprep.mubr.f32.mxu0 0.0
    %2133 = vmatmul.mubr.f32.gmra.mrb[0].mxu0 %v2051
    %v2134 = vpop.f32.mrb[0].mxu0
    %v2135 = vadd.f32 %v2040, %v2134
    %v2136 = vpop.f32.mrb[0].mxu0
    %2137 = vdwg.mxu0
    %v2138 = vmax.f32 %v2120, 0.0
    %v2139 = vmax.f32 %v2125, 0.0
    %v2140 = vmax.f32 %v2130, 0.0
    %v2141 = vmax.f32 %v2135, 0.0
    %v2142 = vld [vmem:[%s1 + $0x120] sm:$0xff]
    %v2143 = vld [vmem:[%s1 + $0x128] sm:$0xff]
    %v2144 = vld [vmem:[%s1 + $0x130] sm:$0xff]
    %v2145 = vld [vmem:[%s1 + $0x138] sm:$0xff]
    %v2146 = vlaneseq
    %v2147 = vshrl.u32 %v2146, 7
    %v2148 = vsub.s32 5, %v2147
    %v2149 = vrot.slane %v13, %v2148
    %v2151 = vsel %vm138, %v2138, 0
    %v2154 = vsel %vm138, %v2139, 0
    %v2157 = vsel %vm138, %v2140, 0
    %v2160 = vsel %vm138, %v2141, 0
    %2162 = vmatprep.subr.mxu0 0.0
    %2163 = vmatpush1.msra.mxu0 %v2142
    %2164 = vmatprep.subr.mxu0 0.0
    %2165 = vmatpush1.msra.mxu0 %v2143
    %2166 = vmatprep.subr.mxu0 0.0
    %2167 = vmatpush1.msra.mxu0 %v2144
    %2168 = vmatprep.subr.mxu0 0.0
    %2169 = vmatpush1.msra.mxu0 %v2145
    %2170 = vmatprep.subr.mxu0 0.0
    %2171 = vmatpush1.msra.mxu0 0.0
    %2172 = vmatprep.subr.mxu0 0.0
    %2173 = vmatpush1.msra.mxu0 0.0
    %2174 = vmatprep.subr.mxu0 0.0
    %2175 = vmatpush1.msra.mxu0 0.0
    %2176 = vmatprep.subr.mxu0 0.0
    %2177 = vmatpush1.msra.mxu0 0.0
    %2178 = vmatprep.subr.mxu0 0.0
    %2179 = vmatpush1.msra.mxu0 0.0
    %2180 = vmatprep.subr.mxu0 0.0
    %2181 = vmatpush1.msra.mxu0 0.0
    %2182 = vmatprep.subr.mxu0 0.0
    %2183 = vmatpush1.msra.mxu0 0.0
    %2184 = vmatprep.subr.mxu0 0.0
    %2185 = vmatpush1.msra.mxu0 0.0
    %2186 = vmatprep.subr.mxu0 0.0
    %2187 = vmatpush1.msra.mxu0 0.0
    %2188 = vmatprep.subr.mxu0 0.0
    %2189 = vmatpush1.msra.mxu0 0.0
    %2190 = vmatprep.subr.mxu0 0.0
    %2191 = vmatpush1.msra.mxu0 0.0
    %2192 = vmatprep.subr.mxu0 0.0
    %2193 = vmatpush1.msra.mxu0 0.0
    %2194 = vmatprep.subr.mxu0 0.0
    %2195 = vmatpush1.msra.mxu0 0.0
    %2196 = vmatprep.subr.mxu0 0.0
    %2197 = vmatpush1.msra.mxu0 0.0
    %2198 = vmatprep.subr.mxu0 0.0
    %2199 = vmatpush1.msra.mxu0 0.0
    %2200 = vmatprep.subr.mxu0 0.0
    %2201 = vmatpush1.msra.mxu0 0.0
    %2202 = vmatprep.subr.mxu0 0.0
    %2203 = vmatpush1.msra.mxu0 0.0
    %2204 = vmatprep.subr.mxu0 0.0
    %2205 = vmatpush1.msra.mxu0 0.0
    %2206 = vmatprep.subr.mxu0 0.0
    %2207 = vmatpush1.msra.mxu0 0.0
    %2208 = vmatprep.subr.mxu0 0.0
    %2209 = vmatpush1.msra.mxu0 0.0
    %2210 = vmatprep.subr.mxu0 0.0
    %2211 = vmatpush1.msra.mxu0 0.0
    %2212 = vmatprep.subr.mxu0 0.0
    %2213 = vmatpush1.msra.mxu0 0.0
    %2214 = vmatprep.subr.mxu0 0.0
    %2215 = vmatpush1.msra.mxu0 0.0
    %2216 = vmatprep.subr.mxu0 0.0
    %2217 = vmatpush1.msra.mxu0 0.0
    %2218 = vmatprep.subr.mxu0 0.0
    %2219 = vmatpush1.msra.mxu0 0.0
    %2220 = vmatprep.subr.mxu0 0.0
    %2221 = vmatpush1.msra.mxu0 0.0
    %2222 = vmatprep.subr.mxu0 0.0
    %2223 = vmatpush1.msra.mxu0 0.0
    %2224 = vmatprep.subr.mxu0 0.0
    %2225 = vmatpush1.msra.mxu0 0.0
    %2226 = vmatprep.mubr.f32.mxu0 0.0
    %2227 = vmatmul.mubr.f32.gmra.mrb[0].mxu0 %v2151
    %v2228 = vpop.f32.mrb[0].mxu0
    %v2229 = vadd.f32 %v2149, %v2228
    %v2230 = vpop.f32.mrb[0].mxu0
    %2231 = vmatprep.mubr.f32.mxu0 0.0
    %2232 = vmatmul.mubr.f32.gmra.mrb[0].mxu0 %v2154
    %v2233 = vpop.f32.mrb[0].mxu0
    %v2234 = vadd.f32 %v2149, %v2233
    %v2235 = vpop.f32.mrb[0].mxu0
    %2236 = vmatprep.mubr.f32.mxu0 0.0
    %2237 = vmatmul.mubr.f32.gmra.mrb[0].mxu0 %v2157
    %v2238 = vpop.f32.mrb[0].mxu0
    %v2239 = vadd.f32 %v2149, %v2238
    %v2240 = vpop.f32.mrb[0].mxu0
    %2241 = vmatprep.mubr.f32.mxu0 0.0
    %2242 = vmatmul.mubr.f32.gmra.mrb[0].mxu0 %v2160
    %v2243 = vpop.f32.mrb[0].mxu0
    %v2244 = vadd.f32 %v2149, %v2243
    %v2245 = vpop.f32.mrb[0].mxu0
    %2246 = vdwg.mxu0
    %v2247 = vadd.f32 %v2029, %v2229
    %v2248 = vadd.f32 %v2030, %v2234
    %v2249 = vadd.f32 %v2031, %v2239
    %v2250 = vadd.f32 %v2032, %v2244
    %v2251 = vsel %vm138, %v2247, 0.0
    %2252 = vadd.xlane.f32.xlu0 %v2251
    %v2253 = vpop.xlane.xlu0 %2252
    %v2254 = vsel %vm138, %v2248, 0.0
    %2255 = vadd.xlane.f32.xlu0 %v2254
    %v2256 = vpop.xlane.xlu0 %2255
    %v2257 = vsel %vm138, %v2249, 0.0
    %2258 = vadd.xlane.f32.xlu0 %v2257
    %v2259 = vpop.xlane.xlu0 %2258
    %v2260 = vsel %vm138, %v2250, 0.0
    %2261 = vadd.xlane.f32.xlu0 %v2260
    %v2262 = vpop.xlane.xlu0 %2261
    %v2263 = vmul.f32 %v2253, %v1976
    %v2264 = vmul.f32 %v2256, %v1976
    %v2265 = vmul.f32 %v2259, %v1976
    %v2266 = vmul.f32 %v2262, %v1976
    %v2267 = vsub.f32 %v2247, %v2263
    %v2268 = vsub.f32 %v2248, %v2264
    %v2269 = vsub.f32 %v2249, %v2265
    %v2270 = vsub.f32 %v2250, %v2266
    %v2271 = vmul.f32 %v2267, %v2267
    %v2272 = vmul.f32 %v2268, %v2268
    %v2273 = vmul.f32 %v2269, %v2269
    %v2274 = vmul.f32 %v2270, %v2270
    %v2275 = vsel %vm138, %v2271, 0.0
    %2276 = vadd.xlane.f32.xlu0 %v2275
    %v2277 = vpop.xlane.xlu0 %2276
    %v2278 = vsel %vm138, %v2272, 0.0
    %2279 = vadd.xlane.f32.xlu0 %v2278
    %v2280 = vpop.xlane.xlu0 %2279
    %v2281 = vsel %vm138, %v2273, 0.0
    %2282 = vadd.xlane.f32.xlu0 %v2281
    %v2283 = vpop.xlane.xlu0 %2282
    %v2284 = vsel %vm138, %v2274, 0.0
    %2285 = vadd.xlane.f32.xlu0 %v2284
    %v2286 = vpop.xlane.xlu0 %2285
    %v2287 = vmul.f32 %v2277, %v1976
    %v2288 = vmul.f32 %v2280, %v1976
    %v2289 = vmul.f32 %v2283, %v1976
    %v2290 = vmul.f32 %v2286, %v1976
    %v2291 = vadd.f32 %v2287, 1e-05
    %v2292 = vadd.f32 %v2288, 1e-05
    %v2293 = vadd.f32 %v2289, 1e-05
    %v2294 = vadd.f32 %v2290, 1e-05
    %v2295 = vrsqrt.pop %v2291
    %v2296 = vrsqrt.pop %v2292
    %v2297 = vrsqrt.pop %v2293
    %v2298 = vrsqrt.pop %v2294
    %v2299 = vmul.f32 %v2267, %v2295
    %v2300 = vmul.f32 %v2268, %v2296
    %v2301 = vmul.f32 %v2269, %v2297
    %v2302 = vmul.f32 %v2270, %v2298
    %v2303 = vlaneseq
    %v2304 = vshrl.u32 %v2303, 7
    %v2305 = vsub.s32 2, %v2304
    %v2306 = vrot.slane %v1959, %v2305
    %v2307 = vmul.f32 %v2299, %v2306
    %v2308 = vmul.f32 %v2300, %v2306
    %v2309 = vmul.f32 %v2301, %v2306
    %v2310 = vmul.f32 %v2302, %v2306
    %v2311 = vlaneseq
    %v2312 = vshrl.u32 %v2311, 7
    %v2313 = vsub.s32 3, %v2312
    %v2314 = vrot.slane %v1959, %v2313
    %v2315 = vadd.f32 %v2307, %v2314
    %v2316 = vadd.f32 %v2308, %v2314
    %v2317 = vadd.f32 %v2309, %v2314
    %v2318 = vadd.f32 %v2310, %v2314
    %v2319 = vsel %vm138, %v2315, 0.0
    %2320 = vadd.xlane.f32.xlu0 %v2319
    %v2321 = vpop.xlane.xlu0 %2320
    %v2322 = vsel %vm138, %v2316, 0.0
    %2323 = vadd.xlane.f32.xlu0 %v2322
    %v2324 = vpop.xlane.xlu0 %2323
    %v2325 = vsel %vm138, %v2317, 0.0
    %2326 = vadd.xlane.f32.xlu0 %v2325
    %v2327 = vpop.xlane.xlu0 %2326
    %v2328 = vsel %vm138, %v2318, 0.0
    %2329 = vadd.xlane.f32.xlu0 %v2328
    %v2330 = vpop.xlane.xlu0 %2329
    %v2331 = vmul.f32 %v2321, %v1976
    %v2332 = vmul.f32 %v2324, %v1976
    %v2333 = vmul.f32 %v2327, %v1976
    %v2334 = vmul.f32 %v2330, %v1976
    %v2335 = vsub.f32 %v2315, %v2331
    %v2336 = vsub.f32 %v2316, %v2332
    %v2337 = vsub.f32 %v2317, %v2333
    %v2338 = vsub.f32 %v2318, %v2334
    %v2339 = vmul.f32 %v2335, %v2335
    %v2340 = vmul.f32 %v2336, %v2336
    %v2341 = vmul.f32 %v2337, %v2337
    %v2342 = vmul.f32 %v2338, %v2338
    %v2343 = vsel %vm138, %v2339, 0.0
    %2344 = vadd.xlane.f32.xlu0 %v2343
    %v2345 = vpop.xlane.xlu0 %2344
    %v2346 = vsel %vm138, %v2340, 0.0
    %2347 = vadd.xlane.f32.xlu0 %v2346
    %v2348 = vpop.xlane.xlu0 %2347
    %v2349 = vsel %vm138, %v2341, 0.0
    %2350 = vadd.xlane.f32.xlu0 %v2349
    %v2351 = vpop.xlane.xlu0 %2350
    %v2352 = vsel %vm138, %v2342, 0.0
    %2353 = vadd.xlane.f32.xlu0 %v2352
    %v2354 = vpop.xlane.xlu0 %2353
    %v2355 = vmul.f32 %v2345, %v1976
    %v2356 = vmul.f32 %v2348, %v1976
    %v2357 = vmul.f32 %v2351, %v1976
    %v2358 = vmul.f32 %v2354, %v1976
    %v2359 = vadd.f32 %v2355, 1e-05
    %v2360 = vadd.f32 %v2356, 1e-05
    %v2361 = vadd.f32 %v2357, 1e-05
    %v2362 = vadd.f32 %v2358, 1e-05
    %v2363 = vrsqrt.pop %v2359
    %v2364 = vrsqrt.pop %v2360
    %v2365 = vrsqrt.pop %v2361
    %v2366 = vrsqrt.pop %v2362
    %v2367 = vmul.f32 %v2335, %v2363
    %v2368 = vmul.f32 %v2336, %v2364
    %v2369 = vmul.f32 %v2337, %v2365
    %v2370 = vmul.f32 %v2338, %v2366
    %v2371 = vlaneseq
    %v2372 = vshrl.u32 %v2371, 7
    %v2373 = vsub.s32 4, %v2372
    %v2374 = vrot.slane %v1959, %v2373
    %v2375 = vmul.f32 %v2367, %v2374
    %v2376 = vmul.f32 %v2368, %v2374
    %v2377 = vmul.f32 %v2369, %v2374
    %v2378 = vmul.f32 %v2370, %v2374
    %v2379 = vlaneseq
    %v2380 = vshrl.u32 %v2379, 7
    %v2381 = vsub.s32 5, %v2380
    %v2382 = vrot.slane %v1959, %v2381
    %v2383 = vadd.f32 %v2375, %v2382
    %v2384 = vadd.f32 %v2376, %v2382
    %v2385 = vadd.f32 %v2377, %v2382
    %v2386 = vadd.f32 %v2378, %v2382
    %2387 = vxpose.xlu0.b32.start [1/16] %v2383, 128
    %2388 = vxpose.xlu0.b32.cont [2/16] %v2384, 128
    %2389 = vxpose.xlu0.b32.cont [3/16] %v2385, 128
    %2390 = vxpose.xlu0.b32.cont [4/16] %v2386, 128
    %2391 = vxpose.xlu0.b32.cont [5/16] 0.0, 128
    %2392 = vxpose.xlu0.b32.cont [6/16] 0.0, 128
    %2393 = vxpose.xlu0.b32.cont [7/16] 0.0, 128
    %2394 = vxpose.xlu0.b32.cont [8/16] 0.0, 128
    %2395 = vxpose.xlu0.b32.cont [9/16] 0.0, 128
    %2396 = vxpose.xlu0.b32.cont [10/16] 0.0, 128
    %2397 = vxpose.xlu0.b32.cont [11/16] 0.0, 128
    %2398 = vxpose.xlu0.b32.cont [12/16] 0.0, 128
    %2399 = vxpose.xlu0.b32.cont [13/16] 0.0, 128
    %2400 = vxpose.xlu0.b32.cont [14/16] 0.0, 128
    %2401 = vxpose.xlu0.b32.cont [15/16] 0.0, 128
    %2402 = vxpose.xlu0.b32.end [16/16] 0.0, 128
    %v2403 = vpop.trf.xlu0
    %v2404 = vpop.trf.xlu0
    %v2405 = vpop.trf.xlu0
    %v2406 = vpop.trf.xlu0
    %v2407 = vpop.trf.xlu0
    %v2408 = vpop.trf.xlu0
    %v2409 = vpop.trf.xlu0
    %v2410 = vpop.trf.xlu0
    %v2411 = vpop.trf.xlu0
    %v2412 = vpop.trf.xlu0
    %v2413 = vpop.trf.xlu0
    %v2414 = vpop.trf.xlu0
    %v2415 = vpop.trf.xlu0
    %v2416 = vpop.trf.xlu0
    %v2417 = vpop.trf.xlu0
    %v2418 = vpop.trf.xlu0
    %vm2419 = vcmask 1047808
    %2420 = vrot.lane.b32.xlu0 %v2403, 32
    %v2421 = vpop.permute.xlu0 %2420
    %v2422 = vsel %vm2419, %v2421, %v2403
    %2423 = vrot.lane.b32.xlu0 %v2404, 32
    %v2424 = vpop.permute.xlu0 %2423
    %v2425 = vsel %vm2419, %v2424, %v2404
    %2426 = vrot.lane.b32.xlu0 %v2405, 32
    %v2427 = vpop.permute.xlu0 %2426
    %v2428 = vsel %vm2419, %v2427, %v2405
    %2429 = vrot.lane.b32.xlu0 %v2406, 32
    %v2430 = vpop.permute.xlu0 %2429
    %v2431 = vsel %vm2419, %v2430, %v2406
    %2432 = vrot.lane.b32.xlu0 %v2422, 32
    %v2433 = vpop.permute.xlu0 %2432
    %2434 = vrot.lane.b32.xlu0 %v2425, 32
    %v2435 = vpop.permute.xlu0 %2434
    %2436 = vrot.lane.b32.xlu0 %v2428, 32
    %v2437 = vpop.permute.xlu0 %2436
    %2438 = vrot.lane.b32.xlu0 %v2431, 32
    %v2439 = vpop.permute.xlu0 %2438
    %v2440 = vsel %vm2419, %v2433, %v2403
    %v2441 = vsel %vm2419, %v2435, %v2404
    %v2442 = vsel %vm2419, %v2437, %v2405
    %v2443 = vsel %vm2419, %v2439, %v2406
    %v2444 = vlaneseq
    %v2445 = vshrl.u32 %v2444, 7
    %v2446 = vsub.s32 6, %v2445
    %v2447 = vrot.slane %v12, %v2446
    %2449 = vrot.lane.b32.xlu0 %v2447, 31
    %v2450 = vpop.permute.xlu0 %2449
    %v2452 = vmul.f32 %v2440, %v2450
    %v2453 = vmul.f32 %v2441, %v2450
    %v2454 = vmul.f32 %v2442, %v2450
    %v2455 = vmul.f32 %v2443, %v2450
    %v2456 = vlaneseq
    %v2457 = vshrl.u32 %v2456, 7
    %v2458 = vsub.s32 7, %v2457
    %v2459 = vrot.slane %v12, %v2458
    %2461 = vrot.lane.b32.xlu0 %v2459, 1
    %v2462 = vpop.permute.xlu0 %2461
    %v2464 = vmul.f32 %v2440, %v2462
    %v2465 = vmul.f32 %v2441, %v2462
    %v2466 = vmul.f32 %v2442, %v2462
    %v2467 = vmul.f32 %v2443, %v2462
    %v2468 = vld [vmem:[%s1 + $0x140] sm:$0xff]
    %v2469 = vld [vmem:[%s1 + $0x148] sm:$0xff]
    %v2470 = vld [vmem:[%s1 + $0x180] sm:$0xff]
    %v2472 = vrot.slane %v2468, 4
    %v2473 = vsel %vm138, %v2472, 0
    %2475 = vmatprep.subr.mxu0 0.0
    %2476 = vmatpush1.msra.mxu0 %v2403
    %2477 = vmatprep.subr.mxu0 0.0
    %2478 = vmatpush1.msra.mxu0 %v2404
    %2479 = vmatprep.subr.mxu0 0.0
    %2480 = vmatpush1.msra.mxu0 %v2405
    %2481 = vmatprep.subr.mxu0 0.0
    %2482 = vmatpush1.msra.mxu0 %v2406
    %2483 = vmatprep.subr.mxu0 0.0
    %2484 = vmatpush1.msra.mxu0 0.0
    %2485 = vmatprep.subr.mxu0 0.0
    %2486 = vmatpush1.msra.mxu0 0.0
    %2487 = vmatprep.subr.mxu0 0.0
    %2488 = vmatpush1.msra.mxu0 0.0
    %2489 = vmatprep.subr.mxu0 0.0
    %2490 = vmatpush1.msra.mxu0 0.0
    %2491 = vmatprep.subr.mxu0 0.0
    %2492 = vmatpush1.msra.mxu0 0.0
    %2493 = vmatprep.subr.mxu0 0.0
    %2494 = vmatpush1.msra.mxu0 0.0
    %2495 = vmatprep.subr.mxu0 0.0
    %2496 = vmatpush1.msra.mxu0 0.0
    %2497 = vmatprep.subr.mxu0 0.0
    %2498 = vmatpush1.msra.mxu0 0.0
    %2499 = vmatprep.subr.mxu0 0.0
    %2500 = vmatpush1.msra.mxu0 0.0
    %2501 = vmatprep.subr.mxu0 0.0
    %2502 = vmatpush1.msra.mxu0 0.0
    %2503 = vmatprep.subr.mxu0 0.0
    %2504 = vmatpush1.msra.mxu0 0.0
    %2505 = vmatprep.subr.mxu0 0.0
    %2506 = vmatpush1.msra.mxu0 0.0
    %2507 = vmatprep.subr.mxu0 0.0
    %2508 = vmatpush1.msra.mxu0 0.0
    %2509 = vmatprep.subr.mxu0 0.0
    %2510 = vmatpush1.msra.mxu0 0.0
    %2511 = vmatprep.subr.mxu0 0.0
    %2512 = vmatpush1.msra.mxu0 0.0
    %2513 = vmatprep.subr.mxu0 0.0
    %2514 = vmatpush1.msra.mxu0 0.0
    %2515 = vmatprep.subr.mxu0 0.0
    %2516 = vmatpush1.msra.mxu0 0.0
    %2517 = vmatprep.subr.mxu0 0.0
    %2518 = vmatpush1.msra.mxu0 0.0
    %2519 = vmatprep.subr.mxu0 0.0
    %2520 = vmatpush1.msra.mxu0 0.0
    %2521 = vmatprep.subr.mxu0 0.0
    %2522 = vmatpush1.msra.mxu0 0.0
    %2523 = vmatprep.subr.mxu0 0.0
    %2524 = vmatpush1.msra.mxu0 0.0
    %2525 = vmatprep.subr.mxu0 0.0
    %2526 = vmatpush1.msra.mxu0 0.0
    %2527 = vmatprep.subr.mxu0 0.0
    %2528 = vmatpush1.msra.mxu0 0.0
    %2529 = vmatprep.subr.mxu0 0.0
    %2530 = vmatpush1.msra.mxu0 0.0
    %2531 = vmatprep.subr.mxu0 0.0
    %2532 = vmatpush1.msra.mxu0 0.0
    %2533 = vmatprep.subr.mxu0 0.0
    %2534 = vmatpush1.msra.mxu0 0.0
    %2535 = vmatprep.subr.mxu0 0.0
    %2536 = vmatpush1.msra.mxu0 0.0
    %2537 = vmatprep.subr.mxu0 0.0
    %2538 = vmatpush1.msra.mxu0 0.0
    %2539 = vmatprep.mubr.f32.mxu0 0.0
    %2540 = vmatmul.mubr.f32.gmra.mrb[0].mxu0 %v2473
    %v2541 = vpop.f32.mrb[0].mxu0
    %v2542 = vadd.f32 0.0, %v2541
    %v2543 = vpop.f32.mrb[0].mxu0
    %2544 = vdwg.mxu0
    %2549 = vrot.lane.b32.xlu0 %v2452, 97
    %v2550 = vpop.permute.xlu0 %2549
    %2551 = vrot.lane.b32.xlu0 %v2453, 97
    %v2552 = vpop.permute.xlu0 %2551
    %2553 = vrot.lane.b32.xlu0 %v2454, 97
    %v2554 = vpop.permute.xlu0 %2553
    %2555 = vrot.lane.b32.xlu0 %v2455, 97
    %v2556 = vpop.permute.xlu0 %2555
    %v2561 = vsel %vm138, %v2468, 0
    %2563 = vmatprep.subr.mxu0 0.0
    %2564 = vmatpush1.msra.mxu0 %v2550
    %2565 = vmatprep.subr.mxu0 0.0
    %2566 = vmatpush1.msra.mxu0 %v2552
    %2567 = vmatprep.subr.mxu0 0.0
    %2568 = vmatpush1.msra.mxu0 %v2554
    %2569 = vmatprep.subr.mxu0 0.0
    %2570 = vmatpush1.msra.mxu0 %v2556
    %2571 = vmatprep.subr.mxu0 0.0
    %2572 = vmatpush1.msra.mxu0 0.0
    %2573 = vmatprep.subr.mxu0 0.0
    %2574 = vmatpush1.msra.mxu0 0.0
    %2575 = vmatprep.subr.mxu0 0.0
    %2576 = vmatpush1.msra.mxu0 0.0
    %2577 = vmatprep.subr.mxu0 0.0
    %2578 = vmatpush1.msra.mxu0 0.0
    %2579 = vmatprep.subr.mxu0 0.0
    %2580 = vmatpush1.msra.mxu0 0.0
    %2581 = vmatprep.subr.mxu0 0.0
    %2582 = vmatpush1.msra.mxu0 0.0
    %2583 = vmatprep.subr.mxu0 0.0
    %2584 = vmatpush1.msra.mxu0 0.0
    %2585 = vmatprep.subr.mxu0 0.0
    %2586 = vmatpush1.msra.mxu0 0.0
    %2587 = vmatprep.subr.mxu0 0.0
    %2588 = vmatpush1.msra.mxu0 0.0
    %2589 = vmatprep.subr.mxu0 0.0
    %2590 = vmatpush1.msra.mxu0 0.0
    %2591 = vmatprep.subr.mxu0 0.0
    %2592 = vmatpush1.msra.mxu0 0.0
    %2593 = vmatprep.subr.mxu0 0.0
    %2594 = vmatpush1.msra.mxu0 0.0
    %2595 = vmatprep.subr.mxu0 0.0
    %2596 = vmatpush1.msra.mxu0 0.0
    %2597 = vmatprep.subr.mxu0 0.0
    %2598 = vmatpush1.msra.mxu0 0.0
    %2599 = vmatprep.subr.mxu0 0.0
    %2600 = vmatpush1.msra.mxu0 0.0
    %2601 = vmatprep.subr.mxu0 0.0
    %2602 = vmatpush1.msra.mxu0 0.0
    %2603 = vmatprep.subr.mxu0 0.0
    %2604 = vmatpush1.msra.mxu0 0.0
    %2605 = vmatprep.subr.mxu0 0.0
    %2606 = vmatpush1.msra.mxu0 0.0
    %2607 = vmatprep.subr.mxu0 0.0
    %2608 = vmatpush1.msra.mxu0 0.0
    %2609 = vmatprep.subr.mxu0 0.0
    %2610 = vmatpush1.msra.mxu0 0.0
    %2611 = vmatprep.subr.mxu0 0.0
    %2612 = vmatpush1.msra.mxu0 0.0
    %2613 = vmatprep.subr.mxu0 0.0
    %2614 = vmatpush1.msra.mxu0 0.0
    %2615 = vmatprep.subr.mxu0 0.0
    %2616 = vmatpush1.msra.mxu0 0.0
    %2617 = vmatprep.subr.mxu0 0.0
    %2618 = vmatpush1.msra.mxu0 0.0
    %2619 = vmatprep.subr.mxu0 0.0
    %2620 = vmatpush1.msra.mxu0 0.0
    %2621 = vmatprep.subr.mxu0 0.0
    %2622 = vmatpush1.msra.mxu0 0.0
    %2623 = vmatprep.subr.mxu0 0.0
    %2624 = vmatpush1.msra.mxu0 0.0
    %2625 = vmatprep.subr.mxu0 0.0
    %2626 = vmatpush1.msra.mxu0 0.0
    %2627 = vmatprep.mubr.f32.mxu0 0.0
    %2628 = vmatmul.mubr.f32.gmra.mrb[0].mxu0 %v2561
    %v2629 = vpop.f32.mrb[0].mxu0
    %v2630 = vadd.f32 %v2542, %v2629
    %v2631 = vpop.f32.mrb[0].mxu0
    %2632 = vdwg.mxu0
    %2637 = vrot.lane.b32.xlu0 %v2464, 127
    %v2638 = vpop.permute.xlu0 %2637
    %2639 = vrot.lane.b32.xlu0 %v2465, 127
    %v2640 = vpop.permute.xlu0 %2639
    %2641 = vrot.lane.b32.xlu0 %v2466, 127
    %v2642 = vpop.permute.xlu0 %2641
    %2643 = vrot.lane.b32.xlu0 %v2467, 127
    %v2644 = vpop.permute.xlu0 %2643
    %v2650 = vsel %vm138, %v2469, 0
    %2652 = vmatprep.subr.mxu0 0.0
    %2653 = vmatpush1.msra.mxu0 %v2638
    %2654 = vmatprep.subr.mxu0 0.0
    %2655 = vmatpush1.msra.mxu0 %v2640
    %2656 = vmatprep.subr.mxu0 0.0
    %2657 = vmatpush1.msra.mxu0 %v2642
    %2658 = vmatprep.subr.mxu0 0.0
    %2659 = vmatpush1.msra.mxu0 %v2644
    %2660 = vmatprep.subr.mxu0 0.0
    %2661 = vmatpush1.msra.mxu0 0.0
    %2662 = vmatprep.subr.mxu0 0.0
    %2663 = vmatpush1.msra.mxu0 0.0
    %2664 = vmatprep.subr.mxu0 0.0
    %2665 = vmatpush1.msra.mxu0 0.0
    %2666 = vmatprep.subr.mxu0 0.0
    %2667 = vmatpush1.msra.mxu0 0.0
    %2668 = vmatprep.subr.mxu0 0.0
    %2669 = vmatpush1.msra.mxu0 0.0
    %2670 = vmatprep.subr.mxu0 0.0
    %2671 = vmatpush1.msra.mxu0 0.0
    %2672 = vmatprep.subr.mxu0 0.0
    %2673 = vmatpush1.msra.mxu0 0.0
    %2674 = vmatprep.subr.mxu0 0.0
    %2675 = vmatpush1.msra.mxu0 0.0
    %2676 = vmatprep.subr.mxu0 0.0
    %2677 = vmatpush1.msra.mxu0 0.0
    %2678 = vmatprep.subr.mxu0 0.0
    %2679 = vmatpush1.msra.mxu0 0.0
    %2680 = vmatprep.subr.mxu0 0.0
    %2681 = vmatpush1.msra.mxu0 0.0
    %2682 = vmatprep.subr.mxu0 0.0
    %2683 = vmatpush1.msra.mxu0 0.0
    %2684 = vmatprep.subr.mxu0 0.0
    %2685 = vmatpush1.msra.mxu0 0.0
    %2686 = vmatprep.subr.mxu0 0.0
    %2687 = vmatpush1.msra.mxu0 0.0
    %2688 = vmatprep.subr.mxu0 0.0
    %2689 = vmatpush1.msra.mxu0 0.0
    %2690 = vmatprep.subr.mxu0 0.0
    %2691 = vmatpush1.msra.mxu0 0.0
    %2692 = vmatprep.subr.mxu0 0.0
    %2693 = vmatpush1.msra.mxu0 0.0
    %2694 = vmatprep.subr.mxu0 0.0
    %2695 = vmatpush1.msra.mxu0 0.0
    %2696 = vmatprep.subr.mxu0 0.0
    %2697 = vmatpush1.msra.mxu0 0.0
    %2698 = vmatprep.subr.mxu0 0.0
    %2699 = vmatpush1.msra.mxu0 0.0
    %2700 = vmatprep.subr.mxu0 0.0
    %2701 = vmatpush1.msra.mxu0 0.0
    %2702 = vmatprep.subr.mxu0 0.0
    %2703 = vmatpush1.msra.mxu0 0.0
    %2704 = vmatprep.subr.mxu0 0.0
    %2705 = vmatpush1.msra.mxu0 0.0
    %2706 = vmatprep.subr.mxu0 0.0
    %2707 = vmatpush1.msra.mxu0 0.0
    %2708 = vmatprep.subr.mxu0 0.0
    %2709 = vmatpush1.msra.mxu0 0.0
    %2710 = vmatprep.subr.mxu0 0.0
    %2711 = vmatpush1.msra.mxu0 0.0
    %2712 = vmatprep.subr.mxu0 0.0
    %2713 = vmatpush1.msra.mxu0 0.0
    %2714 = vmatprep.subr.mxu0 0.0
    %2715 = vmatpush1.msra.mxu0 0.0
    %2716 = vmatprep.mubr.f32.mxu0 0.0
    %2717 = vmatmul.mubr.f32.gmra.mrb[0].mxu0 %v2650
    %v2718 = vpop.f32.mrb[0].mxu0
    %v2719 = vadd.f32 0.0, %v2718
    %v2720 = vpop.f32.mrb[0].mxu0
    %2721 = vdwg.mxu0
    %v2722 = vadd.f32 %v2630, %v2719
    %v2723 = vadd.f32 %v2722, %v2470
    %vm2724 = vcmask 257024
    %2725 = vst.msk [vmem:[#allocation2] sm:$0xf] %vm2724, %v2723
    // Predicated region
    $region10: #{tpu_custom_call.1} parent=1 // pred_check
      _
    $region11: #{tpu_custom_call.1} parent=1 // pred_check_branch
      %2727 = sbr.rel (0) target = $region13
    $region12: #{tpu_custom_call.1} parent=1 // pred_region
      %s2729 = ssub.s32 64, 64
      %2730 = vsyncadd [#allocation3], %s2729
      %s2732 = sshll.u32 [#allocation2], 4
      %s2733 = int_to_ptr.vmem [resolvable:$true] %s2732
      %2735 = dma.vmem_to_hbm [thread:$0]  %s2733, 64, %s2, [#allocation3]
    $region13: #{tpu_custom_call.1} parent=1 // pred_fallthru
      _
    // Predicated region
    $region14: #{tpu_custom_call.1} parent=1 // pred_check
      _
    $region15: #{tpu_custom_call.1} parent=1 // pred_check_branch
      %2737 = sbr.rel (0) target = $region17
    $region16: #{tpu_custom_call.1} parent=1 // pred_region
      %2738 = dma.done [#allocation3], 64
    $region17: #{tpu_custom_call.1} parent=1 // pred_fallthru
      _
    %2739 = vsyncpa [#allocation3], 1

</llo_original>
